<compile_context>
chip_gen: v7x
topology: tpu7x:2x2x1
jax: 0.10.0
libtpu: 0.0.40
codegen_flags: <defaults>
</compile_context>

<pallas_src>
import functools

import jax
import jax.numpy as jnp
from jax.experimental import pallas as pl
from jax.experimental.pallas import tpu as pltpu

EPS = 1e-5


def _pick_batch_tile(n, hw, cap_rows=2048):
    """Images per grid step: cap matmul rows, divide N, >=2 steps when N >= 2."""
    nb = max(1, min(n, cap_rows // max(hw, 1)))
    while n % nb:
        nb -= 1
    if n >= 2 and n // nb < 2:          # keep both v7x TensorCores fed
        nb = n // 2
        while n % nb:
            nb -= 1
    return max(nb, 1)


def _fold_bn(bn):
    gamma, beta, mean, var = bn
    scale = gamma / jnp.sqrt(var + EPS)
    bias = beta - mean * scale
    return scale, bias


# ------------------------------ Pallas kernel ------------------------------ #
def _conv3x3_kernel(x_ref, w_ref, b_ref, *args, stride, hp, nb, ho, wo,
                    relu, mode):
    """Fused 3x3 conv (pad=1) + bias + optional residual/projection + ReLU.

    x_ref : (nb, stride*stride*hp, wp, Cin)  phase-stacked padded input block
    w_ref : (9, Cin, Cout)                    BN-scale-folded weights
    b_ref : (1, Cout) float32                 folded bias (+ shortcut bias)
    mode  : "none" | "add" (identity residual) | "proj" (residual @ wsc)
    """
    o_ref = args[-1]
    cin = x_ref.shape[-1]
    cout = w_ref.shape[-1]
    m = nb * ho * wo

    acc = jnp.zeros((m, cout), jnp.float32)
    for kh in range(3):
        for kw in range(3):
            ph = (kh % stride) * stride + (kw % stride)
            r0 = ph * hp + kh // stride
            c0 = kw // stride
            a = x_ref[:, r0:r0 + ho, c0:c0 + wo, :].reshape(m, cin)
            acc = acc + jnp.dot(a, w_ref[kh * 3 + kw],
                                preferred_element_type=jnp.float32)

    out = acc + b_ref[...]
    if mode == "add":                       # identity shortcut
        out = out + args[0][...].reshape(m, cout).astype(jnp.float32)
    elif mode == "proj":                    # 1x1-conv projection shortcut
        r = args[0][...]
        out = out + jnp.dot(r.reshape(m, r.shape[-1]), args[1][...],
                            preferred_element_type=jnp.float32)
    if relu:
        out = jnp.maximum(out, 0.0)
    o_ref[...] = out.reshape(o_ref.shape).astype(o_ref.dtype)


# -------------------------------- wrapper ----------------------------------- #
def _fused_conv3x3(x, w_hwio, scale, bias, *, stride=1, residual=None,
                   wsc=None, relu=True, out_dtype=jnp.float32,
                   compute_dtype=jnp.bfloat16):
    """act( conv3x3(x; stride) * scale + bias [+ residual | + residual @ wsc] )."""
    N, H, W, Cin = x.shape
    Cout = w_hwio.shape[-1]
    Ho = (H - 1) // stride + 1
    Wo = (W - 1) // stride + 1
    cd = compute_dtype

    # Fold BN scale into the weight columns (trace-time, weights are tiny).
    w9 = (w_hwio.reshape(9, Cin, Cout) * scale.reshape(1, 1, Cout)).astype(cd)
    b = bias.reshape(1, Cout).astype(jnp.float32)

    # Spatial pad; for stride > 1 split into stride*stride phases stacked along
    # rows so the kernel only needs contiguous static slices per tap.
    xp = jnp.pad(x.astype(cd), ((0, 0), (1, 1), (1, 1), (0, 0)))
    hp, wp = Ho + 2 // stride, Wo + 2 // stride
    if stride == 1:
        xrows = xp                                     # (N, H+2, W+2, Cin)
    else:
        slabs = []
        for a in range(stride):
            for b_ in range(stride):
                s_ = xp[:, a::stride, b_::stride, :][:, :hp, :wp, :]
                dh, dw = hp - s_.shape[1], wp - s_.shape[2]
                if dh or dw:
                    s_ = jnp.pad(s_, ((0, 0), (0, dh), (0, dw), (0, 0)))
                slabs.append(s_)
        xrows = jnp.concatenate(slabs, axis=1)         # (N, s*s*hp, wp, Cin)

    nb = _pick_batch_tile(N, Ho * Wo)
    grid = (N // nb,)

    in_specs = [
        pl.BlockSpec((nb,) + xrows.shape[1:], lambda i: (i, 0, 0, 0)),
        pl.BlockSpec(w9.shape, lambda i: (0, 0, 0)),
        pl.BlockSpec(b.shape, lambda i: (0, 0)),
    ]
    call_args = [xrows, w9, b]
    mode = "none"
    r_blk = 0
    if residual is not None:
        cr = residual.shape[-1]
        in_specs.append(pl.BlockSpec((nb, Ho, Wo, cr), lambda i: (i, 0, 0, 0)))
        call_args.append(residual.astype(cd))
        r_blk = nb * Ho * Wo * cr
        if wsc is None:
            mode = "add"
        else:
            mode = "proj"
            in_specs.append(pl.BlockSpec(wsc.shape, lambda i: (0, 0)))
            call_args.append(wsc.astype(cd))

    # Size the VMEM request from the actual blocks (2x for double buffering),
    # with headroom, and stay well under v7x's 64 MiB physical VMEM.
    esz = jnp.dtype(cd).itemsize
    x_blk = nb * xrows.shape[1] * xrows.shape[2] * Cin * esz
    w_blk = 9 * Cin * Cout * esz
    o_blk = nb * Ho * Wo * Cout * jnp.dtype(out_dtype).itemsize
    acc_b = nb * Ho * Wo * Cout * 4
    need = 2 * (x_blk + w_blk + o_blk + r_blk * esz + Cout * 4) + acc_b + (4 << 20)
    vmem_limit = int(min(max(need, 32 << 20), 48 << 20))

    out = pl.pallas_call(
        functools.partial(_conv3x3_kernel, stride=stride, hp=hp, nb=nb,
                          ho=Ho, wo=Wo, relu=relu, mode=mode),
        out_shape=jax.ShapeDtypeStruct((N, Ho, Wo, Cout), out_dtype),
        grid=grid,
        in_specs=in_specs,
        out_specs=pl.BlockSpec((nb, Ho, Wo, Cout), lambda i: (i, 0, 0, 0)),
        compiler_params=pltpu.CompilerParams(
            dimension_semantics=("parallel",),
            vmem_limit_bytes=vmem_limit),
    )(*call_args)
    return out


@functools.partial(jax.jit, static_argnames=("stride", "compute_dtype"))
def basic_block_forward(x_nchw, params, *, stride, compute_dtype=jnp.bfloat16):
    x = jnp.transpose(x_nchw, (0, 2, 3, 1)).astype(jnp.float32)   # NCHW -> NHWC
    Cin = x.shape[-1]
    Cout = params["w1"].shape[-1]
    cd = compute_dtype

    s1, b1 = _fold_bn(params["bn1"])
    s2, b2 = _fold_bn(params["bn2"])

    # conv1 -> bn1 -> relu; intermediate stored directly in compute dtype.
    out1 = _fused_conv3x3(x, params["w1"], s1, b1, stride=stride, relu=True,
                          out_dtype=cd, compute_dtype=cd)

    # conv2 -> bn2 -> (+shortcut) -> relu, fully fused in one kernel.
    if stride != 1 or Cin != Cout:
        ssc, bsc = _fold_bn(params["bn_sc"])
        xs = x[:, ::stride, ::stride, :]              # 1x1-conv (stride s) input
        wsc = params["w_sc"].reshape(Cin, Cout) * ssc.reshape(1, Cout)
        out2 = _fused_conv3x3(out1, params["w2"], s2, b2 + bsc, stride=1,
                              residual=xs, wsc=wsc, relu=True,
                              out_dtype=jnp.float32, compute_dtype=cd)
    else:
        out2 = _fused_conv3x3(out1, params["w2"], s2, b2, stride=1,
                              residual=x, relu=True,
                              out_dtype=jnp.float32, compute_dtype=cd)
    return jnp.transpose(out2, (0, 3, 1, 2))          # NHWC -> NCHW


# ---------------------------- pure-JAX reference ---------------------------- #
def _conv_ref(x, w, stride):
    pad = ((1, 1), (1, 1)) if w.shape[0] == 3 else ((0, 0), (0, 0))
    return jax.lax.conv_general_dilated(
        x, w, (stride, stride), pad,
        dimension_numbers=("NHWC", "HWIO", "NHWC"))


def _bn_ref(x, bn):
    gamma, beta, mean, var = bn
    return (x - mean) / jnp.sqrt(var + EPS) * gamma + beta


def basic_block_ref(x_nchw, params, stride):
    x = jnp.transpose(x_nchw, (0, 2, 3, 1))
    Cin = x.shape[-1]
    Cout = params["w1"].shape[-1]
    if stride != 1 or Cin != Cout:
        ident = _bn_ref(_conv_ref(x, params["w_sc"], stride), params["bn_sc"])
    else:
        ident = x
    out = jax.nn.relu(_bn_ref(_conv_ref(x, params["w1"], stride), params["bn1"]))
    out = _bn_ref(_conv_ref(out, params["w2"], 1), params["bn2"])
    out = jax.nn.relu(out + ident)
    return jnp.transpose(out, (0, 3, 1, 2))


# ----------------------------------- main ----------------------------------- #
def _make_bn(key, c):
    k1, k2, k3, k4 = jax.random.split(key, 4)
    gamma = 1.0 + 0.1 * jax.random.normal(k1, (c,), jnp.float32)
    beta = 0.1 * jax.random.normal(k2, (c,), jnp.float32)
    mean = 0.1 * jax.random.normal(k3, (c,), jnp.float32)
    var = 1.0 + 0.2 * jax.random.uniform(k4, (c,), jnp.float32)
    return (gamma, beta, mean, var)


def _make_params(key, cin, cout, shortcut):
    ks = jax.random.split(key, 6)
    p = {
        "w1": 0.1 * jax.random.normal(ks[0], (3, 3, cin, cout), jnp.float32),
        "w2": 0.1 * jax.random.normal(ks[1], (3, 3, cout, cout), jnp.float32),
        "bn1": _make_bn(ks[2], cout),
        "bn2": _make_bn(ks[3], cout),
    }
    if shortcut:
        p["w_sc"] = 0.1 * jax.random.normal(ks[4], (1, 1, cin, cout), jnp.float32)
        p["bn_sc"] = _make_bn(ks[5], cout)
    return p


if __name__ == "__main__":
    key = jax.random.PRNGKey(0)
    kx1, kp1, kx2, kp2 = jax.random.split(key, 4)

    # Config 1: projection shortcut (stride 2, Cin != Cout) — matches spec.
    x1 = jax.random.normal(kx1, (2, 4, 16, 16), jnp.float32)
    prm1 = _make_params(kp1, 4, 8, shortcut=True)

    # Config 2: identity shortcut (stride 1, Cin == Cout).
    x2 = jax.random.normal(kx2, (2, 8, 16, 16), jnp.float32)
    prm2 = _make_params(kp2, 8, 8, shortcut=False)

    for x, prm, st in ((x1, prm1, 2), (x2, prm2, 1)):
        ref = basic_block_ref(x, prm, st)

        # f32 compute path: tight structural check.
        out32 = jax.block_until_ready(
            basic_block_forward(x, prm, stride=st, compute_dtype=jnp.float32))
        assert out32.shape == ref.shape
        err32 = float(jnp.max(jnp.abs(out32 - ref)))
        assert jnp.allclose(out32, ref, rtol=5e-4, atol=5e-4), \
            f"f32 max err {err32}"

        # bf16 compute path (performance path): f32 accumulation + epilogue.
        out16 = jax.block_until_ready(
            basic_block_forward(x, prm, stride=st, compute_dtype=jnp.bfloat16))
        err16 = float(jnp.max(jnp.abs(out16 - ref)))
        assert jnp.allclose(out16, ref, rtol=6e-2, atol=6e-2), \
            f"bf16 max err {err16}"

    print("KERNEL_OK")
</pallas_src>

<mosaic_0001>
module attributes {stable_mosaic.version = 11 : i64} {
  func.func @_conv3x3_kernel(%arg0: i32, %arg1: memref<1x36x9x4xf32, #tpu.memory_space<vmem>>, %arg2: memref<9x4x8xf32, #tpu.memory_space<vmem>>, %arg3: memref<1x8xf32, #tpu.memory_space<vmem>>, %arg4: memref<1x8x8x8xf32, #tpu.memory_space<vmem>>) attributes {dimension_semantics = [#tpu.dimension_semantics<parallel>], iteration_bounds = array<i64: 2>, scalar_prefetch = 0 : i64, scratch_operands = 0 : i64, tpu.core_type = #tpu.core_type<tc>, window_params = [{transform_indices = @transform_0, window_bounds = array<i64: 1, 36, 9, 4>}, {pipeline_mode = #tpu.pipeline_mode<synchronous>, transform_indices = @transform_1, window_bounds = array<i64: 9, 4, 8>}, {pipeline_mode = #tpu.pipeline_mode<synchronous>, transform_indices = @transform_2, window_bounds = array<i64: 1, 8>}, {transform_indices = @transform_3, window_bounds = array<i64: 1, 8, 8, 8>}]} {
    %cst = arith.constant 0.000000e+00 : f32
    %0 = vector.broadcast %cst : f32 to vector<64x8xf32>
    %c0 = arith.constant 0 : index
    %c0_0 = arith.constant 0 : index
    %c0_1 = arith.constant 0 : index
    %c0_2 = arith.constant 0 : index
    %1 = vector.load %arg1[%c0, %c0_0, %c0_1, %c0_2] : memref<1x36x9x4xf32, #tpu.memory_space<vmem>>, vector<1x8x8x4xf32>
    %2 = vector.shape_cast %1 : vector<1x8x8x4xf32> to vector<64x4xf32>
    %c0_3 = arith.constant 0 : index
    %c0_4 = arith.constant 0 : index
    %c0_5 = arith.constant 0 : index
    %3 = vector.load %arg2[%c0_3, %c0_4, %c0_5] : memref<9x4x8xf32, #tpu.memory_space<vmem>>, vector<1x4x8xf32>
    %4 = vector.shape_cast %3 : vector<1x4x8xf32> to vector<4x8xf32>
    %cst_6 = arith.constant dense<0.000000e+00> : vector<64x8xf32>
    %5 = tpu.matmul %2, %4, %cst_6 {dimension_numbers = #tpu.dot_dimension_numbers<[1], [0], [0], [1], [0, 0, 1, 1], [], []>} : vector<64x4xf32>, vector<4x8xf32>, vector<64x8xf32> -> vector<64x8xf32>
    %6 = arith.addf %0, %5 : vector<64x8xf32>
    %c0_7 = arith.constant 0 : index
    %c9 = arith.constant 9 : index
    %c0_8 = arith.constant 0 : index
    %c0_9 = arith.constant 0 : index
    %7 = vector.load %arg1[%c0_7, %c9, %c0_8, %c0_9] : memref<1x36x9x4xf32, #tpu.memory_space<vmem>>, vector<1x8x8x4xf32>
    %8 = vector.shape_cast %7 : vector<1x8x8x4xf32> to vector<64x4xf32>
    %c1 = arith.constant 1 : index
    %c0_10 = arith.constant 0 : index
    %c0_11 = arith.constant 0 : index
    %9 = vector.load %arg2[%c1, %c0_10, %c0_11] : memref<9x4x8xf32, #tpu.memory_space<vmem>>, vector<1x4x8xf32>
    %10 = vector.shape_cast %9 : vector<1x4x8xf32> to vector<4x8xf32>
    %cst_12 = arith.constant dense<0.000000e+00> : vector<64x8xf32>
    %11 = tpu.matmul %8, %10, %cst_12 {dimension_numbers = #tpu.dot_dimension_numbers<[1], [0], [0], [1], [0, 0, 1, 1], [], []>} : vector<64x4xf32>, vector<4x8xf32>, vector<64x8xf32> -> vector<64x8xf32>
    %12 = arith.addf %6, %11 : vector<64x8xf32>
    %c0_13 = arith.constant 0 : index
    %c0_14 = arith.constant 0 : index
    %c1_15 = arith.constant 1 : index
    %c0_16 = arith.constant 0 : index
    %13 = vector.load %arg1[%c0_13, %c0_14, %c1_15, %c0_16] : memref<1x36x9x4xf32, #tpu.memory_space<vmem>>, vector<1x8x8x4xf32>
    %14 = vector.shape_cast %13 : vector<1x8x8x4xf32> to vector<64x4xf32>
    %c2 = arith.constant 2 : index
    %c0_17 = arith.constant 0 : index
    %c0_18 = arith.constant 0 : index
    %15 = vector.load %arg2[%c2, %c0_17, %c0_18] : memref<9x4x8xf32, #tpu.memory_space<vmem>>, vector<1x4x8xf32>
    %16 = vector.shape_cast %15 : vector<1x4x8xf32> to vector<4x8xf32>
    %cst_19 = arith.constant dense<0.000000e+00> : vector<64x8xf32>
    %17 = tpu.matmul %14, %16, %cst_19 {dimension_numbers = #tpu.dot_dimension_numbers<[1], [0], [0], [1], [0, 0, 1, 1], [], []>} : vector<64x4xf32>, vector<4x8xf32>, vector<64x8xf32> -> vector<64x8xf32>
    %18 = arith.addf %12, %17 : vector<64x8xf32>
    %c0_20 = arith.constant 0 : index
    %c18 = arith.constant 18 : index
    %c0_21 = arith.constant 0 : index
    %c0_22 = arith.constant 0 : index
    %19 = vector.load %arg1[%c0_20, %c18, %c0_21, %c0_22] : memref<1x36x9x4xf32, #tpu.memory_space<vmem>>, vector<1x8x8x4xf32>
    %20 = vector.shape_cast %19 : vector<1x8x8x4xf32> to vector<64x4xf32>
    %c3 = arith.constant 3 : index
    %c0_23 = arith.constant 0 : index
    %c0_24 = arith.constant 0 : index
    %21 = vector.load %arg2[%c3, %c0_23, %c0_24] : memref<9x4x8xf32, #tpu.memory_space<vmem>>, vector<1x4x8xf32>
    %22 = vector.shape_cast %21 : vector<1x4x8xf32> to vector<4x8xf32>
    %cst_25 = arith.constant dense<0.000000e+00> : vector<64x8xf32>
    %23 = tpu.matmul %20, %22, %cst_25 {dimension_numbers = #tpu.dot_dimension_numbers<[1], [0], [0], [1], [0, 0, 1, 1], [], []>} : vector<64x4xf32>, vector<4x8xf32>, vector<64x8xf32> -> vector<64x8xf32>
    %24 = arith.addf %18, %23 : vector<64x8xf32>
    %c0_26 = arith.constant 0 : index
    %c27 = arith.constant 27 : index
    %c0_27 = arith.constant 0 : index
    %c0_28 = arith.constant 0 : index
    %25 = vector.load %arg1[%c0_26, %c27, %c0_27, %c0_28] : memref<1x36x9x4xf32, #tpu.memory_space<vmem>>, vector<1x8x8x4xf32>
    %26 = vector.shape_cast %25 : vector<1x8x8x4xf32> to vector<64x4xf32>
    %c4 = arith.constant 4 : index
    %c0_29 = arith.constant 0 : index
    %c0_30 = arith.constant 0 : index
    %27 = vector.load %arg2[%c4, %c0_29, %c0_30] : memref<9x4x8xf32, #tpu.memory_space<vmem>>, vector<1x4x8xf32>
    %28 = vector.shape_cast %27 : vector<1x4x8xf32> to vector<4x8xf32>
    %cst_31 = arith.constant dense<0.000000e+00> : vector<64x8xf32>
    %29 = tpu.matmul %26, %28, %cst_31 {dimension_numbers = #tpu.dot_dimension_numbers<[1], [0], [0], [1], [0, 0, 1, 1], [], []>} : vector<64x4xf32>, vector<4x8xf32>, vector<64x8xf32> -> vector<64x8xf32>
    %30 = arith.addf %24, %29 : vector<64x8xf32>
    %c0_32 = arith.constant 0 : index
    %c18_33 = arith.constant 18 : index
    %c1_34 = arith.constant 1 : index
    %c0_35 = arith.constant 0 : index
    %31 = vector.load %arg1[%c0_32, %c18_33, %c1_34, %c0_35] : memref<1x36x9x4xf32, #tpu.memory_space<vmem>>, vector<1x8x8x4xf32>
    %32 = vector.shape_cast %31 : vector<1x8x8x4xf32> to vector<64x4xf32>
    %c5 = arith.constant 5 : index
    %c0_36 = arith.constant 0 : index
    %c0_37 = arith.constant 0 : index
    %33 = vector.load %arg2[%c5, %c0_36, %c0_37] : memref<9x4x8xf32, #tpu.memory_space<vmem>>, vector<1x4x8xf32>
    %34 = vector.shape_cast %33 : vector<1x4x8xf32> to vector<4x8xf32>
    %cst_38 = arith.constant dense<0.000000e+00> : vector<64x8xf32>
    %35 = tpu.matmul %32, %34, %cst_38 {dimension_numbers = #tpu.dot_dimension_numbers<[1], [0], [0], [1], [0, 0, 1, 1], [], []>} : vector<64x4xf32>, vector<4x8xf32>, vector<64x8xf32> -> vector<64x8xf32>
    %36 = arith.addf %30, %35 : vector<64x8xf32>
    %c0_39 = arith.constant 0 : index
    %c1_40 = arith.constant 1 : index
    %c0_41 = arith.constant 0 : index
    %c0_42 = arith.constant 0 : index
    %37 = vector.load %arg1[%c0_39, %c1_40, %c0_41, %c0_42] : memref<1x36x9x4xf32, #tpu.memory_space<vmem>>, vector<1x8x8x4xf32>
    %38 = vector.shape_cast %37 : vector<1x8x8x4xf32> to vector<64x4xf32>
    %c6 = arith.constant 6 : index
    %c0_43 = arith.constant 0 : index
    %c0_44 = arith.constant 0 : index
    %39 = vector.load %arg2[%c6, %c0_43, %c0_44] : memref<9x4x8xf32, #tpu.memory_space<vmem>>, vector<1x4x8xf32>
    %40 = vector.shape_cast %39 : vector<1x4x8xf32> to vector<4x8xf32>
    %cst_45 = arith.constant dense<0.000000e+00> : vector<64x8xf32>
    %41 = tpu.matmul %38, %40, %cst_45 {dimension_numbers = #tpu.dot_dimension_numbers<[1], [0], [0], [1], [0, 0, 1, 1], [], []>} : vector<64x4xf32>, vector<4x8xf32>, vector<64x8xf32> -> vector<64x8xf32>
    %42 = arith.addf %36, %41 : vector<64x8xf32>
    %c0_46 = arith.constant 0 : index
    %c10 = arith.constant 10 : index
    %c0_47 = arith.constant 0 : index
    %c0_48 = arith.constant 0 : index
    %43 = vector.load %arg1[%c0_46, %c10, %c0_47, %c0_48] : memref<1x36x9x4xf32, #tpu.memory_space<vmem>>, vector<1x8x8x4xf32>
    %44 = vector.shape_cast %43 : vector<1x8x8x4xf32> to vector<64x4xf32>
    %c7 = arith.constant 7 : index
    %c0_49 = arith.constant 0 : index
    %c0_50 = arith.constant 0 : index
    %45 = vector.load %arg2[%c7, %c0_49, %c0_50] : memref<9x4x8xf32, #tpu.memory_space<vmem>>, vector<1x4x8xf32>
    %46 = vector.shape_cast %45 : vector<1x4x8xf32> to vector<4x8xf32>
    %cst_51 = arith.constant dense<0.000000e+00> : vector<64x8xf32>
    %47 = tpu.matmul %44, %46, %cst_51 {dimension_numbers = #tpu.dot_dimension_numbers<[1], [0], [0], [1], [0, 0, 1, 1], [], []>} : vector<64x4xf32>, vector<4x8xf32>, vector<64x8xf32> -> vector<64x8xf32>
    %48 = arith.addf %42, %47 : vector<64x8xf32>
    %c0_52 = arith.constant 0 : index
    %c1_53 = arith.constant 1 : index
    %c1_54 = arith.constant 1 : index
    %c0_55 = arith.constant 0 : index
    %49 = vector.load %arg1[%c0_52, %c1_53, %c1_54, %c0_55] : memref<1x36x9x4xf32, #tpu.memory_space<vmem>>, vector<1x8x8x4xf32>
    %50 = vector.shape_cast %49 : vector<1x8x8x4xf32> to vector<64x4xf32>
    %c8 = arith.constant 8 : index
    %c0_56 = arith.constant 0 : index
    %c0_57 = arith.constant 0 : index
    %51 = vector.load %arg2[%c8, %c0_56, %c0_57] : memref<9x4x8xf32, #tpu.memory_space<vmem>>, vector<1x4x8xf32>
    %52 = vector.shape_cast %51 : vector<1x4x8xf32> to vector<4x8xf32>
    %cst_58 = arith.constant dense<0.000000e+00> : vector<64x8xf32>
    %53 = tpu.matmul %50, %52, %cst_58 {dimension_numbers = #tpu.dot_dimension_numbers<[1], [0], [0], [1], [0, 0, 1, 1], [], []>} : vector<64x4xf32>, vector<4x8xf32>, vector<64x8xf32> -> vector<64x8xf32>
    %54 = arith.addf %48, %53 : vector<64x8xf32>
    %c0_59 = arith.constant 0 : index
    %c0_60 = arith.constant 0 : index
    %55 = vector.load %arg3[%c0_59, %c0_60] : memref<1x8xf32, #tpu.memory_space<vmem>>, vector<1x8xf32>
    %56 = vector.broadcast %55 : vector<1x8xf32> to vector<64x8xf32>
    %57 = arith.addf %54, %56 : vector<64x8xf32>
    %cst_61 = arith.constant 0.000000e+00 : f32
    %58 = vector.broadcast %cst_61 : f32 to vector<64x8xf32>
    %59 = arith.maximumf %57, %58 : vector<64x8xf32>
    %60 = vector.shape_cast %59 : vector<64x8xf32> to vector<1x8x8x8xf32>
    %c0_62 = arith.constant 0 : index
    %c0_63 = arith.constant 0 : index
    %c0_64 = arith.constant 0 : index
    %c0_65 = arith.constant 0 : index
    %61 = vector.load %arg4[%c0_62, %c0_63, %c0_64, %c0_65] : memref<1x8x8x8xf32, #tpu.memory_space<vmem>>, vector<1x8x8x8xf32>
    tpu.vector_store %arg4[%c0_62, %c0_63, %c0_64, %c0_65], %60 {strides = array<i32>} : memref<1x8x8x8xf32, #tpu.memory_space<vmem>>, vector<1x8x8x8xf32>,
    return
  }
  func.func @transform_0(%arg0: i32) -> (i32, i32, i32, i32) {
    %c0_i32 = arith.constant 0 : i32
    %c0_i32_0 = arith.constant 0 : i32
    %c0_i32_1 = arith.constant 0 : i32
    %c0_i32_2 = arith.constant 0 : i32
    return %arg0, %c0_i32, %c0_i32_0, %c0_i32_1 : i32, i32, i32, i32
  }
  func.func @transform_1(%arg0: i32) -> (i32, i32, i32) {
    %c0_i32 = arith.constant 0 : i32
    %c0_i32_0 = arith.constant 0 : i32
    %c0_i32_1 = arith.constant 0 : i32
    %c0_i32_2 = arith.constant 0 : i32
    return %c0_i32, %c0_i32_0, %c0_i32_1 : i32, i32, i32
  }
  func.func @transform_2(%arg0: i32) -> (i32, i32) {
    %c0_i32 = arith.constant 0 : i32
    %c0_i32_0 = arith.constant 0 : i32
    %c0_i32_1 = arith.constant 0 : i32
    return %c0_i32, %c0_i32_0 : i32, i32
  }
  func.func @transform_3(%arg0: i32) -> (i32, i32, i32, i32) {
    %c0_i32 = arith.constant 0 : i32
    %c0_i32_0 = arith.constant 0 : i32
    %c0_i32_1 = arith.constant 0 : i32
    %c0_i32_2 = arith.constant 0 : i32
    return %arg0, %c0_i32, %c0_i32_0, %c0_i32_1 : i32, i32, i32, i32
  }
}

module attributes {stable_mosaic.version = 11 : i64} {
  func.func @_conv3x3_kernel(%arg0: i32, %arg1: memref<1x10x10x8xf32, #tpu.memory_space<vmem>>, %arg2: memref<9x8x8xf32, #tpu.memory_space<vmem>>, %arg3: memref<1x8xf32, #tpu.memory_space<vmem>>, %arg4: memref<1x8x8x4xf32, #tpu.memory_space<vmem>>, %arg5: memref<4x8xf32, #tpu.memory_space<vmem>>, %arg6: memref<1x8x8x8xf32, #tpu.memory_space<vmem>>) attributes {dimension_semantics = [#tpu.dimension_semantics<parallel>], iteration_bounds = array<i64: 2>, scalar_prefetch = 0 : i64, scratch_operands = 0 : i64, tpu.core_type = #tpu.core_type<tc>, window_params = [{transform_indices = @transform_0, window_bounds = array<i64: 1, 10, 10, 8>}, {pipeline_mode = #tpu.pipeline_mode<synchronous>, transform_indices = @transform_1, window_bounds = array<i64: 9, 8, 8>}, {pipeline_mode = #tpu.pipeline_mode<synchronous>, transform_indices = @transform_2, window_bounds = array<i64: 1, 8>}, {transform_indices = @transform_3, window_bounds = array<i64: 1, 8, 8, 4>}, {pipeline_mode = #tpu.pipeline_mode<synchronous>, transform_indices = @transform_4, window_bounds = array<i64: 4, 8>}, {transform_indices = @transform_5, window_bounds = array<i64: 1, 8, 8, 8>}]} {
    %cst = arith.constant 0.000000e+00 : f32
    %0 = vector.broadcast %cst : f32 to vector<64x8xf32>
    %c0 = arith.constant 0 : index
    %c0_0 = arith.constant 0 : index
    %c0_1 = arith.constant 0 : index
    %c0_2 = arith.constant 0 : index
    %1 = vector.load %arg1[%c0, %c0_0, %c0_1, %c0_2] : memref<1x10x10x8xf32, #tpu.memory_space<vmem>>, vector<1x8x8x8xf32>
    %2 = vector.shape_cast %1 : vector<1x8x8x8xf32> to vector<64x8xf32>
    %c0_3 = arith.constant 0 : index
    %c0_4 = arith.constant 0 : index
    %c0_5 = arith.constant 0 : index
    %3 = vector.load %arg2[%c0_3, %c0_4, %c0_5] : memref<9x8x8xf32, #tpu.memory_space<vmem>>, vector<1x8x8xf32>
    %4 = vector.shape_cast %3 : vector<1x8x8xf32> to vector<8x8xf32>
    %cst_6 = arith.constant dense<0.000000e+00> : vector<64x8xf32>
    %5 = tpu.matmul %2, %4, %cst_6 {dimension_numbers = #tpu.dot_dimension_numbers<[1], [0], [0], [1], [0, 0, 1, 1], [], []>} : vector<64x8xf32>, vector<8x8xf32>, vector<64x8xf32> -> vector<64x8xf32>
    %6 = arith.addf %0, %5 : vector<64x8xf32>
    %c0_7 = arith.constant 0 : index
    %c0_8 = arith.constant 0 : index
    %c1 = arith.constant 1 : index
    %c0_9 = arith.constant 0 : index
    %7 = vector.load %arg1[%c0_7, %c0_8, %c1, %c0_9] : memref<1x10x10x8xf32, #tpu.memory_space<vmem>>, vector<1x8x8x8xf32>
    %8 = vector.shape_cast %7 : vector<1x8x8x8xf32> to vector<64x8xf32>
    %c1_10 = arith.constant 1 : index
    %c0_11 = arith.constant 0 : index
    %c0_12 = arith.constant 0 : index
    %9 = vector.load %arg2[%c1_10, %c0_11, %c0_12] : memref<9x8x8xf32, #tpu.memory_space<vmem>>, vector<1x8x8xf32>
    %10 = vector.shape_cast %9 : vector<1x8x8xf32> to vector<8x8xf32>
    %cst_13 = arith.constant dense<0.000000e+00> : vector<64x8xf32>
    %11 = tpu.matmul %8, %10, %cst_13 {dimension_numbers = #tpu.dot_dimension_numbers<[1], [0], [0], [1], [0, 0, 1, 1], [], []>} : vector<64x8xf32>, vector<8x8xf32>, vector<64x8xf32> -> vector<64x8xf32>
    %12 = arith.addf %6, %11 : vector<64x8xf32>
    %c0_14 = arith.constant 0 : index
    %c0_15 = arith.constant 0 : index
    %c2 = arith.constant 2 : index
    %c0_16 = arith.constant 0 : index
    %13 = vector.load %arg1[%c0_14, %c0_15, %c2, %c0_16] : memref<1x10x10x8xf32, #tpu.memory_space<vmem>>, vector<1x8x8x8xf32>
    %14 = vector.shape_cast %13 : vector<1x8x8x8xf32> to vector<64x8xf32>
    %c2_17 = arith.constant 2 : index
    %c0_18 = arith.constant 0 : index
    %c0_19 = arith.constant 0 : index
    %15 = vector.load %arg2[%c2_17, %c0_18, %c0_19] : memref<9x8x8xf32, #tpu.memory_space<vmem>>, vector<1x8x8xf32>
    %16 = vector.shape_cast %15 : vector<1x8x8xf32> to vector<8x8xf32>
    %cst_20 = arith.constant dense<0.000000e+00> : vector<64x8xf32>
    %17 = tpu.matmul %14, %16, %cst_20 {dimension_numbers = #tpu.dot_dimension_numbers<[1], [0], [0], [1], [0, 0, 1, 1], [], []>} : vector<64x8xf32>, vector<8x8xf32>, vector<64x8xf32> -> vector<64x8xf32>
    %18 = arith.addf %12, %17 : vector<64x8xf32>
    %c0_21 = arith.constant 0 : index
    %c1_22 = arith.constant 1 : index
    %c0_23 = arith.constant 0 : index
    %c0_24 = arith.constant 0 : index
    %19 = vector.load %arg1[%c0_21, %c1_22, %c0_23, %c0_24] : memref<1x10x10x8xf32, #tpu.memory_space<vmem>>, vector<1x8x8x8xf32>
    %20 = vector.shape_cast %19 : vector<1x8x8x8xf32> to vector<64x8xf32>
    %c3 = arith.constant 3 : index
    %c0_25 = arith.constant 0 : index
    %c0_26 = arith.constant 0 : index
    %21 = vector.load %arg2[%c3, %c0_25, %c0_26] : memref<9x8x8xf32, #tpu.memory_space<vmem>>, vector<1x8x8xf32>
    %22 = vector.shape_cast %21 : vector<1x8x8xf32> to vector<8x8xf32>
    %cst_27 = arith.constant dense<0.000000e+00> : vector<64x8xf32>
    %23 = tpu.matmul %20, %22, %cst_27 {dimension_numbers = #tpu.dot_dimension_numbers<[1], [0], [0], [1], [0, 0, 1, 1], [], []>} : vector<64x8xf32>, vector<8x8xf32>, vector<64x8xf32> -> vector<64x8xf32>
    %24 = arith.addf %18, %23 : vector<64x8xf32>
    %c0_28 = arith.constant 0 : index
    %c1_29 = arith.constant 1 : index
    %c1_30 = arith.constant 1 : index
    %c0_31 = arith.constant 0 : index
    %25 = vector.load %arg1[%c0_28, %c1_29, %c1_30, %c0_31] : memref<1x10x10x8xf32, #tpu.memory_space<vmem>>, vector<1x8x8x8xf32>
    %26 = vector.shape_cast %25 : vector<1x8x8x8xf32> to vector<64x8xf32>
    %c4 = arith.constant 4 : index
    %c0_32 = arith.constant 0 : index
    %c0_33 = arith.constant 0 : index
    %27 = vector.load %arg2[%c4, %c0_32, %c0_33] : memref<9x8x8xf32, #tpu.memory_space<vmem>>, vector<1x8x8xf32>
    %28 = vector.shape_cast %27 : vector<1x8x8xf32> to vector<8x8xf32>
    %cst_34 = arith.constant dense<0.000000e+00> : vector<64x8xf32>
    %29 = tpu.matmul %26, %28, %cst_34 {dimension_numbers = #tpu.dot_dimension_numbers<[1], [0], [0], [1], [0, 0, 1, 1], [], []>} : vector<64x8xf32>, vector<8x8xf32>, vector<64x8xf32> -> vector<64x8xf32>
    %30 = arith.addf %24, %29 : vector<64x8xf32>
    %c0_35 = arith.constant 0 : index
    %c1_36 = arith.constant 1 : index
    %c2_37 = arith.constant 2 : index
    %c0_38 = arith.constant 0 : index
    %31 = vector.load %arg1[%c0_35, %c1_36, %c2_37, %c0_38] : memref<1x10x10x8xf32, #tpu.memory_space<vmem>>, vector<1x8x8x8xf32>
    %32 = vector.shape_cast %31 : vector<1x8x8x8xf32> to vector<64x8xf32>
    %c5 = arith.constant 5 : index
    %c0_39 = arith.constant 0 : index
    %c0_40 = arith.constant 0 : index
    %33 = vector.load %arg2[%c5, %c0_39, %c0_40] : memref<9x8x8xf32, #tpu.memory_space<vmem>>, vector<1x8x8xf32>
    %34 = vector.shape_cast %33 : vector<1x8x8xf32> to vector<8x8xf32>
    %cst_41 = arith.constant dense<0.000000e+00> : vector<64x8xf32>
    %35 = tpu.matmul %32, %34, %cst_41 {dimension_numbers = #tpu.dot_dimension_numbers<[1], [0], [0], [1], [0, 0, 1, 1], [], []>} : vector<64x8xf32>, vector<8x8xf32>, vector<64x8xf32> -> vector<64x8xf32>
    %36 = arith.addf %30, %35 : vector<64x8xf32>
    %c0_42 = arith.constant 0 : index
    %c2_43 = arith.constant 2 : index
    %c0_44 = arith.constant 0 : index
    %c0_45 = arith.constant 0 : index
    %37 = vector.load %arg1[%c0_42, %c2_43, %c0_44, %c0_45] : memref<1x10x10x8xf32, #tpu.memory_space<vmem>>, vector<1x8x8x8xf32>
    %38 = vector.shape_cast %37 : vector<1x8x8x8xf32> to vector<64x8xf32>
    %c6 = arith.constant 6 : index
    %c0_46 = arith.constant 0 : index
    %c0_47 = arith.constant 0 : index
    %39 = vector.load %arg2[%c6, %c0_46, %c0_47] : memref<9x8x8xf32, #tpu.memory_space<vmem>>, vector<1x8x8xf32>
    %40 = vector.shape_cast %39 : vector<1x8x8xf32> to vector<8x8xf32>
    %cst_48 = arith.constant dense<0.000000e+00> : vector<64x8xf32>
    %41 = tpu.matmul %38, %40, %cst_48 {dimension_numbers = #tpu.dot_dimension_numbers<[1], [0], [0], [1], [0, 0, 1, 1], [], []>} : vector<64x8xf32>, vector<8x8xf32>, vector<64x8xf32> -> vector<64x8xf32>
    %42 = arith.addf %36, %41 : vector<64x8xf32>
    %c0_49 = arith.constant 0 : index
    %c2_50 = arith.constant 2 : index
    %c1_51 = arith.constant 1 : index
    %c0_52 = arith.constant 0 : index
    %43 = vector.load %arg1[%c0_49, %c2_50, %c1_51, %c0_52] : memref<1x10x10x8xf32, #tpu.memory_space<vmem>>, vector<1x8x8x8xf32>
    %44 = vector.shape_cast %43 : vector<1x8x8x8xf32> to vector<64x8xf32>
    %c7 = arith.constant 7 : index
    %c0_53 = arith.constant 0 : index
    %c0_54 = arith.constant 0 : index
    %45 = vector.load %arg2[%c7, %c0_53, %c0_54] : memref<9x8x8xf32, #tpu.memory_space<vmem>>, vector<1x8x8xf32>
    %46 = vector.shape_cast %45 : vector<1x8x8xf32> to vector<8x8xf32>
    %cst_55 = arith.constant dense<0.000000e+00> : vector<64x8xf32>
    %47 = tpu.matmul %44, %46, %cst_55 {dimension_numbers = #tpu.dot_dimension_numbers<[1], [0], [0], [1], [0, 0, 1, 1], [], []>} : vector<64x8xf32>, vector<8x8xf32>, vector<64x8xf32> -> vector<64x8xf32>
    %48 = arith.addf %42, %47 : vector<64x8xf32>
    %c0_56 = arith.constant 0 : index
    %c2_57 = arith.constant 2 : index
    %c2_58 = arith.constant 2 : index
    %c0_59 = arith.constant 0 : index
    %49 = vector.load %arg1[%c0_56, %c2_57, %c2_58, %c0_59] : memref<1x10x10x8xf32, #tpu.memory_space<vmem>>, vector<1x8x8x8xf32>
    %50 = vector.shape_cast %49 : vector<1x8x8x8xf32> to vector<64x8xf32>
    %c8 = arith.constant 8 : index
    %c0_60 = arith.constant 0 : index
    %c0_61 = arith.constant 0 : index
    %51 = vector.load %arg2[%c8, %c0_60, %c0_61] : memref<9x8x8xf32, #tpu.memory_space<vmem>>, vector<1x8x8xf32>
    %52 = vector.shape_cast %51 : vector<1x8x8xf32> to vector<8x8xf32>
    %cst_62 = arith.constant dense<0.000000e+00> : vector<64x8xf32>
    %53 = tpu.matmul %50, %52, %cst_62 {dimension_numbers = #tpu.dot_dimension_numbers<[1], [0], [0], [1], [0, 0, 1, 1], [], []>} : vector<64x8xf32>, vector<8x8xf32>, vector<64x8xf32> -> vector<64x8xf32>
    %54 = arith.addf %48, %53 : vector<64x8xf32>
    %c0_63 = arith.constant 0 : index
    %c0_64 = arith.constant 0 : index
    %55 = vector.load %arg3[%c0_63, %c0_64] : memref<1x8xf32, #tpu.memory_space<vmem>>, vector<1x8xf32>
    %56 = vector.broadcast %55 : vector<1x8xf32> to vector<64x8xf32>
    %57 = arith.addf %54, %56 : vector<64x8xf32>
    %c0_65 = arith.constant 0 : index
    %c0_66 = arith.constant 0 : index
    %c0_67 = arith.constant 0 : index
    %c0_68 = arith.constant 0 : index
    %58 = vector.load %arg4[%c0_65, %c0_66, %c0_67, %c0_68] : memref<1x8x8x4xf32, #tpu.memory_space<vmem>>, vector<1x8x8x4xf32>
    %59 = vector.shape_cast %58 : vector<1x8x8x4xf32> to vector<64x4xf32>
    %c0_69 = arith.constant 0 : index
    %c0_70 = arith.constant 0 : index
    %60 = vector.load %arg5[%c0_69, %c0_70] : memref<4x8xf32, #tpu.memory_space<vmem>>, vector<4x8xf32>
    %cst_71 = arith.constant dense<0.000000e+00> : vector<64x8xf32>
    %61 = tpu.matmul %59, %60, %cst_71 {dimension_numbers = #tpu.dot_dimension_numbers<[1], [0], [0], [1], [0, 0, 1, 1], [], []>} : vector<64x4xf32>, vector<4x8xf32>, vector<64x8xf32> -> vector<64x8xf32>
    %62 = arith.addf %57, %61 : vector<64x8xf32>
    %cst_72 = arith.constant 0.000000e+00 : f32
    %63 = vector.broadcast %cst_72 : f32 to vector<64x8xf32>
    %64 = arith.maximumf %62, %63 : vector<64x8xf32>
    %65 = vector.shape_cast %64 : vector<64x8xf32> to vector<1x8x8x8xf32>
    %c0_73 = arith.constant 0 : index
    %c0_74 = arith.constant 0 : index
    %c0_75 = arith.constant 0 : index
    %c0_76 = arith.constant 0 : index
    %66 = vector.load %arg6[%c0_73, %c0_74, %c0_75, %c0_76] : memref<1x8x8x8xf32, #tpu.memory_space<vmem>>, vector<1x8x8x8xf32>
    tpu.vector_store %arg6[%c0_73, %c0_74, %c0_75, %c0_76], %65 {strides = array<i32>} : memref<1x8x8x8xf32, #tpu.memory_space<vmem>>, vector<1x8x8x8xf32>,
    return
  }
  func.func @transform_0(%arg0: i32) -> (i32, i32, i32, i32) {
    %c0_i32 = arith.constant 0 : i32
    %c0_i32_0 = arith.constant 0 : i32
    %c0_i32_1 = arith.constant 0 : i32
    %c0_i32_2 = arith.constant 0 : i32
    return %arg0, %c0_i32, %c0_i32_0, %c0_i32_1 : i32, i32, i32, i32
  }
  func.func @transform_1(%arg0: i32) -> (i32, i32, i32) {
    %c0_i32 = arith.constant 0 : i32
    %c0_i32_0 = arith.constant 0 : i32
    %c0_i32_1 = arith.constant 0 : i32
    %c0_i32_2 = arith.constant 0 : i32
    return %c0_i32, %c0_i32_0, %c0_i32_1 : i32, i32, i32
  }
  func.func @transform_2(%arg0: i32) -> (i32, i32) {
    %c0_i32 = arith.constant 0 : i32
    %c0_i32_0 = arith.constant 0 : i32
    %c0_i32_1 = arith.constant 0 : i32
    return %c0_i32, %c0_i32_0 : i32, i32
  }
  func.func @transform_3(%arg0: i32) -> (i32, i32, i32, i32) {
    %c0_i32 = arith.constant 0 : i32
    %c0_i32_0 = arith.constant 0 : i32
    %c0_i32_1 = arith.constant 0 : i32
    %c0_i32_2 = arith.constant 0 : i32
    return %arg0, %c0_i32, %c0_i32_0, %c0_i32_1 : i32, i32, i32, i32
  }
  func.func @transform_4(%arg0: i32) -> (i32, i32) {
    %c0_i32 = arith.constant 0 : i32
    %c0_i32_0 = arith.constant 0 : i32
    %c0_i32_1 = arith.constant 0 : i32
    return %c0_i32, %c0_i32_0 : i32, i32
  }
  func.func @transform_5(%arg0: i32) -> (i32, i32, i32, i32) {
    %c0_i32 = arith.constant 0 : i32
    %c0_i32_0 = arith.constant 0 : i32
    %c0_i32_1 = arith.constant 0 : i32
    %c0_i32_2 = arith.constant 0 : i32
    return %arg0, %c0_i32, %c0_i32_0, %c0_i32_1 : i32, i32, i32, i32
  }
}

</mosaic_0001>

<llo_original>
// kernel: basic_block_forward.2
$region0: #{basic_block_forward.2}
  #allocation0 [shape = 'u32[]', space=smem, size = 0x4, offset = 0x4, fixed_abs, tag = 'smem constant byte address 0x4 - core index']
  #allocation1 [shape = 'u32[144,128]{1,0:T(1,128)}', space=vmem, size = 0x12000, scoped, tag = 'internal scratch']
  %s0 = inlined_call_operand.vmem [shape: f32[2,36,9,4], index: 0, kind: input, shape index: {}]
  %s1 = inlined_call_operand.vmem [shape: f32[9,4,8], index: 1, kind: input, shape index: {}]
  %s2 = inlined_call_operand.vmem [shape: f32[1,8], index: 2, kind: input, shape index: {}]
  %s3 = inlined_call_operand.vmem [shape: f32[2,8,8,8], index: 3, kind: output, shape index: {}]
  %s4 = sld [smem:[#allocation0]]
  $region45: #{basic_block_forward.2} parent=0
    _
  %s6 = ssub.s32 1, %s4
  %s7 = scalar_select 0, %s6, %s4
  loop: start=0, step=1, limit=4
  $region2: #{basic_block_forward.2} parent=0 // loop_pre_header
    _
  $region3: #{basic_block_forward.2} parent=0 // loop_header
    %s9 = sphi 0, %s13
    %p10 = scmp.ge.s32.totalorder %s9, 4
    %s19 = sphi 0, %s21
    %s22 = sphi 0, %s19
    %s23 = sphi 0, %s22
    %s39 = sphi 0, %s23
    %s43 = sphi 0, %s43
    %s45 = sphi 0, %s43
    %s46 = sphi 0, %s45
    %s60 = sphi 0, %s46
    %s64 = sphi 0, %s64
    %s66 = sphi 0, %s64
    %s67 = sphi 0, %s66
    %s81 = sphi 0, %s67
    %s87 = sphi 0, %s89
    %s90 = sphi 0, %s87
    %s91 = sphi 0, %s90
    %s107 = sphi 0, %s91
  $region4: #{basic_block_forward.2} parent=0 // loop_header_branch
    %12 = sbr.rel (%p10) target = $region8
  $region5: #{basic_block_forward.2} parent=0 // loop_body
    %s14 = ssub.s32 %s9, 1
    %s15 = ssub.s32 %s9, 2
    %s16 = sadd.s32 %s9, 1
    %s17 = ssub.s32 %s9, %s16
    %p18 = scmp.eq.s32.totalorder %s17, 0
    %s20 = sadd.s32 %s19, 1
    %s21 = scalar_select %p18, %s19, %s20
    %p24 = pneg %p18
    %p25 = scmp.eq.s32.totalorder %s9, 1
    %p26 = por %p24, %p25
    %p27 = scmp.ne.s32.totalorder %s19, %s22
    %p28 = scmp.eq.s32.totalorder %s9, 0
    %p29 = por %p27, %p28
    %p30 = scmp.ne.s32.totalorder %s19, %s22
    %p31 = scmp.eq.s32.totalorder %s14, 1
    %p32 = por %p30, %p31
    %p33 = scmp.ne.s32.totalorder %s22, %s23
    %p34 = scmp.eq.s32.totalorder %s14, 0
    %p35 = por %p33, %p34
    %p36 = scmp.ne.s32.totalorder %s22, %s23
    %p37 = scmp.eq.s32.totalorder %s15, 1
    %p38 = por %p36, %p37
    %p40 = scmp.ne.s32.totalorder %s23, %s39
    %p41 = scmp.eq.s32.totalorder %s15, 0
    %p42 = por %p40, %p41
    %s44 = sadd.s32 %s43, 1
    %p47 = scmp.eq.s32.totalorder %s9, 1
    %p48 = scmp.ne.s32.totalorder %s43, %s45
    %p49 = scmp.eq.s32.totalorder %s9, 0
    %p50 = por %p48, %p49
    %p51 = scmp.ne.s32.totalorder %s43, %s45
    %p52 = scmp.eq.s32.totalorder %s14, 1
    %p53 = por %p51, %p52
    %p54 = scmp.ne.s32.totalorder %s45, %s46
    %p55 = scmp.eq.s32.totalorder %s14, 0
    %p56 = por %p54, %p55
    %p57 = scmp.ne.s32.totalorder %s45, %s46
    %p58 = scmp.eq.s32.totalorder %s15, 1
    %p59 = por %p57, %p58
    %p61 = scmp.ne.s32.totalorder %s46, %s60
    %p62 = scmp.eq.s32.totalorder %s15, 0
    %p63 = por %p61, %p62
    %s65 = sadd.s32 %s64, 1
    %p68 = scmp.eq.s32.totalorder %s9, 1
    %p69 = scmp.ne.s32.totalorder %s64, %s66
    %p70 = scmp.eq.s32.totalorder %s9, 0
    %p71 = por %p69, %p70
    %p72 = scmp.ne.s32.totalorder %s64, %s66
    %p73 = scmp.eq.s32.totalorder %s14, 1
    %p74 = por %p72, %p73
    %p75 = scmp.ne.s32.totalorder %s66, %s67
    %p76 = scmp.eq.s32.totalorder %s14, 0
    %p77 = por %p75, %p76
    %p78 = scmp.ne.s32.totalorder %s66, %s67
    %p79 = scmp.eq.s32.totalorder %s15, 1
    %p80 = por %p78, %p79
    %p82 = scmp.ne.s32.totalorder %s67, %s81
    %p83 = scmp.eq.s32.totalorder %s15, 0
    %p84 = por %p82, %p83
    %s85 = ssub.s32 %s9, %s16
    %p86 = scmp.eq.s32.totalorder %s85, 0
    %s88 = sadd.s32 %s87, 1
    %s89 = scalar_select %p86, %s87, %s88
    %p92 = pneg %p86
    %p93 = scmp.eq.s32.totalorder %s9, 1
    %p94 = por %p92, %p93
    %p95 = scmp.ne.s32.totalorder %s87, %s90
    %p96 = scmp.eq.s32.totalorder %s9, 0
    %p97 = por %p95, %p96
    %p98 = scmp.ne.s32.totalorder %s87, %s90
    %p99 = scmp.eq.s32.totalorder %s14, 1
    %p100 = por %p98, %p99
    %p101 = scmp.ne.s32.totalorder %s90, %s91
    %p102 = scmp.eq.s32.totalorder %s14, 0
    %p103 = por %p101, %p102
    %p104 = scmp.ne.s32.totalorder %s90, %s91
    %p105 = scmp.eq.s32.totalorder %s15, 1
    %p106 = por %p104, %p105
    %p108 = scmp.ne.s32.totalorder %s91, %s107
    %p109 = scmp.eq.s32.totalorder %s15, 0
    %p110 = por %p108, %p109
    %p111 = scmp.le.s32.totalorder 1, %s9
    %p112 = scmp.lt.s32.totalorder %s9, 3
    %p113 = pnand %p111, %p112
    %p114 = pneg %p113
    // Predicated region
    $region9: #{basic_block_forward.2} parent=5 // pred_check
      _
    $region10: #{basic_block_forward.2} parent=5 // pred_check_branch
      %116 = sbr.rel (%p113) target = $region12
    $region11: #{basic_block_forward.2} parent=5 // pred_region
      %s117 = ssub.s32 %s9, 1
      // Predicated region
      $region13: #{basic_block_forward.2} parent=11 // pred_check
        %p118 = pneg %p56
      $region14: #{basic_block_forward.2} parent=11 // pred_check_branch
        %120 = sbr.rel (%p118) target = $region16
      $region15: #{basic_block_forward.2} parent=11 // pred_region
        _
      $region16: #{basic_block_forward.2} parent=11 // pred_fallthru
        _
      // Predicated region
      $region17: #{basic_block_forward.2} parent=11 // pred_check
        %p121 = pneg %p77
      $region18: #{basic_block_forward.2} parent=11 // pred_check_branch
        %123 = sbr.rel (%p121) target = $region20
      $region19: #{basic_block_forward.2} parent=11 // pred_region
        _
      $region20: #{basic_block_forward.2} parent=11 // pred_fallthru
        _
    $region12: #{basic_block_forward.2} parent=5 // pred_fallthru
      _
    %p124 = scmp.lt.s32.totalorder %s9, 2
    // Predicated region
    $region21: #{basic_block_forward.2} parent=5 // pred_check
      %p125 = pneg %p124
    $region22: #{basic_block_forward.2} parent=5 // pred_check_branch
      %127 = sbr.rel (%p125) target = $region24
    $region23: #{basic_block_forward.2} parent=5 // pred_region
      // Predicated region
      $region25: #{basic_block_forward.2} parent=23 // pred_check
        %p128 = pneg %p29
      $region26: #{basic_block_forward.2} parent=23 // pred_check_branch
        %130 = sbr.rel (%p128) target = $region28
      $region27: #{basic_block_forward.2} parent=23 // pred_region
        %p131 = scmp.lt.s32.totalorder %s9, 1
        %s132 = scalar_select %p131, %s9, 1
        %s133 = smul.addr %s132, 72
        %s134 = smul.addr %s133, 8
        %s135 = scalar_lea.vmem %s0, %s134
      $region28: #{basic_block_forward.2} parent=23 // pred_fallthru
        _
    $region24: #{basic_block_forward.2} parent=5 // pred_fallthru
      _
    %p136 = scmp.le.s32.totalorder 1, %s9
    %p137 = scmp.lt.s32.totalorder %s9, 3
    %p138 = pnand %p136, %p137
    %p139 = pneg %p138
    // Predicated region
    $region29: #{basic_block_forward.2} parent=5 // pred_check
      _
    $region30: #{basic_block_forward.2} parent=5 // pred_check_branch
      %141 = sbr.rel (%p138) target = $region32
    $region31: #{basic_block_forward.2} parent=5 // pred_region
      %s142 = ssub.s32 %s9, 1
      %p143 = scmp.lt.s32.totalorder %s14, 1
      %s144 = scalar_select %p143, %s14, 1
      %s145 = smul.addr %s144, 72
      %s146 = smul.addr %s145, 8
      %s147 = scalar_lea.vmem %s0, %s146
      %p148 = pneg %p35
      %p149 = pneg %p32
      %p150 = pneg %p56
      %p151 = pneg %p53
      %p152 = pneg %p77
      %p153 = pneg %p74
      %p154 = pneg %p103
      %p155 = pneg %p100
      %p156 = scmp.lt.s32.totalorder %s14, 1
      %s157 = scalar_select %p156, %s14, 1
      %s158 = smul.addr %s157, 8
      %s159 = smul.addr %s158, 8
      %s160 = scalar_lea.vmem %s3, %s159
      %p161 = scmp.lt.s32.totalorder %s14, 1
      %s162 = scalar_select %p161, %s14, 1
      %s163 = smul.addr %s162, 72
      %s164 = smul.addr %s163, 8
      %s165 = scalar_lea.vmem %s0, %s164
      %p166 = scmp.lt.s32.totalorder %s14, 1
      %s167 = scalar_select %p166, %s14, 1
      %s168 = smul.addr %s167, 8
      %s169 = smul.addr %s168, 8
      %s170 = scalar_lea.vmem %s3, %s169
      %v171 = vld [vmem:[%s165] sm:$0xff]
      %v172 = vld [vmem:[%s165 + $0x10] sm:$0xff]
      %v173 = vld [vmem:[%s165 + $0x20] sm:$0xff]
      %v174 = vld [vmem:[%s165 + $0x30] sm:$0xff]
      %v175 = vld [vmem:[%s165 + $0x40] sm:$0xff]
      %v176 = vld [vmem:[%s165 + $0x50] sm:$0xff]
      %v177 = vld [vmem:[%s165 + $0x60] sm:$0xff]
      %v178 = vld [vmem:[%s165 + $0x70] sm:$0xff]
      %v179 = vld [vmem:[%s1] sm:$0xf]
      %s180 = scalar_lea.vmem %s165, 144
      %v181 = vld [vmem:[%s180] sm:$0xff]
      %v182 = vld [vmem:[%s180 + $0x10] sm:$0xff]
      %v183 = vld [vmem:[%s180 + $0x20] sm:$0xff]
      %v184 = vld [vmem:[%s180 + $0x30] sm:$0xff]
      %v185 = vld [vmem:[%s180 + $0x40] sm:$0xff]
      %v186 = vld [vmem:[%s180 + $0x50] sm:$0xff]
      %v187 = vld [vmem:[%s180 + $0x60] sm:$0xff]
      %v188 = vld [vmem:[%s180 + $0x70] sm:$0xff]
      %s189 = scalar_lea.vmem %s1, 4
      %v190 = vld [vmem:[%s189] sm:$0xf]
      %vm191 = vcmask 31744
      %v193 = vsel %vm191, %v181, 0
      %v196 = vsel %vm191, %v182, 0
      %v199 = vsel %vm191, %v183, 0
      %v202 = vsel %vm191, %v184, 0
      %v205 = vsel %vm191, %v185, 0
      %v208 = vsel %vm191, %v186, 0
      %v211 = vsel %vm191, %v187, 0
      %v214 = vsel %vm191, %v188, 0
      %vm216 = vcmask 1043456
      %v218 = vsel %vm216, %v190, 0
      %220 = vmatprep.subr.mxu0 0.0
      %221 = vmatpush1.msra.mxu0 %v218
      %222 = vmatprep.subr.mxu0 0.0
      %223 = vmatpush1.msra.mxu0 0.0
      %224 = vmatprep.subr.mxu0 0.0
      %225 = vmatpush1.msra.mxu0 0.0
      %226 = vmatprep.subr.mxu0 0.0
      %227 = vmatpush1.msra.mxu0 0.0
      %228 = vmatprep.subr.mxu0 0.0
      %229 = vmatpush1.msra.mxu0 0.0
      %230 = vmatprep.subr.mxu0 0.0
      %231 = vmatpush1.msra.mxu0 0.0
      %232 = vmatprep.subr.mxu0 0.0
      %233 = vmatpush1.msra.mxu0 0.0
      %234 = vmatprep.subr.mxu0 0.0
      %235 = vmatpush1.msra.mxu0 0.0
      %236 = vmatprep.subr.mxu0 0.0
      %237 = vmatpush1.msra.mxu0 0.0
      %238 = vmatprep.subr.mxu0 0.0
      %239 = vmatpush1.msra.mxu0 0.0
      %240 = vmatprep.subr.mxu0 0.0
      %241 = vmatpush1.msra.mxu0 0.0
      %242 = vmatprep.subr.mxu0 0.0
      %243 = vmatpush1.msra.mxu0 0.0
      %244 = vmatprep.subr.mxu0 0.0
      %245 = vmatpush1.msra.mxu0 0.0
      %246 = vmatprep.subr.mxu0 0.0
      %247 = vmatpush1.msra.mxu0 0.0
      %248 = vmatprep.subr.mxu0 0.0
      %249 = vmatpush1.msra.mxu0 0.0
      %250 = vmatprep.subr.mxu0 0.0
      %251 = vmatpush1.msra.mxu0 0.0
      %252 = vmatprep.subr.mxu0 0.0
      %253 = vmatpush1.msra.mxu0 0.0
      %254 = vmatprep.subr.mxu0 0.0
      %255 = vmatpush1.msra.mxu0 0.0
      %256 = vmatprep.subr.mxu0 0.0
      %257 = vmatpush1.msra.mxu0 0.0
      %258 = vmatprep.subr.mxu0 0.0
      %259 = vmatpush1.msra.mxu0 0.0
      %260 = vmatprep.subr.mxu0 0.0
      %261 = vmatpush1.msra.mxu0 0.0
      %262 = vmatprep.subr.mxu0 0.0
      %263 = vmatpush1.msra.mxu0 0.0
      %264 = vmatprep.subr.mxu0 0.0
      %265 = vmatpush1.msra.mxu0 0.0
      %266 = vmatprep.subr.mxu0 0.0
      %267 = vmatpush1.msra.mxu0 0.0
      %268 = vmatprep.subr.mxu0 0.0
      %269 = vmatpush1.msra.mxu0 0.0
      %270 = vmatprep.subr.mxu0 0.0
      %271 = vmatpush1.msra.mxu0 0.0
      %272 = vmatprep.subr.mxu0 0.0
      %273 = vmatpush1.msra.mxu0 0.0
      %274 = vmatprep.subr.mxu0 0.0
      %275 = vmatpush1.msra.mxu0 0.0
      %276 = vmatprep.subr.mxu0 0.0
      %277 = vmatpush1.msra.mxu0 0.0
      %278 = vmatprep.subr.mxu0 0.0
      %279 = vmatpush1.msra.mxu0 0.0
      %280 = vmatprep.subr.mxu0 0.0
      %281 = vmatpush1.msra.mxu0 0.0
      %282 = vmatprep.subr.mxu0 0.0
      %283 = vmatpush1.msra.mxu0 0.0
      %284 = vmatprep.mubr.f32.mxu0 0.0
      %285 = vmatmul.mubr.f32.gmra.mrb[0].mxu0 %v193
      %v286 = vpop.f32.mrb[0].mxu0
      %v287 = vadd.f32 0.0, %v286
      %v288 = vpop.f32.mrb[0].mxu0
      %289 = vmatprep.mubr.f32.mxu0 0.0
      %290 = vmatmul.mubr.f32.gmra.mrb[0].mxu0 %v196
      %v291 = vpop.f32.mrb[0].mxu0
      %v292 = vadd.f32 0.0, %v291
      %v293 = vpop.f32.mrb[0].mxu0
      %294 = vmatprep.mubr.f32.mxu0 0.0
      %295 = vmatmul.mubr.f32.gmra.mrb[0].mxu0 %v199
      %v296 = vpop.f32.mrb[0].mxu0
      %v297 = vadd.f32 0.0, %v296
      %v298 = vpop.f32.mrb[0].mxu0
      %299 = vmatprep.mubr.f32.mxu0 0.0
      %300 = vmatmul.mubr.f32.gmra.mrb[0].mxu0 %v202
      %v301 = vpop.f32.mrb[0].mxu0
      %v302 = vadd.f32 0.0, %v301
      %v303 = vpop.f32.mrb[0].mxu0
      %304 = vmatprep.mubr.f32.mxu0 0.0
      %305 = vmatmul.mubr.f32.gmra.mrb[0].mxu0 %v205
      %v306 = vpop.f32.mrb[0].mxu0
      %v307 = vadd.f32 0.0, %v306
      %v308 = vpop.f32.mrb[0].mxu0
      %309 = vmatprep.mubr.f32.mxu0 0.0
      %310 = vmatmul.mubr.f32.gmra.mrb[0].mxu0 %v208
      %v311 = vpop.f32.mrb[0].mxu0
      %v312 = vadd.f32 0.0, %v311
      %v313 = vpop.f32.mrb[0].mxu0
      %314 = vmatprep.mubr.f32.mxu0 0.0
      %315 = vmatmul.mubr.f32.gmra.mrb[0].mxu0 %v211
      %v316 = vpop.f32.mrb[0].mxu0
      %v317 = vadd.f32 0.0, %v316
      %v318 = vpop.f32.mrb[0].mxu0
      %319 = vmatprep.mubr.f32.mxu0 0.0
      %320 = vmatmul.mubr.f32.gmra.mrb[0].mxu0 %v214
      %v321 = vpop.f32.mrb[0].mxu0
      %v322 = vadd.f32 0.0, %v321
      %v323 = vpop.f32.mrb[0].mxu0
      %324 = vdwg.mxu0
      %v326 = vsel %vm191, %v171, 0
      %v329 = vsel %vm191, %v172, 0
      %v332 = vsel %vm191, %v173, 0
      %v335 = vsel %vm191, %v174, 0
      %v338 = vsel %vm191, %v175, 0
      %v341 = vsel %vm191, %v176, 0
      %v344 = vsel %vm191, %v177, 0
      %v347 = vsel %vm191, %v178, 0
      %v350 = vsel %vm216, %v179, 0
      %352 = vmatprep.subr.mxu0 0.0
      %353 = vmatpush1.msra.mxu0 %v350
      %354 = vmatprep.subr.mxu0 0.0
      %355 = vmatpush1.msra.mxu0 0.0
      %356 = vmatprep.subr.mxu0 0.0
      %357 = vmatpush1.msra.mxu0 0.0
      %358 = vmatprep.subr.mxu0 0.0
      %359 = vmatpush1.msra.mxu0 0.0
      %360 = vmatprep.subr.mxu0 0.0
      %361 = vmatpush1.msra.mxu0 0.0
      %362 = vmatprep.subr.mxu0 0.0
      %363 = vmatpush1.msra.mxu0 0.0
      %364 = vmatprep.subr.mxu0 0.0
      %365 = vmatpush1.msra.mxu0 0.0
      %366 = vmatprep.subr.mxu0 0.0
      %367 = vmatpush1.msra.mxu0 0.0
      %368 = vmatprep.subr.mxu0 0.0
      %369 = vmatpush1.msra.mxu0 0.0
      %370 = vmatprep.subr.mxu0 0.0
      %371 = vmatpush1.msra.mxu0 0.0
      %372 = vmatprep.subr.mxu0 0.0
      %373 = vmatpush1.msra.mxu0 0.0
      %374 = vmatprep.subr.mxu0 0.0
      %375 = vmatpush1.msra.mxu0 0.0
      %376 = vmatprep.subr.mxu0 0.0
      %377 = vmatpush1.msra.mxu0 0.0
      %378 = vmatprep.subr.mxu0 0.0
      %379 = vmatpush1.msra.mxu0 0.0
      %380 = vmatprep.subr.mxu0 0.0
      %381 = vmatpush1.msra.mxu0 0.0
      %382 = vmatprep.subr.mxu0 0.0
      %383 = vmatpush1.msra.mxu0 0.0
      %384 = vmatprep.subr.mxu0 0.0
      %385 = vmatpush1.msra.mxu0 0.0
      %386 = vmatprep.subr.mxu0 0.0
      %387 = vmatpush1.msra.mxu0 0.0
      %388 = vmatprep.subr.mxu0 0.0
      %389 = vmatpush1.msra.mxu0 0.0
      %390 = vmatprep.subr.mxu0 0.0
      %391 = vmatpush1.msra.mxu0 0.0
      %392 = vmatprep.subr.mxu0 0.0
      %393 = vmatpush1.msra.mxu0 0.0
      %394 = vmatprep.subr.mxu0 0.0
      %395 = vmatpush1.msra.mxu0 0.0
      %396 = vmatprep.subr.mxu0 0.0
      %397 = vmatpush1.msra.mxu0 0.0
      %398 = vmatprep.subr.mxu0 0.0
      %399 = vmatpush1.msra.mxu0 0.0
      %400 = vmatprep.subr.mxu0 0.0
      %401 = vmatpush1.msra.mxu0 0.0
      %402 = vmatprep.subr.mxu0 0.0
      %403 = vmatpush1.msra.mxu0 0.0
      %404 = vmatprep.subr.mxu0 0.0
      %405 = vmatpush1.msra.mxu0 0.0
      %406 = vmatprep.subr.mxu0 0.0
      %407 = vmatpush1.msra.mxu0 0.0
      %408 = vmatprep.subr.mxu0 0.0
      %409 = vmatpush1.msra.mxu0 0.0
      %410 = vmatprep.subr.mxu0 0.0
      %411 = vmatpush1.msra.mxu0 0.0
      %412 = vmatprep.subr.mxu0 0.0
      %413 = vmatpush1.msra.mxu0 0.0
      %414 = vmatprep.subr.mxu0 0.0
      %415 = vmatpush1.msra.mxu0 0.0
      %416 = vmatprep.mubr.f32.mxu0 0.0
      %417 = vmatmul.mubr.f32.gmra.mrb[0].mxu0 %v326
      %v418 = vpop.f32.mrb[0].mxu0
      %v419 = vadd.f32 %v287, %v418
      %v420 = vpop.f32.mrb[0].mxu0
      %421 = vmatprep.mubr.f32.mxu0 0.0
      %422 = vmatmul.mubr.f32.gmra.mrb[0].mxu0 %v329
      %v423 = vpop.f32.mrb[0].mxu0
      %v424 = vadd.f32 %v292, %v423
      %v425 = vpop.f32.mrb[0].mxu0
      %426 = vmatprep.mubr.f32.mxu0 0.0
      %427 = vmatmul.mubr.f32.gmra.mrb[0].mxu0 %v332
      %v428 = vpop.f32.mrb[0].mxu0
      %v429 = vadd.f32 %v297, %v428
      %v430 = vpop.f32.mrb[0].mxu0
      %431 = vmatprep.mubr.f32.mxu0 0.0
      %432 = vmatmul.mubr.f32.gmra.mrb[0].mxu0 %v335
      %v433 = vpop.f32.mrb[0].mxu0
      %v434 = vadd.f32 %v302, %v433
      %v435 = vpop.f32.mrb[0].mxu0
      %436 = vmatprep.mubr.f32.mxu0 0.0
      %437 = vmatmul.mubr.f32.gmra.mrb[0].mxu0 %v338
      %v438 = vpop.f32.mrb[0].mxu0
      %v439 = vadd.f32 %v307, %v438
      %v440 = vpop.f32.mrb[0].mxu0
      %441 = vmatprep.mubr.f32.mxu0 0.0
      %442 = vmatmul.mubr.f32.gmra.mrb[0].mxu0 %v341
      %v443 = vpop.f32.mrb[0].mxu0
      %v444 = vadd.f32 %v312, %v443
      %v445 = vpop.f32.mrb[0].mxu0
      %446 = vmatprep.mubr.f32.mxu0 0.0
      %447 = vmatmul.mubr.f32.gmra.mrb[0].mxu0 %v344
      %v448 = vpop.f32.mrb[0].mxu0
      %v449 = vadd.f32 %v317, %v448
      %v450 = vpop.f32.mrb[0].mxu0
      %451 = vmatprep.mubr.f32.mxu0 0.0
      %452 = vmatmul.mubr.f32.gmra.mrb[0].mxu0 %v347
      %v453 = vpop.f32.mrb[0].mxu0
      %v454 = vadd.f32 %v322, %v453
      %v455 = vpop.f32.mrb[0].mxu0
      %456 = vdwg.mxu0
      %v457 = vld [vmem:[%s165 + $0x1] sm:$0xff]
      %v458 = vld [vmem:[%s165 + $0x11] sm:$0xff]
      %v459 = vld [vmem:[%s165 + $0x21] sm:$0xff]
      %v460 = vld [vmem:[%s165 + $0x31] sm:$0xff]
      %v461 = vld [vmem:[%s165 + $0x41] sm:$0xff]
      %v462 = vld [vmem:[%s165 + $0x51] sm:$0xff]
      %v463 = vld [vmem:[%s165 + $0x61] sm:$0xff]
      %v464 = vld [vmem:[%s165 + $0x71] sm:$0xff]
      %s465 = scalar_lea.vmem %s1, 8
      %v466 = vld [vmem:[%s465] sm:$0xf]
      %v468 = vsel %vm191, %v457, 0
      %v471 = vsel %vm191, %v458, 0
      %v474 = vsel %vm191, %v459, 0
      %v477 = vsel %vm191, %v460, 0
      %v480 = vsel %vm191, %v461, 0
      %v483 = vsel %vm191, %v462, 0
      %v486 = vsel %vm191, %v463, 0
      %v489 = vsel %vm191, %v464, 0
      %v492 = vsel %vm216, %v466, 0
      %494 = vmatprep.subr.mxu0 0.0
      %495 = vmatpush1.msra.mxu0 %v492
      %496 = vmatprep.subr.mxu0 0.0
      %497 = vmatpush1.msra.mxu0 0.0
      %498 = vmatprep.subr.mxu0 0.0
      %499 = vmatpush1.msra.mxu0 0.0
      %500 = vmatprep.subr.mxu0 0.0
      %501 = vmatpush1.msra.mxu0 0.0
      %502 = vmatprep.subr.mxu0 0.0
      %503 = vmatpush1.msra.mxu0 0.0
      %504 = vmatprep.subr.mxu0 0.0
      %505 = vmatpush1.msra.mxu0 0.0
      %506 = vmatprep.subr.mxu0 0.0
      %507 = vmatpush1.msra.mxu0 0.0
      %508 = vmatprep.subr.mxu0 0.0
      %509 = vmatpush1.msra.mxu0 0.0
      %510 = vmatprep.subr.mxu0 0.0
      %511 = vmatpush1.msra.mxu0 0.0
      %512 = vmatprep.subr.mxu0 0.0
      %513 = vmatpush1.msra.mxu0 0.0
      %514 = vmatprep.subr.mxu0 0.0
      %515 = vmatpush1.msra.mxu0 0.0
      %516 = vmatprep.subr.mxu0 0.0
      %517 = vmatpush1.msra.mxu0 0.0
      %518 = vmatprep.subr.mxu0 0.0
      %519 = vmatpush1.msra.mxu0 0.0
      %520 = vmatprep.subr.mxu0 0.0
      %521 = vmatpush1.msra.mxu0 0.0
      %522 = vmatprep.subr.mxu0 0.0
      %523 = vmatpush1.msra.mxu0 0.0
      %524 = vmatprep.subr.mxu0 0.0
      %525 = vmatpush1.msra.mxu0 0.0
      %526 = vmatprep.subr.mxu0 0.0
      %527 = vmatpush1.msra.mxu0 0.0
      %528 = vmatprep.subr.mxu0 0.0
      %529 = vmatpush1.msra.mxu0 0.0
      %530 = vmatprep.subr.mxu0 0.0
      %531 = vmatpush1.msra.mxu0 0.0
      %532 = vmatprep.subr.mxu0 0.0
      %533 = vmatpush1.msra.mxu0 0.0
      %534 = vmatprep.subr.mxu0 0.0
      %535 = vmatpush1.msra.mxu0 0.0
      %536 = vmatprep.subr.mxu0 0.0
      %537 = vmatpush1.msra.mxu0 0.0
      %538 = vmatprep.subr.mxu0 0.0
      %539 = vmatpush1.msra.mxu0 0.0
      %540 = vmatprep.subr.mxu0 0.0
      %541 = vmatpush1.msra.mxu0 0.0
      %542 = vmatprep.subr.mxu0 0.0
      %543 = vmatpush1.msra.mxu0 0.0
      %544 = vmatprep.subr.mxu0 0.0
      %545 = vmatpush1.msra.mxu0 0.0
      %546 = vmatprep.subr.mxu0 0.0
      %547 = vmatpush1.msra.mxu0 0.0
      %548 = vmatprep.subr.mxu0 0.0
      %549 = vmatpush1.msra.mxu0 0.0
      %550 = vmatprep.subr.mxu0 0.0
      %551 = vmatpush1.msra.mxu0 0.0
      %552 = vmatprep.subr.mxu0 0.0
      %553 = vmatpush1.msra.mxu0 0.0
      %554 = vmatprep.subr.mxu0 0.0
      %555 = vmatpush1.msra.mxu0 0.0
      %556 = vmatprep.subr.mxu0 0.0
      %557 = vmatpush1.msra.mxu0 0.0
      %558 = vmatprep.mubr.f32.mxu0 0.0
      %559 = vmatmul.mubr.f32.gmra.mrb[0].mxu0 %v468
      %v560 = vpop.f32.mrb[0].mxu0
      %v561 = vadd.f32 0.0, %v560
      %v562 = vpop.f32.mrb[0].mxu0
      %563 = vmatprep.mubr.f32.mxu0 0.0
      %564 = vmatmul.mubr.f32.gmra.mrb[0].mxu0 %v471
      %v565 = vpop.f32.mrb[0].mxu0
      %v566 = vadd.f32 0.0, %v565
      %v567 = vpop.f32.mrb[0].mxu0
      %568 = vmatprep.mubr.f32.mxu0 0.0
      %569 = vmatmul.mubr.f32.gmra.mrb[0].mxu0 %v474
      %v570 = vpop.f32.mrb[0].mxu0
      %v571 = vadd.f32 0.0, %v570
      %v572 = vpop.f32.mrb[0].mxu0
      %573 = vmatprep.mubr.f32.mxu0 0.0
      %574 = vmatmul.mubr.f32.gmra.mrb[0].mxu0 %v477
      %v575 = vpop.f32.mrb[0].mxu0
      %v576 = vadd.f32 0.0, %v575
      %v577 = vpop.f32.mrb[0].mxu0
      %578 = vmatprep.mubr.f32.mxu0 0.0
      %579 = vmatmul.mubr.f32.gmra.mrb[0].mxu0 %v480
      %v580 = vpop.f32.mrb[0].mxu0
      %v581 = vadd.f32 0.0, %v580
      %v582 = vpop.f32.mrb[0].mxu0
      %583 = vmatprep.mubr.f32.mxu0 0.0
      %584 = vmatmul.mubr.f32.gmra.mrb[0].mxu0 %v483
      %v585 = vpop.f32.mrb[0].mxu0
      %v586 = vadd.f32 0.0, %v585
      %v587 = vpop.f32.mrb[0].mxu0
      %588 = vmatprep.mubr.f32.mxu0 0.0
      %589 = vmatmul.mubr.f32.gmra.mrb[0].mxu0 %v486
      %v590 = vpop.f32.mrb[0].mxu0
      %v591 = vadd.f32 0.0, %v590
      %v592 = vpop.f32.mrb[0].mxu0
      %593 = vmatprep.mubr.f32.mxu0 0.0
      %594 = vmatmul.mubr.f32.gmra.mrb[0].mxu0 %v489
      %v595 = vpop.f32.mrb[0].mxu0
      %v596 = vadd.f32 0.0, %v595
      %v597 = vpop.f32.mrb[0].mxu0
      %598 = vdwg.mxu0
      %v599 = vadd.f32 %v419, %v561
      %v600 = vadd.f32 %v424, %v566
      %v601 = vadd.f32 %v429, %v571
      %v602 = vadd.f32 %v434, %v576
      %v603 = vadd.f32 %v439, %v581
      %v604 = vadd.f32 %v444, %v586
      %v605 = vadd.f32 %v449, %v591
      %v606 = vadd.f32 %v454, %v596
      %s607 = scalar_lea.vmem %s165, 288
      %v608 = vld [vmem:[%s607] sm:$0xff]
      %v609 = vld [vmem:[%s607 + $0x10] sm:$0xff]
      %v610 = vld [vmem:[%s607 + $0x20] sm:$0xff]
      %v611 = vld [vmem:[%s607 + $0x30] sm:$0xff]
      %v612 = vld [vmem:[%s607 + $0x40] sm:$0xff]
      %v613 = vld [vmem:[%s607 + $0x50] sm:$0xff]
      %v614 = vld [vmem:[%s607 + $0x60] sm:$0xff]
      %v615 = vld [vmem:[%s607 + $0x70] sm:$0xff]
      %s616 = scalar_lea.vmem %s1, 12
      %v617 = vld [vmem:[%s616] sm:$0xf]
      %v619 = vsel %vm191, %v608, 0
      %v622 = vsel %vm191, %v609, 0
      %v625 = vsel %vm191, %v610, 0
      %v628 = vsel %vm191, %v611, 0
      %v631 = vsel %vm191, %v612, 0
      %v634 = vsel %vm191, %v613, 0
      %v637 = vsel %vm191, %v614, 0
      %v640 = vsel %vm191, %v615, 0
      %v643 = vsel %vm216, %v617, 0
      %645 = vmatprep.subr.mxu0 0.0
      %646 = vmatpush1.msra.mxu0 %v643
      %647 = vmatprep.subr.mxu0 0.0
      %648 = vmatpush1.msra.mxu0 0.0
      %649 = vmatprep.subr.mxu0 0.0
      %650 = vmatpush1.msra.mxu0 0.0
      %651 = vmatprep.subr.mxu0 0.0
      %652 = vmatpush1.msra.mxu0 0.0
      %653 = vmatprep.subr.mxu0 0.0
      %654 = vmatpush1.msra.mxu0 0.0
      %655 = vmatprep.subr.mxu0 0.0
      %656 = vmatpush1.msra.mxu0 0.0
      %657 = vmatprep.subr.mxu0 0.0
      %658 = vmatpush1.msra.mxu0 0.0
      %659 = vmatprep.subr.mxu0 0.0
      %660 = vmatpush1.msra.mxu0 0.0
      %661 = vmatprep.subr.mxu0 0.0
      %662 = vmatpush1.msra.mxu0 0.0
      %663 = vmatprep.subr.mxu0 0.0
      %664 = vmatpush1.msra.mxu0 0.0
      %665 = vmatprep.subr.mxu0 0.0
      %666 = vmatpush1.msra.mxu0 0.0
      %667 = vmatprep.subr.mxu0 0.0
      %668 = vmatpush1.msra.mxu0 0.0
      %669 = vmatprep.subr.mxu0 0.0
      %670 = vmatpush1.msra.mxu0 0.0
      %671 = vmatprep.subr.mxu0 0.0
      %672 = vmatpush1.msra.mxu0 0.0
      %673 = vmatprep.subr.mxu0 0.0
      %674 = vmatpush1.msra.mxu0 0.0
      %675 = vmatprep.subr.mxu0 0.0
      %676 = vmatpush1.msra.mxu0 0.0
      %677 = vmatprep.subr.mxu0 0.0
      %678 = vmatpush1.msra.mxu0 0.0
      %679 = vmatprep.subr.mxu0 0.0
      %680 = vmatpush1.msra.mxu0 0.0
      %681 = vmatprep.subr.mxu0 0.0
      %682 = vmatpush1.msra.mxu0 0.0
      %683 = vmatprep.subr.mxu0 0.0
      %684 = vmatpush1.msra.mxu0 0.0
      %685 = vmatprep.subr.mxu0 0.0
      %686 = vmatpush1.msra.mxu0 0.0
      %687 = vmatprep.subr.mxu0 0.0
      %688 = vmatpush1.msra.mxu0 0.0
      %689 = vmatprep.subr.mxu0 0.0
      %690 = vmatpush1.msra.mxu0 0.0
      %691 = vmatprep.subr.mxu0 0.0
      %692 = vmatpush1.msra.mxu0 0.0
      %693 = vmatprep.subr.mxu0 0.0
      %694 = vmatpush1.msra.mxu0 0.0
      %695 = vmatprep.subr.mxu0 0.0
      %696 = vmatpush1.msra.mxu0 0.0
      %697 = vmatprep.subr.mxu0 0.0
      %698 = vmatpush1.msra.mxu0 0.0
      %699 = vmatprep.subr.mxu0 0.0
      %700 = vmatpush1.msra.mxu0 0.0
      %701 = vmatprep.subr.mxu0 0.0
      %702 = vmatpush1.msra.mxu0 0.0
      %703 = vmatprep.subr.mxu0 0.0
      %704 = vmatpush1.msra.mxu0 0.0
      %705 = vmatprep.subr.mxu0 0.0
      %706 = vmatpush1.msra.mxu0 0.0
      %707 = vmatprep.subr.mxu0 0.0
      %708 = vmatpush1.msra.mxu0 0.0
      %709 = vmatprep.mubr.f32.mxu0 0.0
      %710 = vmatmul.mubr.f32.gmra.mrb[0].mxu0 %v619
      %v711 = vpop.f32.mrb[0].mxu0
      %v712 = vadd.f32 0.0, %v711
      %v713 = vpop.f32.mrb[0].mxu0
      %714 = vmatprep.mubr.f32.mxu0 0.0
      %715 = vmatmul.mubr.f32.gmra.mrb[0].mxu0 %v622
      %v716 = vpop.f32.mrb[0].mxu0
      %v717 = vadd.f32 0.0, %v716
      %v718 = vpop.f32.mrb[0].mxu0
      %719 = vmatprep.mubr.f32.mxu0 0.0
      %720 = vmatmul.mubr.f32.gmra.mrb[0].mxu0 %v625
      %v721 = vpop.f32.mrb[0].mxu0
      %v722 = vadd.f32 0.0, %v721
      %v723 = vpop.f32.mrb[0].mxu0
      %724 = vmatprep.mubr.f32.mxu0 0.0
      %725 = vmatmul.mubr.f32.gmra.mrb[0].mxu0 %v628
      %v726 = vpop.f32.mrb[0].mxu0
      %v727 = vadd.f32 0.0, %v726
      %v728 = vpop.f32.mrb[0].mxu0
      %729 = vmatprep.mubr.f32.mxu0 0.0
      %730 = vmatmul.mubr.f32.gmra.mrb[0].mxu0 %v631
      %v731 = vpop.f32.mrb[0].mxu0
      %v732 = vadd.f32 0.0, %v731
      %v733 = vpop.f32.mrb[0].mxu0
      %734 = vmatprep.mubr.f32.mxu0 0.0
      %735 = vmatmul.mubr.f32.gmra.mrb[0].mxu0 %v634
      %v736 = vpop.f32.mrb[0].mxu0
      %v737 = vadd.f32 0.0, %v736
      %v738 = vpop.f32.mrb[0].mxu0
      %739 = vmatprep.mubr.f32.mxu0 0.0
      %740 = vmatmul.mubr.f32.gmra.mrb[0].mxu0 %v637
      %v741 = vpop.f32.mrb[0].mxu0
      %v742 = vadd.f32 0.0, %v741
      %v743 = vpop.f32.mrb[0].mxu0
      %744 = vmatprep.mubr.f32.mxu0 0.0
      %745 = vmatmul.mubr.f32.gmra.mrb[0].mxu0 %v640
      %v746 = vpop.f32.mrb[0].mxu0
      %v747 = vadd.f32 0.0, %v746
      %v748 = vpop.f32.mrb[0].mxu0
      %749 = vdwg.mxu0
      %v750 = vadd.f32 %v599, %v712
      %v751 = vadd.f32 %v600, %v717
      %v752 = vadd.f32 %v601, %v722
      %v753 = vadd.f32 %v602, %v727
      %v754 = vadd.f32 %v603, %v732
      %v755 = vadd.f32 %v604, %v737
      %v756 = vadd.f32 %v605, %v742
      %v757 = vadd.f32 %v606, %v747
      %s758 = scalar_lea.vmem %s165, 432
      %v759 = vld [vmem:[%s758] sm:$0xff]
      %v760 = vld [vmem:[%s758 + $0x10] sm:$0xff]
      %v761 = vld [vmem:[%s758 + $0x20] sm:$0xff]
      %v762 = vld [vmem:[%s758 + $0x30] sm:$0xff]
      %v763 = vld [vmem:[%s758 + $0x40] sm:$0xff]
      %v764 = vld [vmem:[%s758 + $0x50] sm:$0xff]
      %v765 = vld [vmem:[%s758 + $0x60] sm:$0xff]
      %v766 = vld [vmem:[%s758 + $0x70] sm:$0xff]
      %s767 = scalar_lea.vmem %s1, 16
      %v768 = vld [vmem:[%s767] sm:$0xf]
      %v770 = vsel %vm191, %v759, 0
      %v773 = vsel %vm191, %v760, 0
      %v776 = vsel %vm191, %v761, 0
      %v779 = vsel %vm191, %v762, 0
      %v782 = vsel %vm191, %v763, 0
      %v785 = vsel %vm191, %v764, 0
      %v788 = vsel %vm191, %v765, 0
      %v791 = vsel %vm191, %v766, 0
      %v794 = vsel %vm216, %v768, 0
      %796 = vmatprep.subr.mxu0 0.0
      %797 = vmatpush1.msra.mxu0 %v794
      %798 = vmatprep.subr.mxu0 0.0
      %799 = vmatpush1.msra.mxu0 0.0
      %800 = vmatprep.subr.mxu0 0.0
      %801 = vmatpush1.msra.mxu0 0.0
      %802 = vmatprep.subr.mxu0 0.0
      %803 = vmatpush1.msra.mxu0 0.0
      %804 = vmatprep.subr.mxu0 0.0
      %805 = vmatpush1.msra.mxu0 0.0
      %806 = vmatprep.subr.mxu0 0.0
      %807 = vmatpush1.msra.mxu0 0.0
      %808 = vmatprep.subr.mxu0 0.0
      %809 = vmatpush1.msra.mxu0 0.0
      %810 = vmatprep.subr.mxu0 0.0
      %811 = vmatpush1.msra.mxu0 0.0
      %812 = vmatprep.subr.mxu0 0.0
      %813 = vmatpush1.msra.mxu0 0.0
      %814 = vmatprep.subr.mxu0 0.0
      %815 = vmatpush1.msra.mxu0 0.0
      %816 = vmatprep.subr.mxu0 0.0
      %817 = vmatpush1.msra.mxu0 0.0
      %818 = vmatprep.subr.mxu0 0.0
      %819 = vmatpush1.msra.mxu0 0.0
      %820 = vmatprep.subr.mxu0 0.0
      %821 = vmatpush1.msra.mxu0 0.0
      %822 = vmatprep.subr.mxu0 0.0
      %823 = vmatpush1.msra.mxu0 0.0
      %824 = vmatprep.subr.mxu0 0.0
      %825 = vmatpush1.msra.mxu0 0.0
      %826 = vmatprep.subr.mxu0 0.0
      %827 = vmatpush1.msra.mxu0 0.0
      %828 = vmatprep.subr.mxu0 0.0
      %829 = vmatpush1.msra.mxu0 0.0
      %830 = vmatprep.subr.mxu0 0.0
      %831 = vmatpush1.msra.mxu0 0.0
      %832 = vmatprep.subr.mxu0 0.0
      %833 = vmatpush1.msra.mxu0 0.0
      %834 = vmatprep.subr.mxu0 0.0
      %835 = vmatpush1.msra.mxu0 0.0
      %836 = vmatprep.subr.mxu0 0.0
      %837 = vmatpush1.msra.mxu0 0.0
      %838 = vmatprep.subr.mxu0 0.0
      %839 = vmatpush1.msra.mxu0 0.0
      %840 = vmatprep.subr.mxu0 0.0
      %841 = vmatpush1.msra.mxu0 0.0
      %842 = vmatprep.subr.mxu0 0.0
      %843 = vmatpush1.msra.mxu0 0.0
      %844 = vmatprep.subr.mxu0 0.0
      %845 = vmatpush1.msra.mxu0 0.0
      %846 = vmatprep.subr.mxu0 0.0
      %847 = vmatpush1.msra.mxu0 0.0
      %848 = vmatprep.subr.mxu0 0.0
      %849 = vmatpush1.msra.mxu0 0.0
      %850 = vmatprep.subr.mxu0 0.0
      %851 = vmatpush1.msra.mxu0 0.0
      %852 = vmatprep.subr.mxu0 0.0
      %853 = vmatpush1.msra.mxu0 0.0
      %854 = vmatprep.subr.mxu0 0.0
      %855 = vmatpush1.msra.mxu0 0.0
      %856 = vmatprep.subr.mxu0 0.0
      %857 = vmatpush1.msra.mxu0 0.0
      %858 = vmatprep.subr.mxu0 0.0
      %859 = vmatpush1.msra.mxu0 0.0
      %860 = vmatprep.mubr.f32.mxu0 0.0
      %861 = vmatmul.mubr.f32.gmra.mrb[0].mxu0 %v770
      %v862 = vpop.f32.mrb[0].mxu0
      %v863 = vadd.f32 0.0, %v862
      %v864 = vpop.f32.mrb[0].mxu0
      %865 = vmatprep.mubr.f32.mxu0 0.0
      %866 = vmatmul.mubr.f32.gmra.mrb[0].mxu0 %v773
      %v867 = vpop.f32.mrb[0].mxu0
      %v868 = vadd.f32 0.0, %v867
      %v869 = vpop.f32.mrb[0].mxu0
      %870 = vmatprep.mubr.f32.mxu0 0.0
      %871 = vmatmul.mubr.f32.gmra.mrb[0].mxu0 %v776
      %v872 = vpop.f32.mrb[0].mxu0
      %v873 = vadd.f32 0.0, %v872
      %v874 = vpop.f32.mrb[0].mxu0
      %875 = vmatprep.mubr.f32.mxu0 0.0
      %876 = vmatmul.mubr.f32.gmra.mrb[0].mxu0 %v779
      %v877 = vpop.f32.mrb[0].mxu0
      %v878 = vadd.f32 0.0, %v877
      %v879 = vpop.f32.mrb[0].mxu0
      %880 = vmatprep.mubr.f32.mxu0 0.0
      %881 = vmatmul.mubr.f32.gmra.mrb[0].mxu0 %v782
      %v882 = vpop.f32.mrb[0].mxu0
      %v883 = vadd.f32 0.0, %v882
      %v884 = vpop.f32.mrb[0].mxu0
      %885 = vmatprep.mubr.f32.mxu0 0.0
      %886 = vmatmul.mubr.f32.gmra.mrb[0].mxu0 %v785
      %v887 = vpop.f32.mrb[0].mxu0
      %v888 = vadd.f32 0.0, %v887
      %v889 = vpop.f32.mrb[0].mxu0
      %890 = vmatprep.mubr.f32.mxu0 0.0
      %891 = vmatmul.mubr.f32.gmra.mrb[0].mxu0 %v788
      %v892 = vpop.f32.mrb[0].mxu0
      %v893 = vadd.f32 0.0, %v892
      %v894 = vpop.f32.mrb[0].mxu0
      %895 = vmatprep.mubr.f32.mxu0 0.0
      %896 = vmatmul.mubr.f32.gmra.mrb[0].mxu0 %v791
      %v897 = vpop.f32.mrb[0].mxu0
      %v898 = vadd.f32 0.0, %v897
      %v899 = vpop.f32.mrb[0].mxu0
      %900 = vdwg.mxu0
      %v901 = vadd.f32 %v750, %v863
      %v902 = vadd.f32 %v751, %v868
      %v903 = vadd.f32 %v752, %v873
      %v904 = vadd.f32 %v753, %v878
      %v905 = vadd.f32 %v754, %v883
      %v906 = vadd.f32 %v755, %v888
      %v907 = vadd.f32 %v756, %v893
      %v908 = vadd.f32 %v757, %v898
      %v909 = vld [vmem:[%s607 + $0x1] sm:$0xff]
      %v910 = vld [vmem:[%s607 + $0x11] sm:$0xff]
      %v911 = vld [vmem:[%s607 + $0x21] sm:$0xff]
      %v912 = vld [vmem:[%s607 + $0x31] sm:$0xff]
      %v913 = vld [vmem:[%s607 + $0x41] sm:$0xff]
      %v914 = vld [vmem:[%s607 + $0x51] sm:$0xff]
      %v915 = vld [vmem:[%s607 + $0x61] sm:$0xff]
      %v916 = vld [vmem:[%s607 + $0x71] sm:$0xff]
      %s917 = scalar_lea.vmem %s1, 20
      %v918 = vld [vmem:[%s917] sm:$0xf]
      %v920 = vsel %vm191, %v909, 0
      %v923 = vsel %vm191, %v910, 0
      %v926 = vsel %vm191, %v911, 0
      %v929 = vsel %vm191, %v912, 0
      %v932 = vsel %vm191, %v913, 0
      %v935 = vsel %vm191, %v914, 0
      %v938 = vsel %vm191, %v915, 0
      %v941 = vsel %vm191, %v916, 0
      %v944 = vsel %vm216, %v918, 0
      %946 = vmatprep.subr.mxu0 0.0
      %947 = vmatpush1.msra.mxu0 %v944
      %948 = vmatprep.subr.mxu0 0.0
      %949 = vmatpush1.msra.mxu0 0.0
      %950 = vmatprep.subr.mxu0 0.0
      %951 = vmatpush1.msra.mxu0 0.0
      %952 = vmatprep.subr.mxu0 0.0
      %953 = vmatpush1.msra.mxu0 0.0
      %954 = vmatprep.subr.mxu0 0.0
      %955 = vmatpush1.msra.mxu0 0.0
      %956 = vmatprep.subr.mxu0 0.0
      %957 = vmatpush1.msra.mxu0 0.0
      %958 = vmatprep.subr.mxu0 0.0
      %959 = vmatpush1.msra.mxu0 0.0
      %960 = vmatprep.subr.mxu0 0.0
      %961 = vmatpush1.msra.mxu0 0.0
      %962 = vmatprep.subr.mxu0 0.0
      %963 = vmatpush1.msra.mxu0 0.0
      %964 = vmatprep.subr.mxu0 0.0
      %965 = vmatpush1.msra.mxu0 0.0
      %966 = vmatprep.subr.mxu0 0.0
      %967 = vmatpush1.msra.mxu0 0.0
      %968 = vmatprep.subr.mxu0 0.0
      %969 = vmatpush1.msra.mxu0 0.0
      %970 = vmatprep.subr.mxu0 0.0
      %971 = vmatpush1.msra.mxu0 0.0
      %972 = vmatprep.subr.mxu0 0.0
      %973 = vmatpush1.msra.mxu0 0.0
      %974 = vmatprep.subr.mxu0 0.0
      %975 = vmatpush1.msra.mxu0 0.0
      %976 = vmatprep.subr.mxu0 0.0
      %977 = vmatpush1.msra.mxu0 0.0
      %978 = vmatprep.subr.mxu0 0.0
      %979 = vmatpush1.msra.mxu0 0.0
      %980 = vmatprep.subr.mxu0 0.0
      %981 = vmatpush1.msra.mxu0 0.0
      %982 = vmatprep.subr.mxu0 0.0
      %983 = vmatpush1.msra.mxu0 0.0
      %984 = vmatprep.subr.mxu0 0.0
      %985 = vmatpush1.msra.mxu0 0.0
      %986 = vmatprep.subr.mxu0 0.0
      %987 = vmatpush1.msra.mxu0 0.0
      %988 = vmatprep.subr.mxu0 0.0
      %989 = vmatpush1.msra.mxu0 0.0
      %990 = vmatprep.subr.mxu0 0.0
      %991 = vmatpush1.msra.mxu0 0.0
      %992 = vmatprep.subr.mxu0 0.0
      %993 = vmatpush1.msra.mxu0 0.0
      %994 = vmatprep.subr.mxu0 0.0
      %995 = vmatpush1.msra.mxu0 0.0
      %996 = vmatprep.subr.mxu0 0.0
      %997 = vmatpush1.msra.mxu0 0.0
      %998 = vmatprep.subr.mxu0 0.0
      %999 = vmatpush1.msra.mxu0 0.0
      %1000 = vmatprep.subr.mxu0 0.0
      %1001 = vmatpush1.msra.mxu0 0.0
      %1002 = vmatprep.subr.mxu0 0.0
      %1003 = vmatpush1.msra.mxu0 0.0
      %1004 = vmatprep.subr.mxu0 0.0
      %1005 = vmatpush1.msra.mxu0 0.0
      %1006 = vmatprep.subr.mxu0 0.0
      %1007 = vmatpush1.msra.mxu0 0.0
      %1008 = vmatprep.subr.mxu0 0.0
      %1009 = vmatpush1.msra.mxu0 0.0
      %1010 = vmatprep.mubr.f32.mxu0 0.0
      %1011 = vmatmul.mubr.f32.gmra.mrb[0].mxu0 %v920
      %v1012 = vpop.f32.mrb[0].mxu0
      %v1013 = vadd.f32 0.0, %v1012
      %v1014 = vpop.f32.mrb[0].mxu0
      %1015 = vmatprep.mubr.f32.mxu0 0.0
      %1016 = vmatmul.mubr.f32.gmra.mrb[0].mxu0 %v923
      %v1017 = vpop.f32.mrb[0].mxu0
      %v1018 = vadd.f32 0.0, %v1017
      %v1019 = vpop.f32.mrb[0].mxu0
      %1020 = vmatprep.mubr.f32.mxu0 0.0
      %1021 = vmatmul.mubr.f32.gmra.mrb[0].mxu0 %v926
      %v1022 = vpop.f32.mrb[0].mxu0
      %v1023 = vadd.f32 0.0, %v1022
      %v1024 = vpop.f32.mrb[0].mxu0
      %1025 = vmatprep.mubr.f32.mxu0 0.0
      %1026 = vmatmul.mubr.f32.gmra.mrb[0].mxu0 %v929
      %v1027 = vpop.f32.mrb[0].mxu0
      %v1028 = vadd.f32 0.0, %v1027
      %v1029 = vpop.f32.mrb[0].mxu0
      %1030 = vmatprep.mubr.f32.mxu0 0.0
      %1031 = vmatmul.mubr.f32.gmra.mrb[0].mxu0 %v932
      %v1032 = vpop.f32.mrb[0].mxu0
      %v1033 = vadd.f32 0.0, %v1032
      %v1034 = vpop.f32.mrb[0].mxu0
      %1035 = vmatprep.mubr.f32.mxu0 0.0
      %1036 = vmatmul.mubr.f32.gmra.mrb[0].mxu0 %v935
      %v1037 = vpop.f32.mrb[0].mxu0
      %v1038 = vadd.f32 0.0, %v1037
      %v1039 = vpop.f32.mrb[0].mxu0
      %1040 = vmatprep.mubr.f32.mxu0 0.0
      %1041 = vmatmul.mubr.f32.gmra.mrb[0].mxu0 %v938
      %v1042 = vpop.f32.mrb[0].mxu0
      %v1043 = vadd.f32 0.0, %v1042
      %v1044 = vpop.f32.mrb[0].mxu0
      %1045 = vmatprep.mubr.f32.mxu0 0.0
      %1046 = vmatmul.mubr.f32.gmra.mrb[0].mxu0 %v941
      %v1047 = vpop.f32.mrb[0].mxu0
      %v1048 = vadd.f32 0.0, %v1047
      %v1049 = vpop.f32.mrb[0].mxu0
      %1050 = vdwg.mxu0
      %v1051 = vadd.f32 %v901, %v1013
      %v1052 = vadd.f32 %v902, %v1018
      %v1053 = vadd.f32 %v903, %v1023
      %v1054 = vadd.f32 %v904, %v1028
      %v1055 = vadd.f32 %v905, %v1033
      %v1056 = vadd.f32 %v906, %v1038
      %v1057 = vadd.f32 %v907, %v1043
      %v1058 = vadd.f32 %v908, %v1048
      %s1059 = scalar_lea.vmem %s165, 16
      %v1060 = vld [vmem:[%s1059] sm:$0xff]
      %v1061 = vld [vmem:[%s1059 + $0x10] sm:$0xff]
      %v1062 = vld [vmem:[%s1059 + $0x20] sm:$0xff]
      %v1063 = vld [vmem:[%s1059 + $0x30] sm:$0xff]
      %v1064 = vld [vmem:[%s1059 + $0x40] sm:$0xff]
      %v1065 = vld [vmem:[%s1059 + $0x50] sm:$0xff]
      %v1066 = vld [vmem:[%s1059 + $0x60] sm:$0xff]
      %v1067 = vld [vmem:[%s1059 + $0x70] sm:$0xff]
      %s1068 = scalar_lea.vmem %s1, 24
      %v1069 = vld [vmem:[%s1068] sm:$0xf]
      %v1071 = vsel %vm191, %v1060, 0
      %v1074 = vsel %vm191, %v1061, 0
      %v1077 = vsel %vm191, %v1062, 0
      %v1080 = vsel %vm191, %v1063, 0
      %v1083 = vsel %vm191, %v1064, 0
      %v1086 = vsel %vm191, %v1065, 0
      %v1089 = vsel %vm191, %v1066, 0
      %v1092 = vsel %vm191, %v1067, 0
      %v1095 = vsel %vm216, %v1069, 0
      %1097 = vmatprep.subr.mxu0 0.0
      %1098 = vmatpush1.msra.mxu0 %v1095
      %1099 = vmatprep.subr.mxu0 0.0
      %1100 = vmatpush1.msra.mxu0 0.0
      %1101 = vmatprep.subr.mxu0 0.0
      %1102 = vmatpush1.msra.mxu0 0.0
      %1103 = vmatprep.subr.mxu0 0.0
      %1104 = vmatpush1.msra.mxu0 0.0
      %1105 = vmatprep.subr.mxu0 0.0
      %1106 = vmatpush1.msra.mxu0 0.0
      %1107 = vmatprep.subr.mxu0 0.0
      %1108 = vmatpush1.msra.mxu0 0.0
      %1109 = vmatprep.subr.mxu0 0.0
      %1110 = vmatpush1.msra.mxu0 0.0
      %1111 = vmatprep.subr.mxu0 0.0
      %1112 = vmatpush1.msra.mxu0 0.0
      %1113 = vmatprep.subr.mxu0 0.0
      %1114 = vmatpush1.msra.mxu0 0.0
      %1115 = vmatprep.subr.mxu0 0.0
      %1116 = vmatpush1.msra.mxu0 0.0
      %1117 = vmatprep.subr.mxu0 0.0
      %1118 = vmatpush1.msra.mxu0 0.0
      %1119 = vmatprep.subr.mxu0 0.0
      %1120 = vmatpush1.msra.mxu0 0.0
      %1121 = vmatprep.subr.mxu0 0.0
      %1122 = vmatpush1.msra.mxu0 0.0
      %1123 = vmatprep.subr.mxu0 0.0
      %1124 = vmatpush1.msra.mxu0 0.0
      %1125 = vmatprep.subr.mxu0 0.0
      %1126 = vmatpush1.msra.mxu0 0.0
      %1127 = vmatprep.subr.mxu0 0.0
      %1128 = vmatpush1.msra.mxu0 0.0
      %1129 = vmatprep.subr.mxu0 0.0
      %1130 = vmatpush1.msra.mxu0 0.0
      %1131 = vmatprep.subr.mxu0 0.0
      %1132 = vmatpush1.msra.mxu0 0.0
      %1133 = vmatprep.subr.mxu0 0.0
      %1134 = vmatpush1.msra.mxu0 0.0
      %1135 = vmatprep.subr.mxu0 0.0
      %1136 = vmatpush1.msra.mxu0 0.0
      %1137 = vmatprep.subr.mxu0 0.0
      %1138 = vmatpush1.msra.mxu0 0.0
      %1139 = vmatprep.subr.mxu0 0.0
      %1140 = vmatpush1.msra.mxu0 0.0
      %1141 = vmatprep.subr.mxu0 0.0
      %1142 = vmatpush1.msra.mxu0 0.0
      %1143 = vmatprep.subr.mxu0 0.0
      %1144 = vmatpush1.msra.mxu0 0.0
      %1145 = vmatprep.subr.mxu0 0.0
      %1146 = vmatpush1.msra.mxu0 0.0
      %1147 = vmatprep.subr.mxu0 0.0
      %1148 = vmatpush1.msra.mxu0 0.0
      %1149 = vmatprep.subr.mxu0 0.0
      %1150 = vmatpush1.msra.mxu0 0.0
      %1151 = vmatprep.subr.mxu0 0.0
      %1152 = vmatpush1.msra.mxu0 0.0
      %1153 = vmatprep.subr.mxu0 0.0
      %1154 = vmatpush1.msra.mxu0 0.0
      %1155 = vmatprep.subr.mxu0 0.0
      %1156 = vmatpush1.msra.mxu0 0.0
      %1157 = vmatprep.subr.mxu0 0.0
      %1158 = vmatpush1.msra.mxu0 0.0
      %1159 = vmatprep.subr.mxu0 0.0
      %1160 = vmatpush1.msra.mxu0 0.0
      %1161 = vmatprep.mubr.f32.mxu0 0.0
      %1162 = vmatmul.mubr.f32.gmra.mrb[0].mxu0 %v1071
      %v1163 = vpop.f32.mrb[0].mxu0
      %v1164 = vadd.f32 0.0, %v1163
      %v1165 = vpop.f32.mrb[0].mxu0
      %1166 = vmatprep.mubr.f32.mxu0 0.0
      %1167 = vmatmul.mubr.f32.gmra.mrb[0].mxu0 %v1074
      %v1168 = vpop.f32.mrb[0].mxu0
      %v1169 = vadd.f32 0.0, %v1168
      %v1170 = vpop.f32.mrb[0].mxu0
      %1171 = vmatprep.mubr.f32.mxu0 0.0
      %1172 = vmatmul.mubr.f32.gmra.mrb[0].mxu0 %v1077
      %v1173 = vpop.f32.mrb[0].mxu0
      %v1174 = vadd.f32 0.0, %v1173
      %v1175 = vpop.f32.mrb[0].mxu0
      %1176 = vmatprep.mubr.f32.mxu0 0.0
      %1177 = vmatmul.mubr.f32.gmra.mrb[0].mxu0 %v1080
      %v1178 = vpop.f32.mrb[0].mxu0
      %v1179 = vadd.f32 0.0, %v1178
      %v1180 = vpop.f32.mrb[0].mxu0
      %1181 = vmatprep.mubr.f32.mxu0 0.0
      %1182 = vmatmul.mubr.f32.gmra.mrb[0].mxu0 %v1083
      %v1183 = vpop.f32.mrb[0].mxu0
      %v1184 = vadd.f32 0.0, %v1183
      %v1185 = vpop.f32.mrb[0].mxu0
      %1186 = vmatprep.mubr.f32.mxu0 0.0
      %1187 = vmatmul.mubr.f32.gmra.mrb[0].mxu0 %v1086
      %v1188 = vpop.f32.mrb[0].mxu0
      %v1189 = vadd.f32 0.0, %v1188
      %v1190 = vpop.f32.mrb[0].mxu0
      %1191 = vmatprep.mubr.f32.mxu0 0.0
      %1192 = vmatmul.mubr.f32.gmra.mrb[0].mxu0 %v1089
      %v1193 = vpop.f32.mrb[0].mxu0
      %v1194 = vadd.f32 0.0, %v1193
      %v1195 = vpop.f32.mrb[0].mxu0
      %1196 = vmatprep.mubr.f32.mxu0 0.0
      %1197 = vmatmul.mubr.f32.gmra.mrb[0].mxu0 %v1092
      %v1198 = vpop.f32.mrb[0].mxu0
      %v1199 = vadd.f32 0.0, %v1198
      %v1200 = vpop.f32.mrb[0].mxu0
      %1201 = vdwg.mxu0
      %v1202 = vadd.f32 %v1051, %v1164
      %v1203 = vadd.f32 %v1052, %v1169
      %v1204 = vadd.f32 %v1053, %v1174
      %v1205 = vadd.f32 %v1054, %v1179
      %v1206 = vadd.f32 %v1055, %v1184
      %v1207 = vadd.f32 %v1056, %v1189
      %v1208 = vadd.f32 %v1057, %v1194
      %v1209 = vadd.f32 %v1058, %v1199
      %s1210 = scalar_lea.vmem %s165, 160
      %v1211 = vld [vmem:[%s1210] sm:$0xff]
      %v1212 = vld [vmem:[%s1210 + $0x10] sm:$0xff]
      %v1213 = vld [vmem:[%s1210 + $0x20] sm:$0xff]
      %v1214 = vld [vmem:[%s1210 + $0x30] sm:$0xff]
      %v1215 = vld [vmem:[%s1210 + $0x40] sm:$0xff]
      %v1216 = vld [vmem:[%s1210 + $0x50] sm:$0xff]
      %v1217 = vld [vmem:[%s1210 + $0x60] sm:$0xff]
      %v1218 = vld [vmem:[%s1210 + $0x70] sm:$0xff]
      %s1219 = scalar_lea.vmem %s1, 28
      %v1220 = vld [vmem:[%s1219] sm:$0xf]
      %v1222 = vsel %vm191, %v1211, 0
      %v1225 = vsel %vm191, %v1212, 0
      %v1228 = vsel %vm191, %v1213, 0
      %v1231 = vsel %vm191, %v1214, 0
      %v1234 = vsel %vm191, %v1215, 0
      %v1237 = vsel %vm191, %v1216, 0
      %v1240 = vsel %vm191, %v1217, 0
      %v1243 = vsel %vm191, %v1218, 0
      %v1246 = vsel %vm216, %v1220, 0
      %1248 = vmatprep.subr.mxu0 0.0
      %1249 = vmatpush1.msra.mxu0 %v1246
      %1250 = vmatprep.subr.mxu0 0.0
      %1251 = vmatpush1.msra.mxu0 0.0
      %1252 = vmatprep.subr.mxu0 0.0
      %1253 = vmatpush1.msra.mxu0 0.0
      %1254 = vmatprep.subr.mxu0 0.0
      %1255 = vmatpush1.msra.mxu0 0.0
      %1256 = vmatprep.subr.mxu0 0.0
      %1257 = vmatpush1.msra.mxu0 0.0
      %1258 = vmatprep.subr.mxu0 0.0
      %1259 = vmatpush1.msra.mxu0 0.0
      %1260 = vmatprep.subr.mxu0 0.0
      %1261 = vmatpush1.msra.mxu0 0.0
      %1262 = vmatprep.subr.mxu0 0.0
      %1263 = vmatpush1.msra.mxu0 0.0
      %1264 = vmatprep.subr.mxu0 0.0
      %1265 = vmatpush1.msra.mxu0 0.0
      %1266 = vmatprep.subr.mxu0 0.0
      %1267 = vmatpush1.msra.mxu0 0.0
      %1268 = vmatprep.subr.mxu0 0.0
      %1269 = vmatpush1.msra.mxu0 0.0
      %1270 = vmatprep.subr.mxu0 0.0
      %1271 = vmatpush1.msra.mxu0 0.0
      %1272 = vmatprep.subr.mxu0 0.0
      %1273 = vmatpush1.msra.mxu0 0.0
      %1274 = vmatprep.subr.mxu0 0.0
      %1275 = vmatpush1.msra.mxu0 0.0
      %1276 = vmatprep.subr.mxu0 0.0
      %1277 = vmatpush1.msra.mxu0 0.0
      %1278 = vmatprep.subr.mxu0 0.0
      %1279 = vmatpush1.msra.mxu0 0.0
      %1280 = vmatprep.subr.mxu0 0.0
      %1281 = vmatpush1.msra.mxu0 0.0
      %1282 = vmatprep.subr.mxu0 0.0
      %1283 = vmatpush1.msra.mxu0 0.0
      %1284 = vmatprep.subr.mxu0 0.0
      %1285 = vmatpush1.msra.mxu0 0.0
      %1286 = vmatprep.subr.mxu0 0.0
      %1287 = vmatpush1.msra.mxu0 0.0
      %1288 = vmatprep.subr.mxu0 0.0
      %1289 = vmatpush1.msra.mxu0 0.0
      %1290 = vmatprep.subr.mxu0 0.0
      %1291 = vmatpush1.msra.mxu0 0.0
      %1292 = vmatprep.subr.mxu0 0.0
      %1293 = vmatpush1.msra.mxu0 0.0
      %1294 = vmatprep.subr.mxu0 0.0
      %1295 = vmatpush1.msra.mxu0 0.0
      %1296 = vmatprep.subr.mxu0 0.0
      %1297 = vmatpush1.msra.mxu0 0.0
      %1298 = vmatprep.subr.mxu0 0.0
      %1299 = vmatpush1.msra.mxu0 0.0
      %1300 = vmatprep.subr.mxu0 0.0
      %1301 = vmatpush1.msra.mxu0 0.0
      %1302 = vmatprep.subr.mxu0 0.0
      %1303 = vmatpush1.msra.mxu0 0.0
      %1304 = vmatprep.subr.mxu0 0.0
      %1305 = vmatpush1.msra.mxu0 0.0
      %1306 = vmatprep.subr.mxu0 0.0
      %1307 = vmatpush1.msra.mxu0 0.0
      %1308 = vmatprep.subr.mxu0 0.0
      %1309 = vmatpush1.msra.mxu0 0.0
      %1310 = vmatprep.subr.mxu0 0.0
      %1311 = vmatpush1.msra.mxu0 0.0
      %1312 = vmatprep.mubr.f32.mxu0 0.0
      %1313 = vmatmul.mubr.f32.gmra.mrb[0].mxu0 %v1222
      %v1314 = vpop.f32.mrb[0].mxu0
      %v1315 = vadd.f32 0.0, %v1314
      %v1316 = vpop.f32.mrb[0].mxu0
      %1317 = vmatprep.mubr.f32.mxu0 0.0
      %1318 = vmatmul.mubr.f32.gmra.mrb[0].mxu0 %v1225
      %v1319 = vpop.f32.mrb[0].mxu0
      %v1320 = vadd.f32 0.0, %v1319
      %v1321 = vpop.f32.mrb[0].mxu0
      %1322 = vmatprep.mubr.f32.mxu0 0.0
      %1323 = vmatmul.mubr.f32.gmra.mrb[0].mxu0 %v1228
      %v1324 = vpop.f32.mrb[0].mxu0
      %v1325 = vadd.f32 0.0, %v1324
      %v1326 = vpop.f32.mrb[0].mxu0
      %1327 = vmatprep.mubr.f32.mxu0 0.0
      %1328 = vmatmul.mubr.f32.gmra.mrb[0].mxu0 %v1231
      %v1329 = vpop.f32.mrb[0].mxu0
      %v1330 = vadd.f32 0.0, %v1329
      %v1331 = vpop.f32.mrb[0].mxu0
      %1332 = vmatprep.mubr.f32.mxu0 0.0
      %1333 = vmatmul.mubr.f32.gmra.mrb[0].mxu0 %v1234
      %v1334 = vpop.f32.mrb[0].mxu0
      %v1335 = vadd.f32 0.0, %v1334
      %v1336 = vpop.f32.mrb[0].mxu0
      %1337 = vmatprep.mubr.f32.mxu0 0.0
      %1338 = vmatmul.mubr.f32.gmra.mrb[0].mxu0 %v1237
      %v1339 = vpop.f32.mrb[0].mxu0
      %v1340 = vadd.f32 0.0, %v1339
      %v1341 = vpop.f32.mrb[0].mxu0
      %1342 = vmatprep.mubr.f32.mxu0 0.0
      %1343 = vmatmul.mubr.f32.gmra.mrb[0].mxu0 %v1240
      %v1344 = vpop.f32.mrb[0].mxu0
      %v1345 = vadd.f32 0.0, %v1344
      %v1346 = vpop.f32.mrb[0].mxu0
      %1347 = vmatprep.mubr.f32.mxu0 0.0
      %1348 = vmatmul.mubr.f32.gmra.mrb[0].mxu0 %v1243
      %v1349 = vpop.f32.mrb[0].mxu0
      %v1350 = vadd.f32 0.0, %v1349
      %v1351 = vpop.f32.mrb[0].mxu0
      %1352 = vdwg.mxu0
      %v1353 = vadd.f32 %v1202, %v1315
      %v1354 = vadd.f32 %v1203, %v1320
      %v1355 = vadd.f32 %v1204, %v1325
      %v1356 = vadd.f32 %v1205, %v1330
      %v1357 = vadd.f32 %v1206, %v1335
      %v1358 = vadd.f32 %v1207, %v1340
      %v1359 = vadd.f32 %v1208, %v1345
      %v1360 = vadd.f32 %v1209, %v1350
      %v1361 = vld [vmem:[%s1059 + $0x1] sm:$0xff]
      %v1362 = vld [vmem:[%s1059 + $0x11] sm:$0xff]
      %v1363 = vld [vmem:[%s1059 + $0x21] sm:$0xff]
      %v1364 = vld [vmem:[%s1059 + $0x31] sm:$0xff]
      %v1365 = vld [vmem:[%s1059 + $0x41] sm:$0xff]
      %v1366 = vld [vmem:[%s1059 + $0x51] sm:$0xff]
      %v1367 = vld [vmem:[%s1059 + $0x61] sm:$0xff]
      %v1368 = vld [vmem:[%s1059 + $0x71] sm:$0xff]
      %s1369 = scalar_lea.vmem %s1, 32
      %v1370 = vld [vmem:[%s1369] sm:$0xf]
      %v1372 = vsel %vm191, %v1361, 0
      %v1375 = vsel %vm191, %v1362, 0
      %v1378 = vsel %vm191, %v1363, 0
      %v1381 = vsel %vm191, %v1364, 0
      %v1384 = vsel %vm191, %v1365, 0
      %v1387 = vsel %vm191, %v1366, 0
      %v1390 = vsel %vm191, %v1367, 0
      %v1393 = vsel %vm191, %v1368, 0
      %v1396 = vsel %vm216, %v1370, 0
      %1398 = vmatprep.subr.mxu0 0.0
      %1399 = vmatpush1.msra.mxu0 %v1396
      %1400 = vmatprep.subr.mxu0 0.0
      %1401 = vmatpush1.msra.mxu0 0.0
      %1402 = vmatprep.subr.mxu0 0.0
      %1403 = vmatpush1.msra.mxu0 0.0
      %1404 = vmatprep.subr.mxu0 0.0
      %1405 = vmatpush1.msra.mxu0 0.0
      %1406 = vmatprep.subr.mxu0 0.0
      %1407 = vmatpush1.msra.mxu0 0.0
      %1408 = vmatprep.subr.mxu0 0.0
      %1409 = vmatpush1.msra.mxu0 0.0
      %1410 = vmatprep.subr.mxu0 0.0
      %1411 = vmatpush1.msra.mxu0 0.0
      %1412 = vmatprep.subr.mxu0 0.0
      %1413 = vmatpush1.msra.mxu0 0.0
      %1414 = vmatprep.subr.mxu0 0.0
      %1415 = vmatpush1.msra.mxu0 0.0
      %1416 = vmatprep.subr.mxu0 0.0
      %1417 = vmatpush1.msra.mxu0 0.0
      %1418 = vmatprep.subr.mxu0 0.0
      %1419 = vmatpush1.msra.mxu0 0.0
      %1420 = vmatprep.subr.mxu0 0.0
      %1421 = vmatpush1.msra.mxu0 0.0
      %1422 = vmatprep.subr.mxu0 0.0
      %1423 = vmatpush1.msra.mxu0 0.0
      %1424 = vmatprep.subr.mxu0 0.0
      %1425 = vmatpush1.msra.mxu0 0.0
      %1426 = vmatprep.subr.mxu0 0.0
      %1427 = vmatpush1.msra.mxu0 0.0
      %1428 = vmatprep.subr.mxu0 0.0
      %1429 = vmatpush1.msra.mxu0 0.0
      %1430 = vmatprep.subr.mxu0 0.0
      %1431 = vmatpush1.msra.mxu0 0.0
      %1432 = vmatprep.subr.mxu0 0.0
      %1433 = vmatpush1.msra.mxu0 0.0
      %1434 = vmatprep.subr.mxu0 0.0
      %1435 = vmatpush1.msra.mxu0 0.0
      %1436 = vmatprep.subr.mxu0 0.0
      %1437 = vmatpush1.msra.mxu0 0.0
      %1438 = vmatprep.subr.mxu0 0.0
      %1439 = vmatpush1.msra.mxu0 0.0
      %1440 = vmatprep.subr.mxu0 0.0
      %1441 = vmatpush1.msra.mxu0 0.0
      %1442 = vmatprep.subr.mxu0 0.0
      %1443 = vmatpush1.msra.mxu0 0.0
      %1444 = vmatprep.subr.mxu0 0.0
      %1445 = vmatpush1.msra.mxu0 0.0
      %1446 = vmatprep.subr.mxu0 0.0
      %1447 = vmatpush1.msra.mxu0 0.0
      %1448 = vmatprep.subr.mxu0 0.0
      %1449 = vmatpush1.msra.mxu0 0.0
      %1450 = vmatprep.subr.mxu0 0.0
      %1451 = vmatpush1.msra.mxu0 0.0
      %1452 = vmatprep.subr.mxu0 0.0
      %1453 = vmatpush1.msra.mxu0 0.0
      %1454 = vmatprep.subr.mxu0 0.0
      %1455 = vmatpush1.msra.mxu0 0.0
      %1456 = vmatprep.subr.mxu0 0.0
      %1457 = vmatpush1.msra.mxu0 0.0
      %1458 = vmatprep.subr.mxu0 0.0
      %1459 = vmatpush1.msra.mxu0 0.0
      %1460 = vmatprep.subr.mxu0 0.0
      %1461 = vmatpush1.msra.mxu0 0.0
      %1462 = vmatprep.mubr.f32.mxu0 0.0
      %1463 = vmatmul.mubr.f32.gmra.mrb[0].mxu0 %v1372
      %v1464 = vpop.f32.mrb[0].mxu0
      %v1465 = vadd.f32 0.0, %v1464
      %v1466 = vpop.f32.mrb[0].mxu0
      %1467 = vmatprep.mubr.f32.mxu0 0.0
      %1468 = vmatmul.mubr.f32.gmra.mrb[0].mxu0 %v1375
      %v1469 = vpop.f32.mrb[0].mxu0
      %v1470 = vadd.f32 0.0, %v1469
      %v1471 = vpop.f32.mrb[0].mxu0
      %1472 = vmatprep.mubr.f32.mxu0 0.0
      %1473 = vmatmul.mubr.f32.gmra.mrb[0].mxu0 %v1378
      %v1474 = vpop.f32.mrb[0].mxu0
      %v1475 = vadd.f32 0.0, %v1474
      %v1476 = vpop.f32.mrb[0].mxu0
      %1477 = vmatprep.mubr.f32.mxu0 0.0
      %1478 = vmatmul.mubr.f32.gmra.mrb[0].mxu0 %v1381
      %v1479 = vpop.f32.mrb[0].mxu0
      %v1480 = vadd.f32 0.0, %v1479
      %v1481 = vpop.f32.mrb[0].mxu0
      %1482 = vmatprep.mubr.f32.mxu0 0.0
      %1483 = vmatmul.mubr.f32.gmra.mrb[0].mxu0 %v1384
      %v1484 = vpop.f32.mrb[0].mxu0
      %v1485 = vadd.f32 0.0, %v1484
      %v1486 = vpop.f32.mrb[0].mxu0
      %1487 = vmatprep.mubr.f32.mxu0 0.0
      %1488 = vmatmul.mubr.f32.gmra.mrb[0].mxu0 %v1387
      %v1489 = vpop.f32.mrb[0].mxu0
      %v1490 = vadd.f32 0.0, %v1489
      %v1491 = vpop.f32.mrb[0].mxu0
      %1492 = vmatprep.mubr.f32.mxu0 0.0
      %1493 = vmatmul.mubr.f32.gmra.mrb[0].mxu0 %v1390
      %v1494 = vpop.f32.mrb[0].mxu0
      %v1495 = vadd.f32 0.0, %v1494
      %v1496 = vpop.f32.mrb[0].mxu0
      %1497 = vmatprep.mubr.f32.mxu0 0.0
      %1498 = vmatmul.mubr.f32.gmra.mrb[0].mxu0 %v1393
      %v1499 = vpop.f32.mrb[0].mxu0
      %v1500 = vadd.f32 0.0, %v1499
      %v1501 = vpop.f32.mrb[0].mxu0
      %1502 = vdwg.mxu0
      %v1503 = vadd.f32 %v1353, %v1465
      %v1504 = vadd.f32 %v1354, %v1470
      %v1505 = vadd.f32 %v1355, %v1475
      %v1506 = vadd.f32 %v1356, %v1480
      %v1507 = vadd.f32 %v1357, %v1485
      %v1508 = vadd.f32 %v1358, %v1490
      %v1509 = vadd.f32 %v1359, %v1495
      %v1510 = vadd.f32 %v1360, %v1500
      %v1511 = vld [vmem:[%s2] sm:$0x1]
      %v1513 = vlaneseq
      %v1514 = vshrl.u32 %v1513, 7
      %v1515 = vsub.s32 0, %v1514
      %v1516 = vrot.slane %v1511, %v1515
      %v1518 = vadd.f32 %v1503, %v1516
      %v1519 = vadd.f32 %v1504, %v1516
      %v1520 = vadd.f32 %v1505, %v1516
      %v1521 = vadd.f32 %v1506, %v1516
      %v1522 = vadd.f32 %v1507, %v1516
      %v1523 = vadd.f32 %v1508, %v1516
      %v1524 = vadd.f32 %v1509, %v1516
      %v1525 = vadd.f32 %v1510, %v1516
      %v1526 = vmax.f32 %v1518, 0.0
      %v1527 = vmax.f32 %v1519, 0.0
      %v1528 = vmax.f32 %v1520, 0.0
      %v1529 = vmax.f32 %v1521, 0.0
      %v1530 = vmax.f32 %v1522, 0.0
      %v1531 = vmax.f32 %v1523, 0.0
      %v1532 = vmax.f32 %v1524, 0.0
      %v1533 = vmax.f32 %v1525, 0.0
      %vm1534 = vcmask 64512
      %1535 = vst.msk [vmem:[%s170] sm:$0xff] %vm1534, %v1526
      %1536 = vst.msk [vmem:[%s170 + $0x8] sm:$0xff] %vm1534, %v1527
      %1537 = vst.msk [vmem:[%s170 + $0x10] sm:$0xff] %vm1534, %v1528
      %1538 = vst.msk [vmem:[%s170 + $0x18] sm:$0xff] %vm1534, %v1529
      %1539 = vst.msk [vmem:[%s170 + $0x20] sm:$0xff] %vm1534, %v1530
      %1540 = vst.msk [vmem:[%s170 + $0x28] sm:$0xff] %vm1534, %v1531
      %1541 = vst.msk [vmem:[%s170 + $0x30] sm:$0xff] %vm1534, %v1532
      %1542 = vst.msk [vmem:[%s170 + $0x38] sm:$0xff] %vm1534, %v1533
      %p1543 = scmp.lt.s32.totalorder %s14, 1
      %s1544 = scalar_select %p1543, %s14, 1
      %s1545 = smul.addr %s1544, 8
      %s1546 = smul.addr %s1545, 8
      %s1547 = scalar_lea.vmem %s3, %s1546
      // Predicated region
      $region33: #{basic_block_forward.2} parent=31 // pred_check
        %p1548 = pneg %p100
      $region34: #{basic_block_forward.2} parent=31 // pred_check_branch
        %1550 = sbr.rel (%p1548) target = $region36
      $region35: #{basic_block_forward.2} parent=31 // pred_region
        _
      $region36: #{basic_block_forward.2} parent=31 // pred_fallthru
        _
    $region32: #{basic_block_forward.2} parent=5 // pred_fallthru
      _
    %p1551 = scmp.le.s32.totalorder 2, %s9
    // Predicated region
    $region37: #{basic_block_forward.2} parent=5 // pred_check
      %p1552 = pneg %p1551
    $region38: #{basic_block_forward.2} parent=5 // pred_check_branch
      %1554 = sbr.rel (%p1552) target = $region40
    $region39: #{basic_block_forward.2} parent=5 // pred_region
      %s1555 = ssub.s32 %s9, 2
      // Predicated region
      $region41: #{basic_block_forward.2} parent=39 // pred_check
        %p1556 = pneg %p106
      $region42: #{basic_block_forward.2} parent=39 // pred_check_branch
        %1558 = sbr.rel (%p1556) target = $region44
      $region43: #{basic_block_forward.2} parent=39 // pred_region
        %p1559 = scmp.lt.s32.totalorder %s15, 1
        %s1560 = scalar_select %p1559, %s15, 1
        %s1561 = smul.addr %s1560, 8
        %s1562 = smul.addr %s1561, 8
        %s1563 = scalar_lea.vmem %s3, %s1562
      $region44: #{basic_block_forward.2} parent=39 // pred_fallthru
        _
    $region40: #{basic_block_forward.2} parent=5 // pred_fallthru
      _
  $region6: #{basic_block_forward.2} parent=0 // loop_footer
    %s13 = sadd.s32 1, %s9
  $region7: #{basic_block_forward.2} parent=0 // loop_footer_branch
    %8 = sbr.rel target = $region3
  $region8: #{basic_block_forward.2} parent=0 // loop_exit
    _

// kernel: basic_block_forward.3
$region0: #{basic_block_forward.3}
  #allocation0 [shape = 'u32[]', space=smem, size = 0x4, offset = 0x4, fixed_abs, tag = 'smem constant byte address 0x4 - core index']
  #allocation1 [shape = 'u32[144,128]{1,0:T(1,128)}', space=vmem, size = 0x12000, scoped, tag = 'internal scratch']
  %s0 = inlined_call_operand.vmem [shape: f32[2,10,10,8], index: 0, kind: input, shape index: {}]
  %s1 = inlined_call_operand.vmem [shape: f32[9,8,8], index: 1, kind: input, shape index: {}]
  %s2 = inlined_call_operand.vmem [shape: f32[1,8], index: 2, kind: input, shape index: {}]
  %s3 = inlined_call_operand.vmem [shape: f32[2,8,8,4], index: 3, kind: input, shape index: {}]
  %s4 = inlined_call_operand.vmem [shape: f32[4,8], index: 4, kind: input, shape index: {}]
  %s5 = inlined_call_operand.vmem [shape: f32[2,8,8,8], index: 5, kind: output, shape index: {}]
  %s6 = sld [smem:[#allocation0]]
  $region53: #{basic_block_forward.3} parent=0
    _
  %s8 = ssub.s32 1, %s6
  %s9 = scalar_select 0, %s8, %s6
  loop: start=0, step=1, limit=4
  $region2: #{basic_block_forward.3} parent=0 // loop_pre_header
    _
  $region3: #{basic_block_forward.3} parent=0 // loop_header
    %s11 = sphi 0, %s15
    %p12 = scmp.ge.s32.totalorder %s11, 4
    %s21 = sphi 0, %s23
    %s24 = sphi 0, %s21
    %s25 = sphi 0, %s24
    %s41 = sphi 0, %s25
    %s45 = sphi 0, %s45
    %s47 = sphi 0, %s45
    %s48 = sphi 0, %s47
    %s62 = sphi 0, %s48
    %s66 = sphi 0, %s66
    %s68 = sphi 0, %s66
    %s69 = sphi 0, %s68
    %s83 = sphi 0, %s69
    %s89 = sphi 0, %s91
    %s92 = sphi 0, %s89
    %s93 = sphi 0, %s92
    %s109 = sphi 0, %s93
    %s113 = sphi 0, %s113
    %s115 = sphi 0, %s113
    %s116 = sphi 0, %s115
    %s130 = sphi 0, %s116
    %s136 = sphi 0, %s138
    %s139 = sphi 0, %s136
    %s140 = sphi 0, %s139
    %s156 = sphi 0, %s140
  $region4: #{basic_block_forward.3} parent=0 // loop_header_branch
    %14 = sbr.rel (%p12) target = $region8
  $region5: #{basic_block_forward.3} parent=0 // loop_body
    %s16 = ssub.s32 %s11, 1
    %s17 = ssub.s32 %s11, 2
    %s18 = sadd.s32 %s11, 1
    %s19 = ssub.s32 %s11, %s18
    %p20 = scmp.eq.s32.totalorder %s19, 0
    %s22 = sadd.s32 %s21, 1
    %s23 = scalar_select %p20, %s21, %s22
    %p26 = pneg %p20
    %p27 = scmp.eq.s32.totalorder %s11, 1
    %p28 = por %p26, %p27
    %p29 = scmp.ne.s32.totalorder %s21, %s24
    %p30 = scmp.eq.s32.totalorder %s11, 0
    %p31 = por %p29, %p30
    %p32 = scmp.ne.s32.totalorder %s21, %s24
    %p33 = scmp.eq.s32.totalorder %s16, 1
    %p34 = por %p32, %p33
    %p35 = scmp.ne.s32.totalorder %s24, %s25
    %p36 = scmp.eq.s32.totalorder %s16, 0
    %p37 = por %p35, %p36
    %p38 = scmp.ne.s32.totalorder %s24, %s25
    %p39 = scmp.eq.s32.totalorder %s17, 1
    %p40 = por %p38, %p39
    %p42 = scmp.ne.s32.totalorder %s25, %s41
    %p43 = scmp.eq.s32.totalorder %s17, 0
    %p44 = por %p42, %p43
    %s46 = sadd.s32 %s45, 1
    %p49 = scmp.eq.s32.totalorder %s11, 1
    %p50 = scmp.ne.s32.totalorder %s45, %s47
    %p51 = scmp.eq.s32.totalorder %s11, 0
    %p52 = por %p50, %p51
    %p53 = scmp.ne.s32.totalorder %s45, %s47
    %p54 = scmp.eq.s32.totalorder %s16, 1
    %p55 = por %p53, %p54
    %p56 = scmp.ne.s32.totalorder %s47, %s48
    %p57 = scmp.eq.s32.totalorder %s16, 0
    %p58 = por %p56, %p57
    %p59 = scmp.ne.s32.totalorder %s47, %s48
    %p60 = scmp.eq.s32.totalorder %s17, 1
    %p61 = por %p59, %p60
    %p63 = scmp.ne.s32.totalorder %s48, %s62
    %p64 = scmp.eq.s32.totalorder %s17, 0
    %p65 = por %p63, %p64
    %s67 = sadd.s32 %s66, 1
    %p70 = scmp.eq.s32.totalorder %s11, 1
    %p71 = scmp.ne.s32.totalorder %s66, %s68
    %p72 = scmp.eq.s32.totalorder %s11, 0
    %p73 = por %p71, %p72
    %p74 = scmp.ne.s32.totalorder %s66, %s68
    %p75 = scmp.eq.s32.totalorder %s16, 1
    %p76 = por %p74, %p75
    %p77 = scmp.ne.s32.totalorder %s68, %s69
    %p78 = scmp.eq.s32.totalorder %s16, 0
    %p79 = por %p77, %p78
    %p80 = scmp.ne.s32.totalorder %s68, %s69
    %p81 = scmp.eq.s32.totalorder %s17, 1
    %p82 = por %p80, %p81
    %p84 = scmp.ne.s32.totalorder %s69, %s83
    %p85 = scmp.eq.s32.totalorder %s17, 0
    %p86 = por %p84, %p85
    %s87 = ssub.s32 %s11, %s18
    %p88 = scmp.eq.s32.totalorder %s87, 0
    %s90 = sadd.s32 %s89, 1
    %s91 = scalar_select %p88, %s89, %s90
    %p94 = pneg %p88
    %p95 = scmp.eq.s32.totalorder %s11, 1
    %p96 = por %p94, %p95
    %p97 = scmp.ne.s32.totalorder %s89, %s92
    %p98 = scmp.eq.s32.totalorder %s11, 0
    %p99 = por %p97, %p98
    %p100 = scmp.ne.s32.totalorder %s89, %s92
    %p101 = scmp.eq.s32.totalorder %s16, 1
    %p102 = por %p100, %p101
    %p103 = scmp.ne.s32.totalorder %s92, %s93
    %p104 = scmp.eq.s32.totalorder %s16, 0
    %p105 = por %p103, %p104
    %p106 = scmp.ne.s32.totalorder %s92, %s93
    %p107 = scmp.eq.s32.totalorder %s17, 1
    %p108 = por %p106, %p107
    %p110 = scmp.ne.s32.totalorder %s93, %s109
    %p111 = scmp.eq.s32.totalorder %s17, 0
    %p112 = por %p110, %p111
    %s114 = sadd.s32 %s113, 1
    %p117 = scmp.eq.s32.totalorder %s11, 1
    %p118 = scmp.ne.s32.totalorder %s113, %s115
    %p119 = scmp.eq.s32.totalorder %s11, 0
    %p120 = por %p118, %p119
    %p121 = scmp.ne.s32.totalorder %s113, %s115
    %p122 = scmp.eq.s32.totalorder %s16, 1
    %p123 = por %p121, %p122
    %p124 = scmp.ne.s32.totalorder %s115, %s116
    %p125 = scmp.eq.s32.totalorder %s16, 0
    %p126 = por %p124, %p125
    %p127 = scmp.ne.s32.totalorder %s115, %s116
    %p128 = scmp.eq.s32.totalorder %s17, 1
    %p129 = por %p127, %p128
    %p131 = scmp.ne.s32.totalorder %s116, %s130
    %p132 = scmp.eq.s32.totalorder %s17, 0
    %p133 = por %p131, %p132
    %s134 = ssub.s32 %s11, %s18
    %p135 = scmp.eq.s32.totalorder %s134, 0
    %s137 = sadd.s32 %s136, 1
    %s138 = scalar_select %p135, %s136, %s137
    %p141 = pneg %p135
    %p142 = scmp.eq.s32.totalorder %s11, 1
    %p143 = por %p141, %p142
    %p144 = scmp.ne.s32.totalorder %s136, %s139
    %p145 = scmp.eq.s32.totalorder %s11, 0
    %p146 = por %p144, %p145
    %p147 = scmp.ne.s32.totalorder %s136, %s139
    %p148 = scmp.eq.s32.totalorder %s16, 1
    %p149 = por %p147, %p148
    %p150 = scmp.ne.s32.totalorder %s139, %s140
    %p151 = scmp.eq.s32.totalorder %s16, 0
    %p152 = por %p150, %p151
    %p153 = scmp.ne.s32.totalorder %s139, %s140
    %p154 = scmp.eq.s32.totalorder %s17, 1
    %p155 = por %p153, %p154
    %p157 = scmp.ne.s32.totalorder %s140, %s156
    %p158 = scmp.eq.s32.totalorder %s17, 0
    %p159 = por %p157, %p158
    %p160 = scmp.le.s32.totalorder 1, %s11
    %p161 = scmp.lt.s32.totalorder %s11, 3
    %p162 = pnand %p160, %p161
    %p163 = pneg %p162
    // Predicated region
    $region9: #{basic_block_forward.3} parent=5 // pred_check
      _
    $region10: #{basic_block_forward.3} parent=5 // pred_check_branch
      %165 = sbr.rel (%p162) target = $region12
    $region11: #{basic_block_forward.3} parent=5 // pred_region
      %s166 = ssub.s32 %s11, 1
      // Predicated region
      $region13: #{basic_block_forward.3} parent=11 // pred_check
        %p167 = pneg %p58
      $region14: #{basic_block_forward.3} parent=11 // pred_check_branch
        %169 = sbr.rel (%p167) target = $region16
      $region15: #{basic_block_forward.3} parent=11 // pred_region
        _
      $region16: #{basic_block_forward.3} parent=11 // pred_fallthru
        _
      // Predicated region
      $region17: #{basic_block_forward.3} parent=11 // pred_check
        %p170 = pneg %p79
      $region18: #{basic_block_forward.3} parent=11 // pred_check_branch
        %172 = sbr.rel (%p170) target = $region20
      $region19: #{basic_block_forward.3} parent=11 // pred_region
        _
      $region20: #{basic_block_forward.3} parent=11 // pred_fallthru
        _
      // Predicated region
      $region21: #{basic_block_forward.3} parent=11 // pred_check
        %p173 = pneg %p126
      $region22: #{basic_block_forward.3} parent=11 // pred_check_branch
        %175 = sbr.rel (%p173) target = $region24
      $region23: #{basic_block_forward.3} parent=11 // pred_region
        _
      $region24: #{basic_block_forward.3} parent=11 // pred_fallthru
        _
    $region12: #{basic_block_forward.3} parent=5 // pred_fallthru
      _
    %p176 = scmp.lt.s32.totalorder %s11, 2
    // Predicated region
    $region25: #{basic_block_forward.3} parent=5 // pred_check
      %p177 = pneg %p176
    $region26: #{basic_block_forward.3} parent=5 // pred_check_branch
      %179 = sbr.rel (%p177) target = $region28
    $region27: #{basic_block_forward.3} parent=5 // pred_region
      // Predicated region
      $region29: #{basic_block_forward.3} parent=27 // pred_check
        %p180 = pneg %p31
      $region30: #{basic_block_forward.3} parent=27 // pred_check_branch
        %182 = sbr.rel (%p180) target = $region32
      $region31: #{basic_block_forward.3} parent=27 // pred_region
        %p183 = scmp.lt.s32.totalorder %s11, 1
        %s184 = scalar_select %p183, %s11, 1
        %s185 = smul.addr %s184, 20
        %s186 = smul.addr %s185, 8
        %s187 = scalar_lea.vmem %s0, %s186
      $region32: #{basic_block_forward.3} parent=27 // pred_fallthru
        _
      // Predicated region
      $region33: #{basic_block_forward.3} parent=27 // pred_check
        %p188 = pneg %p99
      $region34: #{basic_block_forward.3} parent=27 // pred_check_branch
        %190 = sbr.rel (%p188) target = $region36
      $region35: #{basic_block_forward.3} parent=27 // pred_region
        %p191 = scmp.lt.s32.totalorder %s11, 1
        %s192 = scalar_select %p191, %s11, 1
        %s193 = smul.addr %s192, 8
        %s194 = smul.addr %s193, 8
        %s195 = scalar_lea.vmem %s3, %s194
      $region36: #{basic_block_forward.3} parent=27 // pred_fallthru
        _
    $region28: #{basic_block_forward.3} parent=5 // pred_fallthru
      _
    %p196 = scmp.le.s32.totalorder 1, %s11
    %p197 = scmp.lt.s32.totalorder %s11, 3
    %p198 = pnand %p196, %p197
    %p199 = pneg %p198
    // Predicated region
    $region37: #{basic_block_forward.3} parent=5 // pred_check
      _
    $region38: #{basic_block_forward.3} parent=5 // pred_check_branch
      %201 = sbr.rel (%p198) target = $region40
    $region39: #{basic_block_forward.3} parent=5 // pred_region
      %s202 = ssub.s32 %s11, 1
      %p203 = scmp.lt.s32.totalorder %s16, 1
      %s204 = scalar_select %p203, %s16, 1
      %s205 = smul.addr %s204, 20
      %s206 = smul.addr %s205, 8
      %s207 = scalar_lea.vmem %s0, %s206
      %p208 = pneg %p37
      %p209 = pneg %p34
      %p210 = pneg %p58
      %p211 = pneg %p55
      %p212 = pneg %p79
      %p213 = pneg %p76
      %p214 = scmp.lt.s32.totalorder %s16, 1
      %s215 = scalar_select %p214, %s16, 1
      %s216 = smul.addr %s215, 8
      %s217 = smul.addr %s216, 8
      %s218 = scalar_lea.vmem %s3, %s217
      %p219 = pneg %p105
      %p220 = pneg %p102
      %p221 = pneg %p126
      %p222 = pneg %p123
      %p223 = pneg %p152
      %p224 = pneg %p149
      %p225 = scmp.lt.s32.totalorder %s16, 1
      %s226 = scalar_select %p225, %s16, 1
      %s227 = smul.addr %s226, 8
      %s228 = smul.addr %s227, 8
      %s229 = scalar_lea.vmem %s5, %s228
      %p230 = scmp.lt.s32.totalorder %s16, 1
      %s231 = scalar_select %p230, %s16, 1
      %s232 = smul.addr %s231, 20
      %s233 = smul.addr %s232, 8
      %s234 = scalar_lea.vmem %s0, %s233
      %p235 = scmp.lt.s32.totalorder %s16, 1
      %s236 = scalar_select %p235, %s16, 1
      %s237 = smul.addr %s236, 8
      %s238 = smul.addr %s237, 8
      %s239 = scalar_lea.vmem %s3, %s238
      %p240 = scmp.lt.s32.totalorder %s16, 1
      %s241 = scalar_select %p240, %s16, 1
      %s242 = smul.addr %s241, 8
      %s243 = smul.addr %s242, 8
      %s244 = scalar_lea.vmem %s5, %s243
      %v245 = vld [vmem:[%s234] sm:$0xff]
      %v246 = vld [vmem:[%s234 + $0x10] sm:$0xff]
      %v247 = vld [vmem:[%s234 + $0x20] sm:$0xff]
      %v248 = vld [vmem:[%s234 + $0x30] sm:$0xff]
      %v249 = vld [vmem:[%s234 + $0x40] sm:$0xff]
      %v250 = vld [vmem:[%s234 + $0x50] sm:$0xff]
      %v251 = vld [vmem:[%s234 + $0x60] sm:$0xff]
      %v252 = vld [vmem:[%s234 + $0x70] sm:$0xff]
      %v253 = vld [vmem:[%s1] sm:$0xff]
      %v254 = vld [vmem:[%s234 + $0x1] sm:$0xff]
      %v255 = vld [vmem:[%s234 + $0x11] sm:$0xff]
      %v256 = vld [vmem:[%s234 + $0x21] sm:$0xff]
      %v257 = vld [vmem:[%s234 + $0x31] sm:$0xff]
      %v258 = vld [vmem:[%s234 + $0x41] sm:$0xff]
      %v259 = vld [vmem:[%s234 + $0x51] sm:$0xff]
      %v260 = vld [vmem:[%s234 + $0x61] sm:$0xff]
      %v261 = vld [vmem:[%s234 + $0x71] sm:$0xff]
      %s262 = scalar_lea.vmem %s1, 8
      %v263 = vld [vmem:[%s262] sm:$0xff]
      %vm264 = vcmask 64512
      %v266 = vsel %vm264, %v254, 0
      %v269 = vsel %vm264, %v255, 0
      %v272 = vsel %vm264, %v256, 0
      %v275 = vsel %vm264, %v257, 0
      %v278 = vsel %vm264, %v258, 0
      %v281 = vsel %vm264, %v259, 0
      %v284 = vsel %vm264, %v260, 0
      %v287 = vsel %vm264, %v261, 0
      %289 = vmatprep.subr.mxu0 0.0
      %290 = vmatpush1.msra.mxu0 %v263
      %291 = vmatprep.subr.mxu0 0.0
      %292 = vmatpush1.msra.mxu0 0.0
      %293 = vmatprep.subr.mxu0 0.0
      %294 = vmatpush1.msra.mxu0 0.0
      %295 = vmatprep.subr.mxu0 0.0
      %296 = vmatpush1.msra.mxu0 0.0
      %297 = vmatprep.subr.mxu0 0.0
      %298 = vmatpush1.msra.mxu0 0.0
      %299 = vmatprep.subr.mxu0 0.0
      %300 = vmatpush1.msra.mxu0 0.0
      %301 = vmatprep.subr.mxu0 0.0
      %302 = vmatpush1.msra.mxu0 0.0
      %303 = vmatprep.subr.mxu0 0.0
      %304 = vmatpush1.msra.mxu0 0.0
      %305 = vmatprep.subr.mxu0 0.0
      %306 = vmatpush1.msra.mxu0 0.0
      %307 = vmatprep.subr.mxu0 0.0
      %308 = vmatpush1.msra.mxu0 0.0
      %309 = vmatprep.subr.mxu0 0.0
      %310 = vmatpush1.msra.mxu0 0.0
      %311 = vmatprep.subr.mxu0 0.0
      %312 = vmatpush1.msra.mxu0 0.0
      %313 = vmatprep.subr.mxu0 0.0
      %314 = vmatpush1.msra.mxu0 0.0
      %315 = vmatprep.subr.mxu0 0.0
      %316 = vmatpush1.msra.mxu0 0.0
      %317 = vmatprep.subr.mxu0 0.0
      %318 = vmatpush1.msra.mxu0 0.0
      %319 = vmatprep.subr.mxu0 0.0
      %320 = vmatpush1.msra.mxu0 0.0
      %321 = vmatprep.subr.mxu0 0.0
      %322 = vmatpush1.msra.mxu0 0.0
      %323 = vmatprep.subr.mxu0 0.0
      %324 = vmatpush1.msra.mxu0 0.0
      %325 = vmatprep.subr.mxu0 0.0
      %326 = vmatpush1.msra.mxu0 0.0
      %327 = vmatprep.subr.mxu0 0.0
      %328 = vmatpush1.msra.mxu0 0.0
      %329 = vmatprep.subr.mxu0 0.0
      %330 = vmatpush1.msra.mxu0 0.0
      %331 = vmatprep.subr.mxu0 0.0
      %332 = vmatpush1.msra.mxu0 0.0
      %333 = vmatprep.subr.mxu0 0.0
      %334 = vmatpush1.msra.mxu0 0.0
      %335 = vmatprep.subr.mxu0 0.0
      %336 = vmatpush1.msra.mxu0 0.0
      %337 = vmatprep.subr.mxu0 0.0
      %338 = vmatpush1.msra.mxu0 0.0
      %339 = vmatprep.subr.mxu0 0.0
      %340 = vmatpush1.msra.mxu0 0.0
      %341 = vmatprep.subr.mxu0 0.0
      %342 = vmatpush1.msra.mxu0 0.0
      %343 = vmatprep.subr.mxu0 0.0
      %344 = vmatpush1.msra.mxu0 0.0
      %345 = vmatprep.subr.mxu0 0.0
      %346 = vmatpush1.msra.mxu0 0.0
      %347 = vmatprep.subr.mxu0 0.0
      %348 = vmatpush1.msra.mxu0 0.0
      %349 = vmatprep.subr.mxu0 0.0
      %350 = vmatpush1.msra.mxu0 0.0
      %351 = vmatprep.subr.mxu0 0.0
      %352 = vmatpush1.msra.mxu0 0.0
      %353 = vmatprep.mubr.f32.mxu0 0.0
      %354 = vmatmul.mubr.f32.gmra.mrb[0].mxu0 %v266
      %v355 = vpop.f32.mrb[0].mxu0
      %v356 = vadd.f32 0.0, %v355
      %v357 = vpop.f32.mrb[0].mxu0
      %358 = vmatprep.mubr.f32.mxu0 0.0
      %359 = vmatmul.mubr.f32.gmra.mrb[0].mxu0 %v269
      %v360 = vpop.f32.mrb[0].mxu0
      %v361 = vadd.f32 0.0, %v360
      %v362 = vpop.f32.mrb[0].mxu0
      %363 = vmatprep.mubr.f32.mxu0 0.0
      %364 = vmatmul.mubr.f32.gmra.mrb[0].mxu0 %v272
      %v365 = vpop.f32.mrb[0].mxu0
      %v366 = vadd.f32 0.0, %v365
      %v367 = vpop.f32.mrb[0].mxu0
      %368 = vmatprep.mubr.f32.mxu0 0.0
      %369 = vmatmul.mubr.f32.gmra.mrb[0].mxu0 %v275
      %v370 = vpop.f32.mrb[0].mxu0
      %v371 = vadd.f32 0.0, %v370
      %v372 = vpop.f32.mrb[0].mxu0
      %373 = vmatprep.mubr.f32.mxu0 0.0
      %374 = vmatmul.mubr.f32.gmra.mrb[0].mxu0 %v278
      %v375 = vpop.f32.mrb[0].mxu0
      %v376 = vadd.f32 0.0, %v375
      %v377 = vpop.f32.mrb[0].mxu0
      %378 = vmatprep.mubr.f32.mxu0 0.0
      %379 = vmatmul.mubr.f32.gmra.mrb[0].mxu0 %v281
      %v380 = vpop.f32.mrb[0].mxu0
      %v381 = vadd.f32 0.0, %v380
      %v382 = vpop.f32.mrb[0].mxu0
      %383 = vmatprep.mubr.f32.mxu0 0.0
      %384 = vmatmul.mubr.f32.gmra.mrb[0].mxu0 %v284
      %v385 = vpop.f32.mrb[0].mxu0
      %v386 = vadd.f32 0.0, %v385
      %v387 = vpop.f32.mrb[0].mxu0
      %388 = vmatprep.mubr.f32.mxu0 0.0
      %389 = vmatmul.mubr.f32.gmra.mrb[0].mxu0 %v287
      %v390 = vpop.f32.mrb[0].mxu0
      %v391 = vadd.f32 0.0, %v390
      %v392 = vpop.f32.mrb[0].mxu0
      %393 = vdwg.mxu0
      %v395 = vsel %vm264, %v245, 0
      %v398 = vsel %vm264, %v246, 0
      %v401 = vsel %vm264, %v247, 0
      %v404 = vsel %vm264, %v248, 0
      %v407 = vsel %vm264, %v249, 0
      %v410 = vsel %vm264, %v250, 0
      %v413 = vsel %vm264, %v251, 0
      %v416 = vsel %vm264, %v252, 0
      %418 = vmatprep.subr.mxu0 0.0
      %419 = vmatpush1.msra.mxu0 %v253
      %420 = vmatprep.subr.mxu0 0.0
      %421 = vmatpush1.msra.mxu0 0.0
      %422 = vmatprep.subr.mxu0 0.0
      %423 = vmatpush1.msra.mxu0 0.0
      %424 = vmatprep.subr.mxu0 0.0
      %425 = vmatpush1.msra.mxu0 0.0
      %426 = vmatprep.subr.mxu0 0.0
      %427 = vmatpush1.msra.mxu0 0.0
      %428 = vmatprep.subr.mxu0 0.0
      %429 = vmatpush1.msra.mxu0 0.0
      %430 = vmatprep.subr.mxu0 0.0
      %431 = vmatpush1.msra.mxu0 0.0
      %432 = vmatprep.subr.mxu0 0.0
      %433 = vmatpush1.msra.mxu0 0.0
      %434 = vmatprep.subr.mxu0 0.0
      %435 = vmatpush1.msra.mxu0 0.0
      %436 = vmatprep.subr.mxu0 0.0
      %437 = vmatpush1.msra.mxu0 0.0
      %438 = vmatprep.subr.mxu0 0.0
      %439 = vmatpush1.msra.mxu0 0.0
      %440 = vmatprep.subr.mxu0 0.0
      %441 = vmatpush1.msra.mxu0 0.0
      %442 = vmatprep.subr.mxu0 0.0
      %443 = vmatpush1.msra.mxu0 0.0
      %444 = vmatprep.subr.mxu0 0.0
      %445 = vmatpush1.msra.mxu0 0.0
      %446 = vmatprep.subr.mxu0 0.0
      %447 = vmatpush1.msra.mxu0 0.0
      %448 = vmatprep.subr.mxu0 0.0
      %449 = vmatpush1.msra.mxu0 0.0
      %450 = vmatprep.subr.mxu0 0.0
      %451 = vmatpush1.msra.mxu0 0.0
      %452 = vmatprep.subr.mxu0 0.0
      %453 = vmatpush1.msra.mxu0 0.0
      %454 = vmatprep.subr.mxu0 0.0
      %455 = vmatpush1.msra.mxu0 0.0
      %456 = vmatprep.subr.mxu0 0.0
      %457 = vmatpush1.msra.mxu0 0.0
      %458 = vmatprep.subr.mxu0 0.0
      %459 = vmatpush1.msra.mxu0 0.0
      %460 = vmatprep.subr.mxu0 0.0
      %461 = vmatpush1.msra.mxu0 0.0
      %462 = vmatprep.subr.mxu0 0.0
      %463 = vmatpush1.msra.mxu0 0.0
      %464 = vmatprep.subr.mxu0 0.0
      %465 = vmatpush1.msra.mxu0 0.0
      %466 = vmatprep.subr.mxu0 0.0
      %467 = vmatpush1.msra.mxu0 0.0
      %468 = vmatprep.subr.mxu0 0.0
      %469 = vmatpush1.msra.mxu0 0.0
      %470 = vmatprep.subr.mxu0 0.0
      %471 = vmatpush1.msra.mxu0 0.0
      %472 = vmatprep.subr.mxu0 0.0
      %473 = vmatpush1.msra.mxu0 0.0
      %474 = vmatprep.subr.mxu0 0.0
      %475 = vmatpush1.msra.mxu0 0.0
      %476 = vmatprep.subr.mxu0 0.0
      %477 = vmatpush1.msra.mxu0 0.0
      %478 = vmatprep.subr.mxu0 0.0
      %479 = vmatpush1.msra.mxu0 0.0
      %480 = vmatprep.subr.mxu0 0.0
      %481 = vmatpush1.msra.mxu0 0.0
      %482 = vmatprep.mubr.f32.mxu0 0.0
      %483 = vmatmul.mubr.f32.gmra.mrb[0].mxu0 %v395
      %v484 = vpop.f32.mrb[0].mxu0
      %v485 = vadd.f32 %v356, %v484
      %v486 = vpop.f32.mrb[0].mxu0
      %487 = vmatprep.mubr.f32.mxu0 0.0
      %488 = vmatmul.mubr.f32.gmra.mrb[0].mxu0 %v398
      %v489 = vpop.f32.mrb[0].mxu0
      %v490 = vadd.f32 %v361, %v489
      %v491 = vpop.f32.mrb[0].mxu0
      %492 = vmatprep.mubr.f32.mxu0 0.0
      %493 = vmatmul.mubr.f32.gmra.mrb[0].mxu0 %v401
      %v494 = vpop.f32.mrb[0].mxu0
      %v495 = vadd.f32 %v366, %v494
      %v496 = vpop.f32.mrb[0].mxu0
      %497 = vmatprep.mubr.f32.mxu0 0.0
      %498 = vmatmul.mubr.f32.gmra.mrb[0].mxu0 %v404
      %v499 = vpop.f32.mrb[0].mxu0
      %v500 = vadd.f32 %v371, %v499
      %v501 = vpop.f32.mrb[0].mxu0
      %502 = vmatprep.mubr.f32.mxu0 0.0
      %503 = vmatmul.mubr.f32.gmra.mrb[0].mxu0 %v407
      %v504 = vpop.f32.mrb[0].mxu0
      %v505 = vadd.f32 %v376, %v504
      %v506 = vpop.f32.mrb[0].mxu0
      %507 = vmatprep.mubr.f32.mxu0 0.0
      %508 = vmatmul.mubr.f32.gmra.mrb[0].mxu0 %v410
      %v509 = vpop.f32.mrb[0].mxu0
      %v510 = vadd.f32 %v381, %v509
      %v511 = vpop.f32.mrb[0].mxu0
      %512 = vmatprep.mubr.f32.mxu0 0.0
      %513 = vmatmul.mubr.f32.gmra.mrb[0].mxu0 %v413
      %v514 = vpop.f32.mrb[0].mxu0
      %v515 = vadd.f32 %v386, %v514
      %v516 = vpop.f32.mrb[0].mxu0
      %517 = vmatprep.mubr.f32.mxu0 0.0
      %518 = vmatmul.mubr.f32.gmra.mrb[0].mxu0 %v416
      %v519 = vpop.f32.mrb[0].mxu0
      %v520 = vadd.f32 %v391, %v519
      %v521 = vpop.f32.mrb[0].mxu0
      %522 = vdwg.mxu0
      %v523 = vld [vmem:[%s234 + $0x2] sm:$0xff]
      %v524 = vld [vmem:[%s234 + $0x12] sm:$0xff]
      %v525 = vld [vmem:[%s234 + $0x22] sm:$0xff]
      %v526 = vld [vmem:[%s234 + $0x32] sm:$0xff]
      %v527 = vld [vmem:[%s234 + $0x42] sm:$0xff]
      %v528 = vld [vmem:[%s234 + $0x52] sm:$0xff]
      %v529 = vld [vmem:[%s234 + $0x62] sm:$0xff]
      %v530 = vld [vmem:[%s234 + $0x72] sm:$0xff]
      %s531 = scalar_lea.vmem %s1, 16
      %v532 = vld [vmem:[%s531] sm:$0xff]
      %v534 = vsel %vm264, %v523, 0
      %v537 = vsel %vm264, %v524, 0
      %v540 = vsel %vm264, %v525, 0
      %v543 = vsel %vm264, %v526, 0
      %v546 = vsel %vm264, %v527, 0
      %v549 = vsel %vm264, %v528, 0
      %v552 = vsel %vm264, %v529, 0
      %v555 = vsel %vm264, %v530, 0
      %557 = vmatprep.subr.mxu0 0.0
      %558 = vmatpush1.msra.mxu0 %v532
      %559 = vmatprep.subr.mxu0 0.0
      %560 = vmatpush1.msra.mxu0 0.0
      %561 = vmatprep.subr.mxu0 0.0
      %562 = vmatpush1.msra.mxu0 0.0
      %563 = vmatprep.subr.mxu0 0.0
      %564 = vmatpush1.msra.mxu0 0.0
      %565 = vmatprep.subr.mxu0 0.0
      %566 = vmatpush1.msra.mxu0 0.0
      %567 = vmatprep.subr.mxu0 0.0
      %568 = vmatpush1.msra.mxu0 0.0
      %569 = vmatprep.subr.mxu0 0.0
      %570 = vmatpush1.msra.mxu0 0.0
      %571 = vmatprep.subr.mxu0 0.0
      %572 = vmatpush1.msra.mxu0 0.0
      %573 = vmatprep.subr.mxu0 0.0
      %574 = vmatpush1.msra.mxu0 0.0
      %575 = vmatprep.subr.mxu0 0.0
      %576 = vmatpush1.msra.mxu0 0.0
      %577 = vmatprep.subr.mxu0 0.0
      %578 = vmatpush1.msra.mxu0 0.0
      %579 = vmatprep.subr.mxu0 0.0
      %580 = vmatpush1.msra.mxu0 0.0
      %581 = vmatprep.subr.mxu0 0.0
      %582 = vmatpush1.msra.mxu0 0.0
      %583 = vmatprep.subr.mxu0 0.0
      %584 = vmatpush1.msra.mxu0 0.0
      %585 = vmatprep.subr.mxu0 0.0
      %586 = vmatpush1.msra.mxu0 0.0
      %587 = vmatprep.subr.mxu0 0.0
      %588 = vmatpush1.msra.mxu0 0.0
      %589 = vmatprep.subr.mxu0 0.0
      %590 = vmatpush1.msra.mxu0 0.0
      %591 = vmatprep.subr.mxu0 0.0
      %592 = vmatpush1.msra.mxu0 0.0
      %593 = vmatprep.subr.mxu0 0.0
      %594 = vmatpush1.msra.mxu0 0.0
      %595 = vmatprep.subr.mxu0 0.0
      %596 = vmatpush1.msra.mxu0 0.0
      %597 = vmatprep.subr.mxu0 0.0
      %598 = vmatpush1.msra.mxu0 0.0
      %599 = vmatprep.subr.mxu0 0.0
      %600 = vmatpush1.msra.mxu0 0.0
      %601 = vmatprep.subr.mxu0 0.0
      %602 = vmatpush1.msra.mxu0 0.0
      %603 = vmatprep.subr.mxu0 0.0
      %604 = vmatpush1.msra.mxu0 0.0
      %605 = vmatprep.subr.mxu0 0.0
      %606 = vmatpush1.msra.mxu0 0.0
      %607 = vmatprep.subr.mxu0 0.0
      %608 = vmatpush1.msra.mxu0 0.0
      %609 = vmatprep.subr.mxu0 0.0
      %610 = vmatpush1.msra.mxu0 0.0
      %611 = vmatprep.subr.mxu0 0.0
      %612 = vmatpush1.msra.mxu0 0.0
      %613 = vmatprep.subr.mxu0 0.0
      %614 = vmatpush1.msra.mxu0 0.0
      %615 = vmatprep.subr.mxu0 0.0
      %616 = vmatpush1.msra.mxu0 0.0
      %617 = vmatprep.subr.mxu0 0.0
      %618 = vmatpush1.msra.mxu0 0.0
      %619 = vmatprep.subr.mxu0 0.0
      %620 = vmatpush1.msra.mxu0 0.0
      %621 = vmatprep.mubr.f32.mxu0 0.0
      %622 = vmatmul.mubr.f32.gmra.mrb[0].mxu0 %v534
      %v623 = vpop.f32.mrb[0].mxu0
      %v624 = vadd.f32 0.0, %v623
      %v625 = vpop.f32.mrb[0].mxu0
      %626 = vmatprep.mubr.f32.mxu0 0.0
      %627 = vmatmul.mubr.f32.gmra.mrb[0].mxu0 %v537
      %v628 = vpop.f32.mrb[0].mxu0
      %v629 = vadd.f32 0.0, %v628
      %v630 = vpop.f32.mrb[0].mxu0
      %631 = vmatprep.mubr.f32.mxu0 0.0
      %632 = vmatmul.mubr.f32.gmra.mrb[0].mxu0 %v540
      %v633 = vpop.f32.mrb[0].mxu0
      %v634 = vadd.f32 0.0, %v633
      %v635 = vpop.f32.mrb[0].mxu0
      %636 = vmatprep.mubr.f32.mxu0 0.0
      %637 = vmatmul.mubr.f32.gmra.mrb[0].mxu0 %v543
      %v638 = vpop.f32.mrb[0].mxu0
      %v639 = vadd.f32 0.0, %v638
      %v640 = vpop.f32.mrb[0].mxu0
      %641 = vmatprep.mubr.f32.mxu0 0.0
      %642 = vmatmul.mubr.f32.gmra.mrb[0].mxu0 %v546
      %v643 = vpop.f32.mrb[0].mxu0
      %v644 = vadd.f32 0.0, %v643
      %v645 = vpop.f32.mrb[0].mxu0
      %646 = vmatprep.mubr.f32.mxu0 0.0
      %647 = vmatmul.mubr.f32.gmra.mrb[0].mxu0 %v549
      %v648 = vpop.f32.mrb[0].mxu0
      %v649 = vadd.f32 0.0, %v648
      %v650 = vpop.f32.mrb[0].mxu0
      %651 = vmatprep.mubr.f32.mxu0 0.0
      %652 = vmatmul.mubr.f32.gmra.mrb[0].mxu0 %v552
      %v653 = vpop.f32.mrb[0].mxu0
      %v654 = vadd.f32 0.0, %v653
      %v655 = vpop.f32.mrb[0].mxu0
      %656 = vmatprep.mubr.f32.mxu0 0.0
      %657 = vmatmul.mubr.f32.gmra.mrb[0].mxu0 %v555
      %v658 = vpop.f32.mrb[0].mxu0
      %v659 = vadd.f32 0.0, %v658
      %v660 = vpop.f32.mrb[0].mxu0
      %661 = vdwg.mxu0
      %v662 = vadd.f32 %v485, %v624
      %v663 = vadd.f32 %v490, %v629
      %v664 = vadd.f32 %v495, %v634
      %v665 = vadd.f32 %v500, %v639
      %v666 = vadd.f32 %v505, %v644
      %v667 = vadd.f32 %v510, %v649
      %v668 = vadd.f32 %v515, %v654
      %v669 = vadd.f32 %v520, %v659
      %s670 = scalar_lea.vmem %s234, 16
      %v671 = vld [vmem:[%s670] sm:$0xff]
      %v672 = vld [vmem:[%s670 + $0x10] sm:$0xff]
      %v673 = vld [vmem:[%s670 + $0x20] sm:$0xff]
      %v674 = vld [vmem:[%s670 + $0x30] sm:$0xff]
      %v675 = vld [vmem:[%s670 + $0x40] sm:$0xff]
      %v676 = vld [vmem:[%s670 + $0x50] sm:$0xff]
      %v677 = vld [vmem:[%s670 + $0x60] sm:$0xff]
      %v678 = vld [vmem:[%s670 + $0x70] sm:$0xff]
      %s679 = scalar_lea.vmem %s1, 24
      %v680 = vld [vmem:[%s679] sm:$0xff]
      %v682 = vsel %vm264, %v671, 0
      %v685 = vsel %vm264, %v672, 0
      %v688 = vsel %vm264, %v673, 0
      %v691 = vsel %vm264, %v674, 0
      %v694 = vsel %vm264, %v675, 0
      %v697 = vsel %vm264, %v676, 0
      %v700 = vsel %vm264, %v677, 0
      %v703 = vsel %vm264, %v678, 0
      %705 = vmatprep.subr.mxu0 0.0
      %706 = vmatpush1.msra.mxu0 %v680
      %707 = vmatprep.subr.mxu0 0.0
      %708 = vmatpush1.msra.mxu0 0.0
      %709 = vmatprep.subr.mxu0 0.0
      %710 = vmatpush1.msra.mxu0 0.0
      %711 = vmatprep.subr.mxu0 0.0
      %712 = vmatpush1.msra.mxu0 0.0
      %713 = vmatprep.subr.mxu0 0.0
      %714 = vmatpush1.msra.mxu0 0.0
      %715 = vmatprep.subr.mxu0 0.0
      %716 = vmatpush1.msra.mxu0 0.0
      %717 = vmatprep.subr.mxu0 0.0
      %718 = vmatpush1.msra.mxu0 0.0
      %719 = vmatprep.subr.mxu0 0.0
      %720 = vmatpush1.msra.mxu0 0.0
      %721 = vmatprep.subr.mxu0 0.0
      %722 = vmatpush1.msra.mxu0 0.0
      %723 = vmatprep.subr.mxu0 0.0
      %724 = vmatpush1.msra.mxu0 0.0
      %725 = vmatprep.subr.mxu0 0.0
      %726 = vmatpush1.msra.mxu0 0.0
      %727 = vmatprep.subr.mxu0 0.0
      %728 = vmatpush1.msra.mxu0 0.0
      %729 = vmatprep.subr.mxu0 0.0
      %730 = vmatpush1.msra.mxu0 0.0
      %731 = vmatprep.subr.mxu0 0.0
      %732 = vmatpush1.msra.mxu0 0.0
      %733 = vmatprep.subr.mxu0 0.0
      %734 = vmatpush1.msra.mxu0 0.0
      %735 = vmatprep.subr.mxu0 0.0
      %736 = vmatpush1.msra.mxu0 0.0
      %737 = vmatprep.subr.mxu0 0.0
      %738 = vmatpush1.msra.mxu0 0.0
      %739 = vmatprep.subr.mxu0 0.0
      %740 = vmatpush1.msra.mxu0 0.0
      %741 = vmatprep.subr.mxu0 0.0
      %742 = vmatpush1.msra.mxu0 0.0
      %743 = vmatprep.subr.mxu0 0.0
      %744 = vmatpush1.msra.mxu0 0.0
      %745 = vmatprep.subr.mxu0 0.0
      %746 = vmatpush1.msra.mxu0 0.0
      %747 = vmatprep.subr.mxu0 0.0
      %748 = vmatpush1.msra.mxu0 0.0
      %749 = vmatprep.subr.mxu0 0.0
      %750 = vmatpush1.msra.mxu0 0.0
      %751 = vmatprep.subr.mxu0 0.0
      %752 = vmatpush1.msra.mxu0 0.0
      %753 = vmatprep.subr.mxu0 0.0
      %754 = vmatpush1.msra.mxu0 0.0
      %755 = vmatprep.subr.mxu0 0.0
      %756 = vmatpush1.msra.mxu0 0.0
      %757 = vmatprep.subr.mxu0 0.0
      %758 = vmatpush1.msra.mxu0 0.0
      %759 = vmatprep.subr.mxu0 0.0
      %760 = vmatpush1.msra.mxu0 0.0
      %761 = vmatprep.subr.mxu0 0.0
      %762 = vmatpush1.msra.mxu0 0.0
      %763 = vmatprep.subr.mxu0 0.0
      %764 = vmatpush1.msra.mxu0 0.0
      %765 = vmatprep.subr.mxu0 0.0
      %766 = vmatpush1.msra.mxu0 0.0
      %767 = vmatprep.subr.mxu0 0.0
      %768 = vmatpush1.msra.mxu0 0.0
      %769 = vmatprep.mubr.f32.mxu0 0.0
      %770 = vmatmul.mubr.f32.gmra.mrb[0].mxu0 %v682
      %v771 = vpop.f32.mrb[0].mxu0
      %v772 = vadd.f32 0.0, %v771
      %v773 = vpop.f32.mrb[0].mxu0
      %774 = vmatprep.mubr.f32.mxu0 0.0
      %775 = vmatmul.mubr.f32.gmra.mrb[0].mxu0 %v685
      %v776 = vpop.f32.mrb[0].mxu0
      %v777 = vadd.f32 0.0, %v776
      %v778 = vpop.f32.mrb[0].mxu0
      %779 = vmatprep.mubr.f32.mxu0 0.0
      %780 = vmatmul.mubr.f32.gmra.mrb[0].mxu0 %v688
      %v781 = vpop.f32.mrb[0].mxu0
      %v782 = vadd.f32 0.0, %v781
      %v783 = vpop.f32.mrb[0].mxu0
      %784 = vmatprep.mubr.f32.mxu0 0.0
      %785 = vmatmul.mubr.f32.gmra.mrb[0].mxu0 %v691
      %v786 = vpop.f32.mrb[0].mxu0
      %v787 = vadd.f32 0.0, %v786
      %v788 = vpop.f32.mrb[0].mxu0
      %789 = vmatprep.mubr.f32.mxu0 0.0
      %790 = vmatmul.mubr.f32.gmra.mrb[0].mxu0 %v694
      %v791 = vpop.f32.mrb[0].mxu0
      %v792 = vadd.f32 0.0, %v791
      %v793 = vpop.f32.mrb[0].mxu0
      %794 = vmatprep.mubr.f32.mxu0 0.0
      %795 = vmatmul.mubr.f32.gmra.mrb[0].mxu0 %v697
      %v796 = vpop.f32.mrb[0].mxu0
      %v797 = vadd.f32 0.0, %v796
      %v798 = vpop.f32.mrb[0].mxu0
      %799 = vmatprep.mubr.f32.mxu0 0.0
      %800 = vmatmul.mubr.f32.gmra.mrb[0].mxu0 %v700
      %v801 = vpop.f32.mrb[0].mxu0
      %v802 = vadd.f32 0.0, %v801
      %v803 = vpop.f32.mrb[0].mxu0
      %804 = vmatprep.mubr.f32.mxu0 0.0
      %805 = vmatmul.mubr.f32.gmra.mrb[0].mxu0 %v703
      %v806 = vpop.f32.mrb[0].mxu0
      %v807 = vadd.f32 0.0, %v806
      %v808 = vpop.f32.mrb[0].mxu0
      %809 = vdwg.mxu0
      %v810 = vadd.f32 %v662, %v772
      %v811 = vadd.f32 %v663, %v777
      %v812 = vadd.f32 %v664, %v782
      %v813 = vadd.f32 %v665, %v787
      %v814 = vadd.f32 %v666, %v792
      %v815 = vadd.f32 %v667, %v797
      %v816 = vadd.f32 %v668, %v802
      %v817 = vadd.f32 %v669, %v807
      %v818 = vld [vmem:[%s670 + $0x1] sm:$0xff]
      %v819 = vld [vmem:[%s670 + $0x11] sm:$0xff]
      %v820 = vld [vmem:[%s670 + $0x21] sm:$0xff]
      %v821 = vld [vmem:[%s670 + $0x31] sm:$0xff]
      %v822 = vld [vmem:[%s670 + $0x41] sm:$0xff]
      %v823 = vld [vmem:[%s670 + $0x51] sm:$0xff]
      %v824 = vld [vmem:[%s670 + $0x61] sm:$0xff]
      %v825 = vld [vmem:[%s670 + $0x71] sm:$0xff]
      %s826 = scalar_lea.vmem %s1, 32
      %v827 = vld [vmem:[%s826] sm:$0xff]
      %v829 = vsel %vm264, %v818, 0
      %v832 = vsel %vm264, %v819, 0
      %v835 = vsel %vm264, %v820, 0
      %v838 = vsel %vm264, %v821, 0
      %v841 = vsel %vm264, %v822, 0
      %v844 = vsel %vm264, %v823, 0
      %v847 = vsel %vm264, %v824, 0
      %v850 = vsel %vm264, %v825, 0
      %852 = vmatprep.subr.mxu0 0.0
      %853 = vmatpush1.msra.mxu0 %v827
      %854 = vmatprep.subr.mxu0 0.0
      %855 = vmatpush1.msra.mxu0 0.0
      %856 = vmatprep.subr.mxu0 0.0
      %857 = vmatpush1.msra.mxu0 0.0
      %858 = vmatprep.subr.mxu0 0.0
      %859 = vmatpush1.msra.mxu0 0.0
      %860 = vmatprep.subr.mxu0 0.0
      %861 = vmatpush1.msra.mxu0 0.0
      %862 = vmatprep.subr.mxu0 0.0
      %863 = vmatpush1.msra.mxu0 0.0
      %864 = vmatprep.subr.mxu0 0.0
      %865 = vmatpush1.msra.mxu0 0.0
      %866 = vmatprep.subr.mxu0 0.0
      %867 = vmatpush1.msra.mxu0 0.0
      %868 = vmatprep.subr.mxu0 0.0
      %869 = vmatpush1.msra.mxu0 0.0
      %870 = vmatprep.subr.mxu0 0.0
      %871 = vmatpush1.msra.mxu0 0.0
      %872 = vmatprep.subr.mxu0 0.0
      %873 = vmatpush1.msra.mxu0 0.0
      %874 = vmatprep.subr.mxu0 0.0
      %875 = vmatpush1.msra.mxu0 0.0
      %876 = vmatprep.subr.mxu0 0.0
      %877 = vmatpush1.msra.mxu0 0.0
      %878 = vmatprep.subr.mxu0 0.0
      %879 = vmatpush1.msra.mxu0 0.0
      %880 = vmatprep.subr.mxu0 0.0
      %881 = vmatpush1.msra.mxu0 0.0
      %882 = vmatprep.subr.mxu0 0.0
      %883 = vmatpush1.msra.mxu0 0.0
      %884 = vmatprep.subr.mxu0 0.0
      %885 = vmatpush1.msra.mxu0 0.0
      %886 = vmatprep.subr.mxu0 0.0
      %887 = vmatpush1.msra.mxu0 0.0
      %888 = vmatprep.subr.mxu0 0.0
      %889 = vmatpush1.msra.mxu0 0.0
      %890 = vmatprep.subr.mxu0 0.0
      %891 = vmatpush1.msra.mxu0 0.0
      %892 = vmatprep.subr.mxu0 0.0
      %893 = vmatpush1.msra.mxu0 0.0
      %894 = vmatprep.subr.mxu0 0.0
      %895 = vmatpush1.msra.mxu0 0.0
      %896 = vmatprep.subr.mxu0 0.0
      %897 = vmatpush1.msra.mxu0 0.0
      %898 = vmatprep.subr.mxu0 0.0
      %899 = vmatpush1.msra.mxu0 0.0
      %900 = vmatprep.subr.mxu0 0.0
      %901 = vmatpush1.msra.mxu0 0.0
      %902 = vmatprep.subr.mxu0 0.0
      %903 = vmatpush1.msra.mxu0 0.0
      %904 = vmatprep.subr.mxu0 0.0
      %905 = vmatpush1.msra.mxu0 0.0
      %906 = vmatprep.subr.mxu0 0.0
      %907 = vmatpush1.msra.mxu0 0.0
      %908 = vmatprep.subr.mxu0 0.0
      %909 = vmatpush1.msra.mxu0 0.0
      %910 = vmatprep.subr.mxu0 0.0
      %911 = vmatpush1.msra.mxu0 0.0
      %912 = vmatprep.subr.mxu0 0.0
      %913 = vmatpush1.msra.mxu0 0.0
      %914 = vmatprep.subr.mxu0 0.0
      %915 = vmatpush1.msra.mxu0 0.0
      %916 = vmatprep.mubr.f32.mxu0 0.0
      %917 = vmatmul.mubr.f32.gmra.mrb[0].mxu0 %v829
      %v918 = vpop.f32.mrb[0].mxu0
      %v919 = vadd.f32 0.0, %v918
      %v920 = vpop.f32.mrb[0].mxu0
      %921 = vmatprep.mubr.f32.mxu0 0.0
      %922 = vmatmul.mubr.f32.gmra.mrb[0].mxu0 %v832
      %v923 = vpop.f32.mrb[0].mxu0
      %v924 = vadd.f32 0.0, %v923
      %v925 = vpop.f32.mrb[0].mxu0
      %926 = vmatprep.mubr.f32.mxu0 0.0
      %927 = vmatmul.mubr.f32.gmra.mrb[0].mxu0 %v835
      %v928 = vpop.f32.mrb[0].mxu0
      %v929 = vadd.f32 0.0, %v928
      %v930 = vpop.f32.mrb[0].mxu0
      %931 = vmatprep.mubr.f32.mxu0 0.0
      %932 = vmatmul.mubr.f32.gmra.mrb[0].mxu0 %v838
      %v933 = vpop.f32.mrb[0].mxu0
      %v934 = vadd.f32 0.0, %v933
      %v935 = vpop.f32.mrb[0].mxu0
      %936 = vmatprep.mubr.f32.mxu0 0.0
      %937 = vmatmul.mubr.f32.gmra.mrb[0].mxu0 %v841
      %v938 = vpop.f32.mrb[0].mxu0
      %v939 = vadd.f32 0.0, %v938
      %v940 = vpop.f32.mrb[0].mxu0
      %941 = vmatprep.mubr.f32.mxu0 0.0
      %942 = vmatmul.mubr.f32.gmra.mrb[0].mxu0 %v844
      %v943 = vpop.f32.mrb[0].mxu0
      %v944 = vadd.f32 0.0, %v943
      %v945 = vpop.f32.mrb[0].mxu0
      %946 = vmatprep.mubr.f32.mxu0 0.0
      %947 = vmatmul.mubr.f32.gmra.mrb[0].mxu0 %v847
      %v948 = vpop.f32.mrb[0].mxu0
      %v949 = vadd.f32 0.0, %v948
      %v950 = vpop.f32.mrb[0].mxu0
      %951 = vmatprep.mubr.f32.mxu0 0.0
      %952 = vmatmul.mubr.f32.gmra.mrb[0].mxu0 %v850
      %v953 = vpop.f32.mrb[0].mxu0
      %v954 = vadd.f32 0.0, %v953
      %v955 = vpop.f32.mrb[0].mxu0
      %956 = vdwg.mxu0
      %v957 = vadd.f32 %v810, %v919
      %v958 = vadd.f32 %v811, %v924
      %v959 = vadd.f32 %v812, %v929
      %v960 = vadd.f32 %v813, %v934
      %v961 = vadd.f32 %v814, %v939
      %v962 = vadd.f32 %v815, %v944
      %v963 = vadd.f32 %v816, %v949
      %v964 = vadd.f32 %v817, %v954
      %v965 = vld [vmem:[%s670 + $0x2] sm:$0xff]
      %v966 = vld [vmem:[%s670 + $0x12] sm:$0xff]
      %v967 = vld [vmem:[%s670 + $0x22] sm:$0xff]
      %v968 = vld [vmem:[%s670 + $0x32] sm:$0xff]
      %v969 = vld [vmem:[%s670 + $0x42] sm:$0xff]
      %v970 = vld [vmem:[%s670 + $0x52] sm:$0xff]
      %v971 = vld [vmem:[%s670 + $0x62] sm:$0xff]
      %v972 = vld [vmem:[%s670 + $0x72] sm:$0xff]
      %s973 = scalar_lea.vmem %s1, 40
      %v974 = vld [vmem:[%s973] sm:$0xff]
      %v976 = vsel %vm264, %v965, 0
      %v979 = vsel %vm264, %v966, 0
      %v982 = vsel %vm264, %v967, 0
      %v985 = vsel %vm264, %v968, 0
      %v988 = vsel %vm264, %v969, 0
      %v991 = vsel %vm264, %v970, 0
      %v994 = vsel %vm264, %v971, 0
      %v997 = vsel %vm264, %v972, 0
      %999 = vmatprep.subr.mxu0 0.0
      %1000 = vmatpush1.msra.mxu0 %v974
      %1001 = vmatprep.subr.mxu0 0.0
      %1002 = vmatpush1.msra.mxu0 0.0
      %1003 = vmatprep.subr.mxu0 0.0
      %1004 = vmatpush1.msra.mxu0 0.0
      %1005 = vmatprep.subr.mxu0 0.0
      %1006 = vmatpush1.msra.mxu0 0.0
      %1007 = vmatprep.subr.mxu0 0.0
      %1008 = vmatpush1.msra.mxu0 0.0
      %1009 = vmatprep.subr.mxu0 0.0
      %1010 = vmatpush1.msra.mxu0 0.0
      %1011 = vmatprep.subr.mxu0 0.0
      %1012 = vmatpush1.msra.mxu0 0.0
      %1013 = vmatprep.subr.mxu0 0.0
      %1014 = vmatpush1.msra.mxu0 0.0
      %1015 = vmatprep.subr.mxu0 0.0
      %1016 = vmatpush1.msra.mxu0 0.0
      %1017 = vmatprep.subr.mxu0 0.0
      %1018 = vmatpush1.msra.mxu0 0.0
      %1019 = vmatprep.subr.mxu0 0.0
      %1020 = vmatpush1.msra.mxu0 0.0
      %1021 = vmatprep.subr.mxu0 0.0
      %1022 = vmatpush1.msra.mxu0 0.0
      %1023 = vmatprep.subr.mxu0 0.0
      %1024 = vmatpush1.msra.mxu0 0.0
      %1025 = vmatprep.subr.mxu0 0.0
      %1026 = vmatpush1.msra.mxu0 0.0
      %1027 = vmatprep.subr.mxu0 0.0
      %1028 = vmatpush1.msra.mxu0 0.0
      %1029 = vmatprep.subr.mxu0 0.0
      %1030 = vmatpush1.msra.mxu0 0.0
      %1031 = vmatprep.subr.mxu0 0.0
      %1032 = vmatpush1.msra.mxu0 0.0
      %1033 = vmatprep.subr.mxu0 0.0
      %1034 = vmatpush1.msra.mxu0 0.0
      %1035 = vmatprep.subr.mxu0 0.0
      %1036 = vmatpush1.msra.mxu0 0.0
      %1037 = vmatprep.subr.mxu0 0.0
      %1038 = vmatpush1.msra.mxu0 0.0
      %1039 = vmatprep.subr.mxu0 0.0
      %1040 = vmatpush1.msra.mxu0 0.0
      %1041 = vmatprep.subr.mxu0 0.0
      %1042 = vmatpush1.msra.mxu0 0.0
      %1043 = vmatprep.subr.mxu0 0.0
      %1044 = vmatpush1.msra.mxu0 0.0
      %1045 = vmatprep.subr.mxu0 0.0
      %1046 = vmatpush1.msra.mxu0 0.0
      %1047 = vmatprep.subr.mxu0 0.0
      %1048 = vmatpush1.msra.mxu0 0.0
      %1049 = vmatprep.subr.mxu0 0.0
      %1050 = vmatpush1.msra.mxu0 0.0
      %1051 = vmatprep.subr.mxu0 0.0
      %1052 = vmatpush1.msra.mxu0 0.0
      %1053 = vmatprep.subr.mxu0 0.0
      %1054 = vmatpush1.msra.mxu0 0.0
      %1055 = vmatprep.subr.mxu0 0.0
      %1056 = vmatpush1.msra.mxu0 0.0
      %1057 = vmatprep.subr.mxu0 0.0
      %1058 = vmatpush1.msra.mxu0 0.0
      %1059 = vmatprep.subr.mxu0 0.0
      %1060 = vmatpush1.msra.mxu0 0.0
      %1061 = vmatprep.subr.mxu0 0.0
      %1062 = vmatpush1.msra.mxu0 0.0
      %1063 = vmatprep.mubr.f32.mxu0 0.0
      %1064 = vmatmul.mubr.f32.gmra.mrb[0].mxu0 %v976
      %v1065 = vpop.f32.mrb[0].mxu0
      %v1066 = vadd.f32 0.0, %v1065
      %v1067 = vpop.f32.mrb[0].mxu0
      %1068 = vmatprep.mubr.f32.mxu0 0.0
      %1069 = vmatmul.mubr.f32.gmra.mrb[0].mxu0 %v979
      %v1070 = vpop.f32.mrb[0].mxu0
      %v1071 = vadd.f32 0.0, %v1070
      %v1072 = vpop.f32.mrb[0].mxu0
      %1073 = vmatprep.mubr.f32.mxu0 0.0
      %1074 = vmatmul.mubr.f32.gmra.mrb[0].mxu0 %v982
      %v1075 = vpop.f32.mrb[0].mxu0
      %v1076 = vadd.f32 0.0, %v1075
      %v1077 = vpop.f32.mrb[0].mxu0
      %1078 = vmatprep.mubr.f32.mxu0 0.0
      %1079 = vmatmul.mubr.f32.gmra.mrb[0].mxu0 %v985
      %v1080 = vpop.f32.mrb[0].mxu0
      %v1081 = vadd.f32 0.0, %v1080
      %v1082 = vpop.f32.mrb[0].mxu0
      %1083 = vmatprep.mubr.f32.mxu0 0.0
      %1084 = vmatmul.mubr.f32.gmra.mrb[0].mxu0 %v988
      %v1085 = vpop.f32.mrb[0].mxu0
      %v1086 = vadd.f32 0.0, %v1085
      %v1087 = vpop.f32.mrb[0].mxu0
      %1088 = vmatprep.mubr.f32.mxu0 0.0
      %1089 = vmatmul.mubr.f32.gmra.mrb[0].mxu0 %v991
      %v1090 = vpop.f32.mrb[0].mxu0
      %v1091 = vadd.f32 0.0, %v1090
      %v1092 = vpop.f32.mrb[0].mxu0
      %1093 = vmatprep.mubr.f32.mxu0 0.0
      %1094 = vmatmul.mubr.f32.gmra.mrb[0].mxu0 %v994
      %v1095 = vpop.f32.mrb[0].mxu0
      %v1096 = vadd.f32 0.0, %v1095
      %v1097 = vpop.f32.mrb[0].mxu0
      %1098 = vmatprep.mubr.f32.mxu0 0.0
      %1099 = vmatmul.mubr.f32.gmra.mrb[0].mxu0 %v997
      %v1100 = vpop.f32.mrb[0].mxu0
      %v1101 = vadd.f32 0.0, %v1100
      %v1102 = vpop.f32.mrb[0].mxu0
      %1103 = vdwg.mxu0
      %v1104 = vadd.f32 %v957, %v1066
      %v1105 = vadd.f32 %v958, %v1071
      %v1106 = vadd.f32 %v959, %v1076
      %v1107 = vadd.f32 %v960, %v1081
      %v1108 = vadd.f32 %v961, %v1086
      %v1109 = vadd.f32 %v962, %v1091
      %v1110 = vadd.f32 %v963, %v1096
      %v1111 = vadd.f32 %v964, %v1101
      %s1112 = scalar_lea.vmem %s234, 32
      %v1113 = vld [vmem:[%s1112] sm:$0xff]
      %v1114 = vld [vmem:[%s1112 + $0x10] sm:$0xff]
      %v1115 = vld [vmem:[%s1112 + $0x20] sm:$0xff]
      %v1116 = vld [vmem:[%s1112 + $0x30] sm:$0xff]
      %v1117 = vld [vmem:[%s1112 + $0x40] sm:$0xff]
      %v1118 = vld [vmem:[%s1112 + $0x50] sm:$0xff]
      %v1119 = vld [vmem:[%s1112 + $0x60] sm:$0xff]
      %v1120 = vld [vmem:[%s1112 + $0x70] sm:$0xff]
      %s1121 = scalar_lea.vmem %s1, 48
      %v1122 = vld [vmem:[%s1121] sm:$0xff]
      %v1124 = vsel %vm264, %v1113, 0
      %v1127 = vsel %vm264, %v1114, 0
      %v1130 = vsel %vm264, %v1115, 0
      %v1133 = vsel %vm264, %v1116, 0
      %v1136 = vsel %vm264, %v1117, 0
      %v1139 = vsel %vm264, %v1118, 0
      %v1142 = vsel %vm264, %v1119, 0
      %v1145 = vsel %vm264, %v1120, 0
      %1147 = vmatprep.subr.mxu0 0.0
      %1148 = vmatpush1.msra.mxu0 %v1122
      %1149 = vmatprep.subr.mxu0 0.0
      %1150 = vmatpush1.msra.mxu0 0.0
      %1151 = vmatprep.subr.mxu0 0.0
      %1152 = vmatpush1.msra.mxu0 0.0
      %1153 = vmatprep.subr.mxu0 0.0
      %1154 = vmatpush1.msra.mxu0 0.0
      %1155 = vmatprep.subr.mxu0 0.0
      %1156 = vmatpush1.msra.mxu0 0.0
      %1157 = vmatprep.subr.mxu0 0.0
      %1158 = vmatpush1.msra.mxu0 0.0
      %1159 = vmatprep.subr.mxu0 0.0
      %1160 = vmatpush1.msra.mxu0 0.0
      %1161 = vmatprep.subr.mxu0 0.0
      %1162 = vmatpush1.msra.mxu0 0.0
      %1163 = vmatprep.subr.mxu0 0.0
      %1164 = vmatpush1.msra.mxu0 0.0
      %1165 = vmatprep.subr.mxu0 0.0
      %1166 = vmatpush1.msra.mxu0 0.0
      %1167 = vmatprep.subr.mxu0 0.0
      %1168 = vmatpush1.msra.mxu0 0.0
      %1169 = vmatprep.subr.mxu0 0.0
      %1170 = vmatpush1.msra.mxu0 0.0
      %1171 = vmatprep.subr.mxu0 0.0
      %1172 = vmatpush1.msra.mxu0 0.0
      %1173 = vmatprep.subr.mxu0 0.0
      %1174 = vmatpush1.msra.mxu0 0.0
      %1175 = vmatprep.subr.mxu0 0.0
      %1176 = vmatpush1.msra.mxu0 0.0
      %1177 = vmatprep.subr.mxu0 0.0
      %1178 = vmatpush1.msra.mxu0 0.0
      %1179 = vmatprep.subr.mxu0 0.0
      %1180 = vmatpush1.msra.mxu0 0.0
      %1181 = vmatprep.subr.mxu0 0.0
      %1182 = vmatpush1.msra.mxu0 0.0
      %1183 = vmatprep.subr.mxu0 0.0
      %1184 = vmatpush1.msra.mxu0 0.0
      %1185 = vmatprep.subr.mxu0 0.0
      %1186 = vmatpush1.msra.mxu0 0.0
      %1187 = vmatprep.subr.mxu0 0.0
      %1188 = vmatpush1.msra.mxu0 0.0
      %1189 = vmatprep.subr.mxu0 0.0
      %1190 = vmatpush1.msra.mxu0 0.0
      %1191 = vmatprep.subr.mxu0 0.0
      %1192 = vmatpush1.msra.mxu0 0.0
      %1193 = vmatprep.subr.mxu0 0.0
      %1194 = vmatpush1.msra.mxu0 0.0
      %1195 = vmatprep.subr.mxu0 0.0
      %1196 = vmatpush1.msra.mxu0 0.0
      %1197 = vmatprep.subr.mxu0 0.0
      %1198 = vmatpush1.msra.mxu0 0.0
      %1199 = vmatprep.subr.mxu0 0.0
      %1200 = vmatpush1.msra.mxu0 0.0
      %1201 = vmatprep.subr.mxu0 0.0
      %1202 = vmatpush1.msra.mxu0 0.0
      %1203 = vmatprep.subr.mxu0 0.0
      %1204 = vmatpush1.msra.mxu0 0.0
      %1205 = vmatprep.subr.mxu0 0.0
      %1206 = vmatpush1.msra.mxu0 0.0
      %1207 = vmatprep.subr.mxu0 0.0
      %1208 = vmatpush1.msra.mxu0 0.0
      %1209 = vmatprep.subr.mxu0 0.0
      %1210 = vmatpush1.msra.mxu0 0.0
      %1211 = vmatprep.mubr.f32.mxu0 0.0
      %1212 = vmatmul.mubr.f32.gmra.mrb[0].mxu0 %v1124
      %v1213 = vpop.f32.mrb[0].mxu0
      %v1214 = vadd.f32 0.0, %v1213
      %v1215 = vpop.f32.mrb[0].mxu0
      %1216 = vmatprep.mubr.f32.mxu0 0.0
      %1217 = vmatmul.mubr.f32.gmra.mrb[0].mxu0 %v1127
      %v1218 = vpop.f32.mrb[0].mxu0
      %v1219 = vadd.f32 0.0, %v1218
      %v1220 = vpop.f32.mrb[0].mxu0
      %1221 = vmatprep.mubr.f32.mxu0 0.0
      %1222 = vmatmul.mubr.f32.gmra.mrb[0].mxu0 %v1130
      %v1223 = vpop.f32.mrb[0].mxu0
      %v1224 = vadd.f32 0.0, %v1223
      %v1225 = vpop.f32.mrb[0].mxu0
      %1226 = vmatprep.mubr.f32.mxu0 0.0
      %1227 = vmatmul.mubr.f32.gmra.mrb[0].mxu0 %v1133
      %v1228 = vpop.f32.mrb[0].mxu0
      %v1229 = vadd.f32 0.0, %v1228
      %v1230 = vpop.f32.mrb[0].mxu0
      %1231 = vmatprep.mubr.f32.mxu0 0.0
      %1232 = vmatmul.mubr.f32.gmra.mrb[0].mxu0 %v1136
      %v1233 = vpop.f32.mrb[0].mxu0
      %v1234 = vadd.f32 0.0, %v1233
      %v1235 = vpop.f32.mrb[0].mxu0
      %1236 = vmatprep.mubr.f32.mxu0 0.0
      %1237 = vmatmul.mubr.f32.gmra.mrb[0].mxu0 %v1139
      %v1238 = vpop.f32.mrb[0].mxu0
      %v1239 = vadd.f32 0.0, %v1238
      %v1240 = vpop.f32.mrb[0].mxu0
      %1241 = vmatprep.mubr.f32.mxu0 0.0
      %1242 = vmatmul.mubr.f32.gmra.mrb[0].mxu0 %v1142
      %v1243 = vpop.f32.mrb[0].mxu0
      %v1244 = vadd.f32 0.0, %v1243
      %v1245 = vpop.f32.mrb[0].mxu0
      %1246 = vmatprep.mubr.f32.mxu0 0.0
      %1247 = vmatmul.mubr.f32.gmra.mrb[0].mxu0 %v1145
      %v1248 = vpop.f32.mrb[0].mxu0
      %v1249 = vadd.f32 0.0, %v1248
      %v1250 = vpop.f32.mrb[0].mxu0
      %1251 = vdwg.mxu0
      %v1252 = vadd.f32 %v1104, %v1214
      %v1253 = vadd.f32 %v1105, %v1219
      %v1254 = vadd.f32 %v1106, %v1224
      %v1255 = vadd.f32 %v1107, %v1229
      %v1256 = vadd.f32 %v1108, %v1234
      %v1257 = vadd.f32 %v1109, %v1239
      %v1258 = vadd.f32 %v1110, %v1244
      %v1259 = vadd.f32 %v1111, %v1249
      %v1260 = vld [vmem:[%s1112 + $0x1] sm:$0xff]
      %v1261 = vld [vmem:[%s1112 + $0x11] sm:$0xff]
      %v1262 = vld [vmem:[%s1112 + $0x21] sm:$0xff]
      %v1263 = vld [vmem:[%s1112 + $0x31] sm:$0xff]
      %v1264 = vld [vmem:[%s1112 + $0x41] sm:$0xff]
      %v1265 = vld [vmem:[%s1112 + $0x51] sm:$0xff]
      %v1266 = vld [vmem:[%s1112 + $0x61] sm:$0xff]
      %v1267 = vld [vmem:[%s1112 + $0x71] sm:$0xff]
      %s1268 = scalar_lea.vmem %s1, 56
      %v1269 = vld [vmem:[%s1268] sm:$0xff]
      %v1271 = vsel %vm264, %v1260, 0
      %v1274 = vsel %vm264, %v1261, 0
      %v1277 = vsel %vm264, %v1262, 0
      %v1280 = vsel %vm264, %v1263, 0
      %v1283 = vsel %vm264, %v1264, 0
      %v1286 = vsel %vm264, %v1265, 0
      %v1289 = vsel %vm264, %v1266, 0
      %v1292 = vsel %vm264, %v1267, 0
      %1294 = vmatprep.subr.mxu0 0.0
      %1295 = vmatpush1.msra.mxu0 %v1269
      %1296 = vmatprep.subr.mxu0 0.0
      %1297 = vmatpush1.msra.mxu0 0.0
      %1298 = vmatprep.subr.mxu0 0.0
      %1299 = vmatpush1.msra.mxu0 0.0
      %1300 = vmatprep.subr.mxu0 0.0
      %1301 = vmatpush1.msra.mxu0 0.0
      %1302 = vmatprep.subr.mxu0 0.0
      %1303 = vmatpush1.msra.mxu0 0.0
      %1304 = vmatprep.subr.mxu0 0.0
      %1305 = vmatpush1.msra.mxu0 0.0
      %1306 = vmatprep.subr.mxu0 0.0
      %1307 = vmatpush1.msra.mxu0 0.0
      %1308 = vmatprep.subr.mxu0 0.0
      %1309 = vmatpush1.msra.mxu0 0.0
      %1310 = vmatprep.subr.mxu0 0.0
      %1311 = vmatpush1.msra.mxu0 0.0
      %1312 = vmatprep.subr.mxu0 0.0
      %1313 = vmatpush1.msra.mxu0 0.0
      %1314 = vmatprep.subr.mxu0 0.0
      %1315 = vmatpush1.msra.mxu0 0.0
      %1316 = vmatprep.subr.mxu0 0.0
      %1317 = vmatpush1.msra.mxu0 0.0
      %1318 = vmatprep.subr.mxu0 0.0
      %1319 = vmatpush1.msra.mxu0 0.0
      %1320 = vmatprep.subr.mxu0 0.0
      %1321 = vmatpush1.msra.mxu0 0.0
      %1322 = vmatprep.subr.mxu0 0.0
      %1323 = vmatpush1.msra.mxu0 0.0
      %1324 = vmatprep.subr.mxu0 0.0
      %1325 = vmatpush1.msra.mxu0 0.0
      %1326 = vmatprep.subr.mxu0 0.0
      %1327 = vmatpush1.msra.mxu0 0.0
      %1328 = vmatprep.subr.mxu0 0.0
      %1329 = vmatpush1.msra.mxu0 0.0
      %1330 = vmatprep.subr.mxu0 0.0
      %1331 = vmatpush1.msra.mxu0 0.0
      %1332 = vmatprep.subr.mxu0 0.0
      %1333 = vmatpush1.msra.mxu0 0.0
      %1334 = vmatprep.subr.mxu0 0.0
      %1335 = vmatpush1.msra.mxu0 0.0
      %1336 = vmatprep.subr.mxu0 0.0
      %1337 = vmatpush1.msra.mxu0 0.0
      %1338 = vmatprep.subr.mxu0 0.0
      %1339 = vmatpush1.msra.mxu0 0.0
      %1340 = vmatprep.subr.mxu0 0.0
      %1341 = vmatpush1.msra.mxu0 0.0
      %1342 = vmatprep.subr.mxu0 0.0
      %1343 = vmatpush1.msra.mxu0 0.0
      %1344 = vmatprep.subr.mxu0 0.0
      %1345 = vmatpush1.msra.mxu0 0.0
      %1346 = vmatprep.subr.mxu0 0.0
      %1347 = vmatpush1.msra.mxu0 0.0
      %1348 = vmatprep.subr.mxu0 0.0
      %1349 = vmatpush1.msra.mxu0 0.0
      %1350 = vmatprep.subr.mxu0 0.0
      %1351 = vmatpush1.msra.mxu0 0.0
      %1352 = vmatprep.subr.mxu0 0.0
      %1353 = vmatpush1.msra.mxu0 0.0
      %1354 = vmatprep.subr.mxu0 0.0
      %1355 = vmatpush1.msra.mxu0 0.0
      %1356 = vmatprep.subr.mxu0 0.0
      %1357 = vmatpush1.msra.mxu0 0.0
      %1358 = vmatprep.mubr.f32.mxu0 0.0
      %1359 = vmatmul.mubr.f32.gmra.mrb[0].mxu0 %v1271
      %v1360 = vpop.f32.mrb[0].mxu0
      %v1361 = vadd.f32 0.0, %v1360
      %v1362 = vpop.f32.mrb[0].mxu0
      %1363 = vmatprep.mubr.f32.mxu0 0.0
      %1364 = vmatmul.mubr.f32.gmra.mrb[0].mxu0 %v1274
      %v1365 = vpop.f32.mrb[0].mxu0
      %v1366 = vadd.f32 0.0, %v1365
      %v1367 = vpop.f32.mrb[0].mxu0
      %1368 = vmatprep.mubr.f32.mxu0 0.0
      %1369 = vmatmul.mubr.f32.gmra.mrb[0].mxu0 %v1277
      %v1370 = vpop.f32.mrb[0].mxu0
      %v1371 = vadd.f32 0.0, %v1370
      %v1372 = vpop.f32.mrb[0].mxu0
      %1373 = vmatprep.mubr.f32.mxu0 0.0
      %1374 = vmatmul.mubr.f32.gmra.mrb[0].mxu0 %v1280
      %v1375 = vpop.f32.mrb[0].mxu0
      %v1376 = vadd.f32 0.0, %v1375
      %v1377 = vpop.f32.mrb[0].mxu0
      %1378 = vmatprep.mubr.f32.mxu0 0.0
      %1379 = vmatmul.mubr.f32.gmra.mrb[0].mxu0 %v1283
      %v1380 = vpop.f32.mrb[0].mxu0
      %v1381 = vadd.f32 0.0, %v1380
      %v1382 = vpop.f32.mrb[0].mxu0
      %1383 = vmatprep.mubr.f32.mxu0 0.0
      %1384 = vmatmul.mubr.f32.gmra.mrb[0].mxu0 %v1286
      %v1385 = vpop.f32.mrb[0].mxu0
      %v1386 = vadd.f32 0.0, %v1385
      %v1387 = vpop.f32.mrb[0].mxu0
      %1388 = vmatprep.mubr.f32.mxu0 0.0
      %1389 = vmatmul.mubr.f32.gmra.mrb[0].mxu0 %v1289
      %v1390 = vpop.f32.mrb[0].mxu0
      %v1391 = vadd.f32 0.0, %v1390
      %v1392 = vpop.f32.mrb[0].mxu0
      %1393 = vmatprep.mubr.f32.mxu0 0.0
      %1394 = vmatmul.mubr.f32.gmra.mrb[0].mxu0 %v1292
      %v1395 = vpop.f32.mrb[0].mxu0
      %v1396 = vadd.f32 0.0, %v1395
      %v1397 = vpop.f32.mrb[0].mxu0
      %1398 = vdwg.mxu0
      %v1399 = vadd.f32 %v1252, %v1361
      %v1400 = vadd.f32 %v1253, %v1366
      %v1401 = vadd.f32 %v1254, %v1371
      %v1402 = vadd.f32 %v1255, %v1376
      %v1403 = vadd.f32 %v1256, %v1381
      %v1404 = vadd.f32 %v1257, %v1386
      %v1405 = vadd.f32 %v1258, %v1391
      %v1406 = vadd.f32 %v1259, %v1396
      %v1407 = vld [vmem:[%s1112 + $0x2] sm:$0xff]
      %v1408 = vld [vmem:[%s1112 + $0x12] sm:$0xff]
      %v1409 = vld [vmem:[%s1112 + $0x22] sm:$0xff]
      %v1410 = vld [vmem:[%s1112 + $0x32] sm:$0xff]
      %v1411 = vld [vmem:[%s1112 + $0x42] sm:$0xff]
      %v1412 = vld [vmem:[%s1112 + $0x52] sm:$0xff]
      %v1413 = vld [vmem:[%s1112 + $0x62] sm:$0xff]
      %v1414 = vld [vmem:[%s1112 + $0x72] sm:$0xff]
      %s1415 = scalar_lea.vmem %s1, 64
      %v1416 = vld [vmem:[%s1415] sm:$0xff]
      %v1418 = vsel %vm264, %v1407, 0
      %v1421 = vsel %vm264, %v1408, 0
      %v1424 = vsel %vm264, %v1409, 0
      %v1427 = vsel %vm264, %v1410, 0
      %v1430 = vsel %vm264, %v1411, 0
      %v1433 = vsel %vm264, %v1412, 0
      %v1436 = vsel %vm264, %v1413, 0
      %v1439 = vsel %vm264, %v1414, 0
      %1441 = vmatprep.subr.mxu0 0.0
      %1442 = vmatpush1.msra.mxu0 %v1416
      %1443 = vmatprep.subr.mxu0 0.0
      %1444 = vmatpush1.msra.mxu0 0.0
      %1445 = vmatprep.subr.mxu0 0.0
      %1446 = vmatpush1.msra.mxu0 0.0
      %1447 = vmatprep.subr.mxu0 0.0
      %1448 = vmatpush1.msra.mxu0 0.0
      %1449 = vmatprep.subr.mxu0 0.0
      %1450 = vmatpush1.msra.mxu0 0.0
      %1451 = vmatprep.subr.mxu0 0.0
      %1452 = vmatpush1.msra.mxu0 0.0
      %1453 = vmatprep.subr.mxu0 0.0
      %1454 = vmatpush1.msra.mxu0 0.0
      %1455 = vmatprep.subr.mxu0 0.0
      %1456 = vmatpush1.msra.mxu0 0.0
      %1457 = vmatprep.subr.mxu0 0.0
      %1458 = vmatpush1.msra.mxu0 0.0
      %1459 = vmatprep.subr.mxu0 0.0
      %1460 = vmatpush1.msra.mxu0 0.0
      %1461 = vmatprep.subr.mxu0 0.0
      %1462 = vmatpush1.msra.mxu0 0.0
      %1463 = vmatprep.subr.mxu0 0.0
      %1464 = vmatpush1.msra.mxu0 0.0
      %1465 = vmatprep.subr.mxu0 0.0
      %1466 = vmatpush1.msra.mxu0 0.0
      %1467 = vmatprep.subr.mxu0 0.0
      %1468 = vmatpush1.msra.mxu0 0.0
      %1469 = vmatprep.subr.mxu0 0.0
      %1470 = vmatpush1.msra.mxu0 0.0
      %1471 = vmatprep.subr.mxu0 0.0
      %1472 = vmatpush1.msra.mxu0 0.0
      %1473 = vmatprep.subr.mxu0 0.0
      %1474 = vmatpush1.msra.mxu0 0.0
      %1475 = vmatprep.subr.mxu0 0.0
      %1476 = vmatpush1.msra.mxu0 0.0
      %1477 = vmatprep.subr.mxu0 0.0
      %1478 = vmatpush1.msra.mxu0 0.0
      %1479 = vmatprep.subr.mxu0 0.0
      %1480 = vmatpush1.msra.mxu0 0.0
      %1481 = vmatprep.subr.mxu0 0.0
      %1482 = vmatpush1.msra.mxu0 0.0
      %1483 = vmatprep.subr.mxu0 0.0
      %1484 = vmatpush1.msra.mxu0 0.0
      %1485 = vmatprep.subr.mxu0 0.0
      %1486 = vmatpush1.msra.mxu0 0.0
      %1487 = vmatprep.subr.mxu0 0.0
      %1488 = vmatpush1.msra.mxu0 0.0
      %1489 = vmatprep.subr.mxu0 0.0
      %1490 = vmatpush1.msra.mxu0 0.0
      %1491 = vmatprep.subr.mxu0 0.0
      %1492 = vmatpush1.msra.mxu0 0.0
      %1493 = vmatprep.subr.mxu0 0.0
      %1494 = vmatpush1.msra.mxu0 0.0
      %1495 = vmatprep.subr.mxu0 0.0
      %1496 = vmatpush1.msra.mxu0 0.0
      %1497 = vmatprep.subr.mxu0 0.0
      %1498 = vmatpush1.msra.mxu0 0.0
      %1499 = vmatprep.subr.mxu0 0.0
      %1500 = vmatpush1.msra.mxu0 0.0
      %1501 = vmatprep.subr.mxu0 0.0
      %1502 = vmatpush1.msra.mxu0 0.0
      %1503 = vmatprep.subr.mxu0 0.0
      %1504 = vmatpush1.msra.mxu0 0.0
      %1505 = vmatprep.mubr.f32.mxu0 0.0
      %1506 = vmatmul.mubr.f32.gmra.mrb[0].mxu0 %v1418
      %v1507 = vpop.f32.mrb[0].mxu0
      %v1508 = vadd.f32 0.0, %v1507
      %v1509 = vpop.f32.mrb[0].mxu0
      %1510 = vmatprep.mubr.f32.mxu0 0.0
      %1511 = vmatmul.mubr.f32.gmra.mrb[0].mxu0 %v1421
      %v1512 = vpop.f32.mrb[0].mxu0
      %v1513 = vadd.f32 0.0, %v1512
      %v1514 = vpop.f32.mrb[0].mxu0
      %1515 = vmatprep.mubr.f32.mxu0 0.0
      %1516 = vmatmul.mubr.f32.gmra.mrb[0].mxu0 %v1424
      %v1517 = vpop.f32.mrb[0].mxu0
      %v1518 = vadd.f32 0.0, %v1517
      %v1519 = vpop.f32.mrb[0].mxu0
      %1520 = vmatprep.mubr.f32.mxu0 0.0
      %1521 = vmatmul.mubr.f32.gmra.mrb[0].mxu0 %v1427
      %v1522 = vpop.f32.mrb[0].mxu0
      %v1523 = vadd.f32 0.0, %v1522
      %v1524 = vpop.f32.mrb[0].mxu0
      %1525 = vmatprep.mubr.f32.mxu0 0.0
      %1526 = vmatmul.mubr.f32.gmra.mrb[0].mxu0 %v1430
      %v1527 = vpop.f32.mrb[0].mxu0
      %v1528 = vadd.f32 0.0, %v1527
      %v1529 = vpop.f32.mrb[0].mxu0
      %1530 = vmatprep.mubr.f32.mxu0 0.0
      %1531 = vmatmul.mubr.f32.gmra.mrb[0].mxu0 %v1433
      %v1532 = vpop.f32.mrb[0].mxu0
      %v1533 = vadd.f32 0.0, %v1532
      %v1534 = vpop.f32.mrb[0].mxu0
      %1535 = vmatprep.mubr.f32.mxu0 0.0
      %1536 = vmatmul.mubr.f32.gmra.mrb[0].mxu0 %v1436
      %v1537 = vpop.f32.mrb[0].mxu0
      %v1538 = vadd.f32 0.0, %v1537
      %v1539 = vpop.f32.mrb[0].mxu0
      %1540 = vmatprep.mubr.f32.mxu0 0.0
      %1541 = vmatmul.mubr.f32.gmra.mrb[0].mxu0 %v1439
      %v1542 = vpop.f32.mrb[0].mxu0
      %v1543 = vadd.f32 0.0, %v1542
      %v1544 = vpop.f32.mrb[0].mxu0
      %1545 = vdwg.mxu0
      %v1546 = vadd.f32 %v1399, %v1508
      %v1547 = vadd.f32 %v1400, %v1513
      %v1548 = vadd.f32 %v1401, %v1518
      %v1549 = vadd.f32 %v1402, %v1523
      %v1550 = vadd.f32 %v1403, %v1528
      %v1551 = vadd.f32 %v1404, %v1533
      %v1552 = vadd.f32 %v1405, %v1538
      %v1553 = vadd.f32 %v1406, %v1543
      %v1554 = vld [vmem:[%s2] sm:$0x1]
      %v1556 = vlaneseq
      %v1557 = vshrl.u32 %v1556, 7
      %v1558 = vsub.s32 0, %v1557
      %v1559 = vrot.slane %v1554, %v1558
      %v1561 = vadd.f32 %v1546, %v1559
      %v1562 = vadd.f32 %v1547, %v1559
      %v1563 = vadd.f32 %v1548, %v1559
      %v1564 = vadd.f32 %v1549, %v1559
      %v1565 = vadd.f32 %v1550, %v1559
      %v1566 = vadd.f32 %v1551, %v1559
      %v1567 = vadd.f32 %v1552, %v1559
      %v1568 = vadd.f32 %v1553, %v1559
      %v1569 = vld [vmem:[%s239] sm:$0xff]
      %v1570 = vld [vmem:[%s239 + $0x8] sm:$0xff]
      %v1571 = vld [vmem:[%s239 + $0x10] sm:$0xff]
      %v1572 = vld [vmem:[%s239 + $0x18] sm:$0xff]
      %v1573 = vld [vmem:[%s239 + $0x20] sm:$0xff]
      %v1574 = vld [vmem:[%s239 + $0x28] sm:$0xff]
      %v1575 = vld [vmem:[%s239 + $0x30] sm:$0xff]
      %v1576 = vld [vmem:[%s239 + $0x38] sm:$0xff]
      %v1577 = vld [vmem:[%s4] sm:$0xf]
      %vm1578 = vcmask 31744
      %v1580 = vsel %vm1578, %v1569, 0
      %v1583 = vsel %vm1578, %v1570, 0
      %v1586 = vsel %vm1578, %v1571, 0
      %v1589 = vsel %vm1578, %v1572, 0
      %v1592 = vsel %vm1578, %v1573, 0
      %v1595 = vsel %vm1578, %v1574, 0
      %v1598 = vsel %vm1578, %v1575, 0
      %v1601 = vsel %vm1578, %v1576, 0
      %vm1603 = vcmask 1043456
      %v1605 = vsel %vm1603, %v1577, 0
      %1607 = vmatprep.subr.mxu0 0.0
      %1608 = vmatpush1.msra.mxu0 %v1605
      %1609 = vmatprep.subr.mxu0 0.0
      %1610 = vmatpush1.msra.mxu0 0.0
      %1611 = vmatprep.subr.mxu0 0.0
      %1612 = vmatpush1.msra.mxu0 0.0
      %1613 = vmatprep.subr.mxu0 0.0
      %1614 = vmatpush1.msra.mxu0 0.0
      %1615 = vmatprep.subr.mxu0 0.0
      %1616 = vmatpush1.msra.mxu0 0.0
      %1617 = vmatprep.subr.mxu0 0.0
      %1618 = vmatpush1.msra.mxu0 0.0
      %1619 = vmatprep.subr.mxu0 0.0
      %1620 = vmatpush1.msra.mxu0 0.0
      %1621 = vmatprep.subr.mxu0 0.0
      %1622 = vmatpush1.msra.mxu0 0.0
      %1623 = vmatprep.subr.mxu0 0.0
      %1624 = vmatpush1.msra.mxu0 0.0
      %1625 = vmatprep.subr.mxu0 0.0
      %1626 = vmatpush1.msra.mxu0 0.0
      %1627 = vmatprep.subr.mxu0 0.0
      %1628 = vmatpush1.msra.mxu0 0.0
      %1629 = vmatprep.subr.mxu0 0.0
      %1630 = vmatpush1.msra.mxu0 0.0
      %1631 = vmatprep.subr.mxu0 0.0
      %1632 = vmatpush1.msra.mxu0 0.0
      %1633 = vmatprep.subr.mxu0 0.0
      %1634 = vmatpush1.msra.mxu0 0.0
      %1635 = vmatprep.subr.mxu0 0.0
      %1636 = vmatpush1.msra.mxu0 0.0
      %1637 = vmatprep.subr.mxu0 0.0
      %1638 = vmatpush1.msra.mxu0 0.0
      %1639 = vmatprep.subr.mxu0 0.0
      %1640 = vmatpush1.msra.mxu0 0.0
      %1641 = vmatprep.subr.mxu0 0.0
      %1642 = vmatpush1.msra.mxu0 0.0
      %1643 = vmatprep.subr.mxu0 0.0
      %1644 = vmatpush1.msra.mxu0 0.0
      %1645 = vmatprep.subr.mxu0 0.0
      %1646 = vmatpush1.msra.mxu0 0.0
      %1647 = vmatprep.subr.mxu0 0.0
      %1648 = vmatpush1.msra.mxu0 0.0
      %1649 = vmatprep.subr.mxu0 0.0
      %1650 = vmatpush1.msra.mxu0 0.0
      %1651 = vmatprep.subr.mxu0 0.0
      %1652 = vmatpush1.msra.mxu0 0.0
      %1653 = vmatprep.subr.mxu0 0.0
      %1654 = vmatpush1.msra.mxu0 0.0
      %1655 = vmatprep.subr.mxu0 0.0
      %1656 = vmatpush1.msra.mxu0 0.0
      %1657 = vmatprep.subr.mxu0 0.0
      %1658 = vmatpush1.msra.mxu0 0.0
      %1659 = vmatprep.subr.mxu0 0.0
      %1660 = vmatpush1.msra.mxu0 0.0
      %1661 = vmatprep.subr.mxu0 0.0
      %1662 = vmatpush1.msra.mxu0 0.0
      %1663 = vmatprep.subr.mxu0 0.0
      %1664 = vmatpush1.msra.mxu0 0.0
      %1665 = vmatprep.subr.mxu0 0.0
      %1666 = vmatpush1.msra.mxu0 0.0
      %1667 = vmatprep.subr.mxu0 0.0
      %1668 = vmatpush1.msra.mxu0 0.0
      %1669 = vmatprep.subr.mxu0 0.0
      %1670 = vmatpush1.msra.mxu0 0.0
      %1671 = vmatprep.mubr.f32.mxu0 0.0
      %1672 = vmatmul.mubr.f32.gmra.mrb[0].mxu0 %v1580
      %v1673 = vpop.f32.mrb[0].mxu0
      %v1674 = vadd.f32 0.0, %v1673
      %v1675 = vpop.f32.mrb[0].mxu0
      %1676 = vmatprep.mubr.f32.mxu0 0.0
      %1677 = vmatmul.mubr.f32.gmra.mrb[0].mxu0 %v1583
      %v1678 = vpop.f32.mrb[0].mxu0
      %v1679 = vadd.f32 0.0, %v1678
      %v1680 = vpop.f32.mrb[0].mxu0
      %1681 = vmatprep.mubr.f32.mxu0 0.0
      %1682 = vmatmul.mubr.f32.gmra.mrb[0].mxu0 %v1586
      %v1683 = vpop.f32.mrb[0].mxu0
      %v1684 = vadd.f32 0.0, %v1683
      %v1685 = vpop.f32.mrb[0].mxu0
      %1686 = vmatprep.mubr.f32.mxu0 0.0
      %1687 = vmatmul.mubr.f32.gmra.mrb[0].mxu0 %v1589
      %v1688 = vpop.f32.mrb[0].mxu0
      %v1689 = vadd.f32 0.0, %v1688
      %v1690 = vpop.f32.mrb[0].mxu0
      %1691 = vmatprep.mubr.f32.mxu0 0.0
      %1692 = vmatmul.mubr.f32.gmra.mrb[0].mxu0 %v1592
      %v1693 = vpop.f32.mrb[0].mxu0
      %v1694 = vadd.f32 0.0, %v1693
      %v1695 = vpop.f32.mrb[0].mxu0
      %1696 = vmatprep.mubr.f32.mxu0 0.0
      %1697 = vmatmul.mubr.f32.gmra.mrb[0].mxu0 %v1595
      %v1698 = vpop.f32.mrb[0].mxu0
      %v1699 = vadd.f32 0.0, %v1698
      %v1700 = vpop.f32.mrb[0].mxu0
      %1701 = vmatprep.mubr.f32.mxu0 0.0
      %1702 = vmatmul.mubr.f32.gmra.mrb[0].mxu0 %v1598
      %v1703 = vpop.f32.mrb[0].mxu0
      %v1704 = vadd.f32 0.0, %v1703
      %v1705 = vpop.f32.mrb[0].mxu0
      %1706 = vmatprep.mubr.f32.mxu0 0.0
      %1707 = vmatmul.mubr.f32.gmra.mrb[0].mxu0 %v1601
      %v1708 = vpop.f32.mrb[0].mxu0
      %v1709 = vadd.f32 0.0, %v1708
      %v1710 = vpop.f32.mrb[0].mxu0
      %1711 = vdwg.mxu0
      %v1712 = vadd.f32 %v1561, %v1674
      %v1713 = vadd.f32 %v1562, %v1679
      %v1714 = vadd.f32 %v1563, %v1684
      %v1715 = vadd.f32 %v1564, %v1689
      %v1716 = vadd.f32 %v1565, %v1694
      %v1717 = vadd.f32 %v1566, %v1699
      %v1718 = vadd.f32 %v1567, %v1704
      %v1719 = vadd.f32 %v1568, %v1709
      %v1720 = vmax.f32 %v1712, 0.0
      %v1721 = vmax.f32 %v1713, 0.0
      %v1722 = vmax.f32 %v1714, 0.0
      %v1723 = vmax.f32 %v1715, 0.0
      %v1724 = vmax.f32 %v1716, 0.0
      %v1725 = vmax.f32 %v1717, 0.0
      %v1726 = vmax.f32 %v1718, 0.0
      %v1727 = vmax.f32 %v1719, 0.0
      %1728 = vst.msk [vmem:[%s244] sm:$0xff] %vm264, %v1720
      %1729 = vst.msk [vmem:[%s244 + $0x8] sm:$0xff] %vm264, %v1721
      %1730 = vst.msk [vmem:[%s244 + $0x10] sm:$0xff] %vm264, %v1722
      %1731 = vst.msk [vmem:[%s244 + $0x18] sm:$0xff] %vm264, %v1723
      %1732 = vst.msk [vmem:[%s244 + $0x20] sm:$0xff] %vm264, %v1724
      %1733 = vst.msk [vmem:[%s244 + $0x28] sm:$0xff] %vm264, %v1725
      %1734 = vst.msk [vmem:[%s244 + $0x30] sm:$0xff] %vm264, %v1726
      %1735 = vst.msk [vmem:[%s244 + $0x38] sm:$0xff] %vm264, %v1727
      %p1736 = scmp.lt.s32.totalorder %s16, 1
      %s1737 = scalar_select %p1736, %s16, 1
      %s1738 = smul.addr %s1737, 8
      %s1739 = smul.addr %s1738, 8
      %s1740 = scalar_lea.vmem %s5, %s1739
      // Predicated region
      $region41: #{basic_block_forward.3} parent=39 // pred_check
        %p1741 = pneg %p149
      $region42: #{basic_block_forward.3} parent=39 // pred_check_branch
        %1743 = sbr.rel (%p1741) target = $region44
      $region43: #{basic_block_forward.3} parent=39 // pred_region
        _
      $region44: #{basic_block_forward.3} parent=39 // pred_fallthru
        _
    $region40: #{basic_block_forward.3} parent=5 // pred_fallthru
      _
    %p1744 = scmp.le.s32.totalorder 2, %s11
    // Predicated region
    $region45: #{basic_block_forward.3} parent=5 // pred_check
      %p1745 = pneg %p1744
    $region46: #{basic_block_forward.3} parent=5 // pred_check_branch
      %1747 = sbr.rel (%p1745) target = $region48
    $region47: #{basic_block_forward.3} parent=5 // pred_region
      %s1748 = ssub.s32 %s11, 2
      // Predicated region
      $region49: #{basic_block_forward.3} parent=47 // pred_check
        %p1749 = pneg %p155
      $region50: #{basic_block_forward.3} parent=47 // pred_check_branch
        %1751 = sbr.rel (%p1749) target = $region52
      $region51: #{basic_block_forward.3} parent=47 // pred_region
        %p1752 = scmp.lt.s32.totalorder %s17, 1
        %s1753 = scalar_select %p1752, %s17, 1
        %s1754 = smul.addr %s1753, 8
        %s1755 = smul.addr %s1754, 8
        %s1756 = scalar_lea.vmem %s5, %s1755
      $region52: #{basic_block_forward.3} parent=47 // pred_fallthru
        _
    $region48: #{basic_block_forward.3} parent=5 // pred_fallthru
      _
  $region6: #{basic_block_forward.3} parent=0 // loop_footer
    %s15 = sadd.s32 1, %s11
  $region7: #{basic_block_forward.3} parent=0 // loop_footer_branch
    %10 = sbr.rel target = $region3
  $region8: #{basic_block_forward.3} parent=0 // loop_exit
    _

</llo_original>
